<compile_context>
chip_gen: v7x
topology: tpu7x:2x2x1
jax: 0.10.0
libtpu: 0.0.40
codegen_flags: <defaults>
</compile_context>

<pallas_src>
import functools

import jax
import jax.numpy as jnp
from jax.experimental import pallas as pl
from jax.experimental.pallas import tpu as pltpu

N_GROUPS = 8
EPS = 1e-5
LANE = 128


def _mish(x):
    # mish(x) = x * tanh(softplus(x)) = x * (e^{2x} + 2e^x) / (e^{2x} + 2e^x + 2),
    # evaluated stably with t = exp(-|x|): one EUP transcendental + one divide.
    # TODO(synk): swap `/ den` for `* pl.reciprocal(den, approx=True)` if ~1e-4 rel error is OK.
    t = jnp.exp(-jnp.abs(x))
    t2 = t * t
    pos = x >= 0.0
    num = jnp.where(pos, 1.0 + 2.0 * t, t2 + 2.0 * t)
    den = jnp.where(pos, 1.0 + 2.0 * t + 2.0 * t2, t2 + 2.0 * t + 2.0)
    return x * num / den


def _group_norm(h, bb, t, pool, inv_count, gamma, beta, gm, gmt):
    """Per-batch-element GroupNorm on a flattened [bb*t, Cp] channels-last slab.

    Single pass over h: group sums of x and x^2 via matmuls with the one-hot channel->group
    matrix gm [Cp, G]; per-batch-element time reduction via the one-hot pooling matrix
    pool [bb, bb*t]; var = E[x^2] - mean^2 (kept in f32).  The normalisation and the channel
    affine are folded into one per-(batch, channel) scale/shift so the full-size slab is only
    touched by a single multiply-add.
    """
    cp = h.shape[-1]
    hg = jnp.dot(h, gm, preferred_element_type=jnp.float32)                      # [bt, G]
    h2g = jnp.dot(h * h, gm, preferred_element_type=jnp.float32)                 # [bt, G]
    mean_g = jnp.dot(pool, hg, preferred_element_type=jnp.float32) * inv_count   # [bb, G]
    ex2_g = jnp.dot(pool, h2g, preferred_element_type=jnp.float32) * inv_count   # [bb, G]
    inv_g = jax.lax.rsqrt(ex2_g - mean_g * mean_g + EPS)                          # [bb, G]
    # (x - mean) * inv * gamma + beta  ==  x * (inv*gamma) + (beta - mean*inv*gamma)
    scale_c = jnp.dot(inv_g, gmt, preferred_element_type=jnp.float32) * gamma               # [bb, Cp]
    shift_c = beta - jnp.dot(mean_g * inv_g, gmt, preferred_element_type=jnp.float32) * gamma  # [bb, Cp]
    h3 = h.reshape(bb, t, cp)
    return (h3 * scale_c[:, None, :] + shift_c[:, None, :]).reshape(bb * t, cp)


def _cond_res_block_kernel(x3_ref, cond_ref,
                           w0_ref, b0_ref, g0_ref, bt0_ref,
                           gm_ref, gmt_ref,
                           wcs_ref, bcs_ref, wcb_ref, bcb_ref,
                           w1_ref, b1_ref, g1_ref, bt1_ref,
                           wres_ref, bres_ref,
                           out_ref,
                           *, inv_count, compute_dtype):
    bb, t, k0 = x3_ref.shape
    cp = out_ref.shape[-1]
    bt = bb * t

    gm = gm_ref[...]
    gmt = gmt_ref[...]

    # one-hot [bb, bt] "row belongs to batch element b" pooling matrix (used by both GroupNorms)
    row_id = jax.lax.broadcasted_iota(jnp.int32, (bb, bt), 1)
    batch_id = jax.lax.broadcasted_iota(jnp.int32, (bb, bt), 0)
    pool = jnp.where((row_id >= batch_id * t) & (row_id < (batch_id + 1) * t), 1.0, 0.0)

    # ---- block 0: 3-tap conv fused into one [bt, 3*Cin] @ [3*Cin, Cp] matmul -> GN -> Mish ----
    x3 = x3_ref[...].reshape(bt, k0).astype(compute_dtype)
    h = jnp.dot(x3, w0_ref[...], preferred_element_type=jnp.float32) + b0_ref[...]
    h = _group_norm(h, bb, t, pool, inv_count, g0_ref[...], bt0_ref[...], gm, gmt)
    h = _mish(h)

    # ---- cond encoder (Mish -> Linear); scale/bias from host-pre-split weights ----
    c = _mish(cond_ref[0]).astype(compute_dtype)                          # [bb, cond_dim]
    scale = jnp.dot(c, wcs_ref[...], preferred_element_type=jnp.float32) + bcs_ref[...]
    bias = jnp.dot(c, wcb_ref[...], preferred_element_type=jnp.float32) + bcb_ref[...]
    h3 = h.reshape(bb, t, cp) * scale[:, None, :] + bias[:, None, :]      # FiLM
    h = h3.reshape(bt, cp)

    # ---- block 1: +/-1 time shifts built in-register (no VMEM scratch round-trip) ----
    zrow = jnp.zeros((bb, 1, cp), jnp.float32)
    h_prev = jnp.concatenate([zrow, h3[:, :t - 1, :]], axis=1).reshape(bt, cp)
    h_next = jnp.concatenate([h3[:, 1:, :], zrow], axis=1).reshape(bt, cp)
    h2 = (jnp.dot(h_prev.astype(compute_dtype), w1_ref[0], preferred_element_type=jnp.float32)
          + jnp.dot(h.astype(compute_dtype), w1_ref[1], preferred_element_type=jnp.float32)
          + jnp.dot(h_next.astype(compute_dtype), w1_ref[2], preferred_element_type=jnp.float32)
          + b1_ref[...])
    h2 = _group_norm(h2, bb, t, pool, inv_count, g1_ref[...], bt1_ref[...], gm, gmt)
    h2 = _mish(h2)

    # ---- residual 1x1 conv, folded onto the fused-tap input (only centre rows are non-zero) ----
    res = jnp.dot(x3, wres_ref[...], preferred_element_type=jnp.float32) + bres_ref[...]

    out_ref[...] = (h2 + res).reshape(bb, t, cp).astype(out_ref.dtype)


def _pick_block_batch(B, T, target_rows=256):
    """Largest divisor of B keeping the [Bb*T, C] slab around an MXU-friendly row count."""
    if T % 8 != 0:  # keep in-kernel reshapes trivially tile-aligned
        return 1
    best = 1
    for bb in range(1, B + 1):
        if B % bb == 0 and bb * T <= max(target_rows, T):
            best = bb
    return best


def cond_residual_block_1d(x, cond, params, *, n_groups=N_GROUPS,
                           compute_dtype=jnp.float32, block_batch=None):
    """x: [B, Cin, T] (torch NCW), cond: [B, cond_dim] -> out: [B, Cout, T]."""
    B, Cin, T = x.shape
    Cout = params["w0"].shape[-1]
    cond_dim = cond.shape[-1]
    assert Cout % n_groups == 0, "GroupNorm requires out_channels % n_groups == 0"
    cpg = Cout // n_groups
    Cp = ((Cout + LANE - 1) // LANE) * LANE       # lane-dense padded channel count

    Bb = _pick_block_batch(B, T) if block_batch is None else block_batch
    assert B % Bb == 0
    nb = B // Bb
    f32 = jnp.float32

    # ---- input prep: channels-last, conv taps pre-concatenated ([x_{t-1} | x_t | x_{t+1}]) ----
    x_cl = jnp.transpose(x, (0, 2, 1)).astype(f32)                     # [B, T, Cin]
    zero = jnp.zeros((B, 1, Cin), f32)
    x_prev = jnp.concatenate([zero, x_cl[:, :-1]], axis=1)
    x_next = jnp.concatenate([x_cl[:, 1:], zero], axis=1)
    x3 = jnp.concatenate([x_prev, x_cl, x_next], axis=-1)              # [B, T, 3*Cin]
    cond_b = cond.astype(f32).reshape(nb, Bb, cond_dim)                # [nb, Bb, cond_dim]

    # ---- parameter prep: pad channel dim to Cp, reshape for the kernel's fused layout ----
    def pad_c(a):
        return jnp.pad(a.astype(f32), [(0, 0)] * (a.ndim - 1) + [(0, Cp - Cout)])

    w0cat = pad_c(params["w0"].reshape(3 * Cin, Cout)).astype(compute_dtype)
    w1p = jnp.pad(params["w1"].astype(f32),
                  ((0, 0), (0, Cp - Cout), (0, Cp - Cout))).astype(compute_dtype)
    wres3 = jnp.zeros((3 * Cin, Cp), f32).at[Cin:2 * Cin, :Cout].set(
        params["wres"].astype(f32)).astype(compute_dtype)
    wcs = pad_c(params["wc"][:, :Cout]).astype(compute_dtype)
    wcb = pad_c(params["wc"][:, Cout:]).astype(compute_dtype)
    b0, g0, bt0 = pad_c(params["b0"]), pad_c(params["g0"]), pad_c(params["bt0"])
    b1, g1, bt1 = pad_c(params["b1"]), pad_c(params["g1"]), pad_c(params["bt1"])
    bcs, bcb = pad_c(params["bc"][:, :Cout]), pad_c(params["bc"][:, Cout:])
    bres = pad_c(params["bres"])

    # one-hot channel -> group membership; padded channels belong to no group.
    ch = jnp.arange(Cp)
    gm = (((ch[:, None] // cpg) == jnp.arange(n_groups)[None, :]) &
          (ch[:, None] < Cout)).astype(f32)                            # [Cp, G]
    gmt = gm.T                                                         # [G, Cp]

    param_list = [w0cat, b0, g0, bt0, gm, gmt, wcs, bcs, wcb, bcb,
                  w1p, b1, g1, bt1, wres3, bres]

    def const_spec(a):
        nd = a.ndim
        return pl.BlockSpec(a.shape, lambda i, _nd=nd: (0,) * _nd)

    in_specs = ([pl.BlockSpec((Bb, T, 3 * Cin), lambda i: (i, 0, 0)),
                 pl.BlockSpec((1, Bb, cond_dim), lambda i: (i, 0, 0))]
                + [const_spec(a) for a in param_list])

    kernel = functools.partial(_cond_res_block_kernel,
                               inv_count=1.0 / float(T * cpg),
                               compute_dtype=compute_dtype)

    out = pl.pallas_call(
        kernel,
        out_shape=jax.ShapeDtypeStruct((B, T, Cp), f32),
        grid_spec=pltpu.PrefetchScalarGridSpec(
            num_scalar_prefetch=0,
            grid=(nb,),
            in_specs=in_specs,
            out_specs=pl.BlockSpec((Bb, T, Cp), lambda i: (i, 0, 0)),
        ),
        compiler_params=pltpu.CompilerParams(
            dimension_semantics=("parallel",),     # batch axis: lets v7x shard across both TCs
            vmem_limit_bytes=64 * 1024 * 1024,
        ),
    )(x3, cond_b, *param_list)

    return jnp.transpose(out[:, :, :Cout], (0, 2, 1))                  # back to [B, Cout, T]


# ------------------------- pure-JAX reference (for verification) -------------------------
def reference(x, cond, params, n_groups=N_GROUPS):
    B, Cin, T = x.shape
    Cout = params["w0"].shape[-1]
    xcl = jnp.transpose(x, (0, 2, 1))
    xpad = jnp.pad(xcl, ((0, 0), (1, 1), (0, 0)))

    def mish(v):
        return v * jnp.tanh(jnp.log1p(jnp.exp(-jnp.abs(v))) + jnp.maximum(v, 0.0))

    def conv3(xp, w, b):
        return (jnp.einsum("btc,cd->btd", xp[:, 0:T], w[0]) +
                jnp.einsum("btc,cd->btd", xp[:, 1:T + 1], w[1]) +
                jnp.einsum("btc,cd->btd", xp[:, 2:T + 2], w[2]) + b)

    def gn(h, gamma, beta):
        hg = h.reshape(B, T, n_groups, Cout // n_groups)
        mean = hg.mean(axis=(1, 3), keepdims=True)
        var = ((hg - mean) ** 2).mean(axis=(1, 3), keepdims=True)
        hn = (hg - mean) / jnp.sqrt(var + EPS)
        return hn.reshape(B, T, Cout) * gamma + beta

    h = mish(gn(conv3(xpad, params["w0"], params["b0"]), params["g0"], params["bt0"]))
    emb = mish(cond) @ params["wc"] + params["bc"]
    scale = emb[:, None, :Cout]
    bias = emb[:, None, Cout:]
    h = scale * h + bias
    hpad = jnp.pad(h, ((0, 0), (1, 1), (0, 0)))
    h2 = mish(gn(conv3(hpad, params["w1"], params["b1"]), params["g1"], params["bt1"]))
    res = jnp.einsum("btc,cd->btd", xcl, params["wres"]) + params["bres"]
    return jnp.transpose(h2 + res, (0, 2, 1))


if __name__ == "__main__":
    B, Cin, Cout, T, cond_dim = 2, 4, 32, 16, 8

    kp = jax.random.split(jax.random.PRNGKey(0), 12)
    params = {
        "w0":   0.1 * jax.random.normal(kp[0], (3, Cin, Cout), jnp.float32),
        "b0":   0.1 * jax.random.normal(kp[1], (1, Cout), jnp.float32),
        "g0":   1.0 + 0.1 * jax.random.normal(kp[2], (1, Cout), jnp.float32),
        "bt0":  0.1 * jax.random.normal(kp[3], (1, Cout), jnp.float32),
        "wc":   0.1 * jax.random.normal(kp[4], (cond_dim, 2 * Cout), jnp.float32),
        "bc":   0.1 * jax.random.normal(kp[5], (1, 2 * Cout), jnp.float32),
        "w1":   0.1 * jax.random.normal(kp[6], (3, Cout, Cout), jnp.float32),
        "b1":   0.1 * jax.random.normal(kp[7], (1, Cout), jnp.float32),
        "g1":   1.0 + 0.1 * jax.random.normal(kp[8], (1, Cout), jnp.float32),
        "bt1":  0.1 * jax.random.normal(kp[9], (1, Cout), jnp.float32),
        "wres": 0.1 * jax.random.normal(kp[10], (Cin, Cout), jnp.float32),
        "bres": 0.1 * jax.random.normal(kp[11], (1, Cout), jnp.float32),
    }

    kx, kc = jax.random.split(jax.random.PRNGKey(1))
    x = jax.random.normal(kx, (B, Cin, T), jnp.float32)
    cond = jax.random.normal(kc, (B, cond_dim), jnp.float32)

    out = cond_residual_block_1d(x, cond, params)
    out = jax.block_until_ready(out)

    ref = reference(x, cond, params)
    assert out.shape == (B, Cout, T)
    err = float(jnp.max(jnp.abs(out - ref)))
    assert jnp.allclose(out, ref, rtol=2e-3, atol=2e-3), err

    print("KERNEL_OK")
</pallas_src>

<mosaic_0001>
module attributes {stable_mosaic.version = 11 : i64} {
  func.func @_cond_res_block_kernel(%arg0: i32, %arg1: memref<2x16x12xf32, #tpu.memory_space<vmem>>, %arg2: memref<1x2x8xf32, #tpu.memory_space<vmem>>, %arg3: memref<12x128xf32, #tpu.memory_space<vmem>>, %arg4: memref<1x128xf32, #tpu.memory_space<vmem>>, %arg5: memref<1x128xf32, #tpu.memory_space<vmem>>, %arg6: memref<1x128xf32, #tpu.memory_space<vmem>>, %arg7: memref<128x8xf32, #tpu.memory_space<vmem>>, %arg8: memref<8x128xf32, #tpu.memory_space<vmem>>, %arg9: memref<8x128xf32, #tpu.memory_space<vmem>>, %arg10: memref<1x128xf32, #tpu.memory_space<vmem>>, %arg11: memref<8x128xf32, #tpu.memory_space<vmem>>, %arg12: memref<1x128xf32, #tpu.memory_space<vmem>>, %arg13: memref<3x128x128xf32, #tpu.memory_space<vmem>>, %arg14: memref<1x128xf32, #tpu.memory_space<vmem>>, %arg15: memref<1x128xf32, #tpu.memory_space<vmem>>, %arg16: memref<1x128xf32, #tpu.memory_space<vmem>>, %arg17: memref<12x128xf32, #tpu.memory_space<vmem>>, %arg18: memref<1x128xf32, #tpu.memory_space<vmem>>, %arg19: memref<2x16x128xf32, #tpu.memory_space<vmem>>) attributes {dimension_semantics = [#tpu.dimension_semantics<parallel>], iteration_bounds = array<i64: 1>, scalar_prefetch = 0 : i64, scratch_operands = 0 : i64, tpu.core_type = #tpu.core_type<tc>, window_params = [{transform_indices = @transform_0, window_bounds = array<i64: 2, 16, 12>}, {transform_indices = @transform_1, window_bounds = array<i64: 1, 2, 8>}, {pipeline_mode = #tpu.pipeline_mode<synchronous>, transform_indices = @transform_2, window_bounds = array<i64: 12, 128>}, {pipeline_mode = #tpu.pipeline_mode<synchronous>, transform_indices = @transform_3, window_bounds = array<i64: 1, 128>}, {pipeline_mode = #tpu.pipeline_mode<synchronous>, transform_indices = @transform_4, window_bounds = array<i64: 1, 128>}, {pipeline_mode = #tpu.pipeline_mode<synchronous>, transform_indices = @transform_5, window_bounds = array<i64: 1, 128>}, {pipeline_mode = #tpu.pipeline_mode<synchronous>, transform_indices = @transform_6, window_bounds = array<i64: 128, 8>}, {pipeline_mode = #tpu.pipeline_mode<synchronous>, transform_indices = @transform_7, window_bounds = array<i64: 8, 128>}, {pipeline_mode = #tpu.pipeline_mode<synchronous>, transform_indices = @transform_8, window_bounds = array<i64: 8, 128>}, {pipeline_mode = #tpu.pipeline_mode<synchronous>, transform_indices = @transform_9, window_bounds = array<i64: 1, 128>}, {pipeline_mode = #tpu.pipeline_mode<synchronous>, transform_indices = @transform_10, window_bounds = array<i64: 8, 128>}, {pipeline_mode = #tpu.pipeline_mode<synchronous>, transform_indices = @transform_11, window_bounds = array<i64: 1, 128>}, {pipeline_mode = #tpu.pipeline_mode<synchronous>, transform_indices = @transform_12, window_bounds = array<i64: 3, 128, 128>}, {pipeline_mode = #tpu.pipeline_mode<synchronous>, transform_indices = @transform_13, window_bounds = array<i64: 1, 128>}, {pipeline_mode = #tpu.pipeline_mode<synchronous>, transform_indices = @transform_14, window_bounds = array<i64: 1, 128>}, {pipeline_mode = #tpu.pipeline_mode<synchronous>, transform_indices = @transform_15, window_bounds = array<i64: 1, 128>}, {pipeline_mode = #tpu.pipeline_mode<synchronous>, transform_indices = @transform_16, window_bounds = array<i64: 12, 128>}, {pipeline_mode = #tpu.pipeline_mode<synchronous>, transform_indices = @transform_17, window_bounds = array<i64: 1, 128>}, {transform_indices = @transform_18, window_bounds = array<i64: 2, 16, 128>}]} {
    %c0 = arith.constant 0 : index
    %c0_0 = arith.constant 0 : index
    %0 = vector.load %arg7[%c0, %c0_0] : memref<128x8xf32, #tpu.memory_space<vmem>>, vector<128x8xf32>
    %c0_1 = arith.constant 0 : index
    %c0_2 = arith.constant 0 : index
    %1 = vector.load %arg8[%c0_1, %c0_2] : memref<8x128xf32, #tpu.memory_space<vmem>>, vector<8x128xf32>
    %2 = tpu.iota {dimensions = array<i32: 1>} : vector<2x32xi32>
    %3 = tpu.iota {dimensions = array<i32: 0>} : vector<2x32xi32>
    %c16_i32 = arith.constant 16 : i32
    %4 = vector.broadcast %c16_i32 : i32 to vector<2x32xi32>
    %5 = arith.muli %3, %4 : vector<2x32xi32>
    %6 = arith.cmpi sge, %2, %5 : vector<2x32xi32>
    %c1_i32 = arith.constant 1 : i32
    %7 = vector.broadcast %c1_i32 : i32 to vector<2x32xi32>
    %8 = arith.addi %3, %7 : vector<2x32xi32>
    %c16_i32_3 = arith.constant 16 : i32
    %9 = vector.broadcast %c16_i32_3 : i32 to vector<2x32xi32>
    %10 = arith.muli %8, %9 : vector<2x32xi32>
    %11 = arith.cmpi slt, %2, %10 : vector<2x32xi32>
    %12 = arith.andi %6, %11 : vector<2x32xi1>
    %cst = arith.constant 1.000000e+00 : f32
    %cst_4 = arith.constant 0.000000e+00 : f32
    %13 = vector.broadcast %cst : f32 to vector<2x32xf32>
    %14 = vector.broadcast %cst_4 : f32 to vector<2x32xf32>
    %15 = arith.select %12, %13, %14 : vector<2x32xi1>, vector<2x32xf32>
    %c0_5 = arith.constant 0 : index
    %c0_6 = arith.constant 0 : index
    %c0_7 = arith.constant 0 : index
    %16 = vector.load %arg1[%c0_5, %c0_6, %c0_7] : memref<2x16x12xf32, #tpu.memory_space<vmem>>, vector<2x16x12xf32>
    %17 = vector.shape_cast %16 : vector<2x16x12xf32> to vector<32x12xf32>
    %c0_8 = arith.constant 0 : index
    %c0_9 = arith.constant 0 : index
    %18 = vector.load %arg3[%c0_8, %c0_9] : memref<12x128xf32, #tpu.memory_space<vmem>>, vector<12x128xf32>
    %cst_10 = arith.constant dense<0.000000e+00> : vector<32x128xf32>
    %19 = tpu.matmul %17, %18, %cst_10 {dimension_numbers = #tpu.dot_dimension_numbers<[1], [0], [0], [1], [0, 0, 1, 1], [], []>} : vector<32x12xf32>, vector<12x128xf32>, vector<32x128xf32> -> vector<32x128xf32>
    %c0_11 = arith.constant 0 : index
    %c0_12 = arith.constant 0 : index
    %20 = vector.load %arg4[%c0_11, %c0_12] : memref<1x128xf32, #tpu.memory_space<vmem>>, vector<1x128xf32>
    %21 = vector.broadcast %20 : vector<1x128xf32> to vector<32x128xf32>
    %22 = arith.addf %19, %21 : vector<32x128xf32>
    %c0_13 = arith.constant 0 : index
    %c0_14 = arith.constant 0 : index
    %23 = vector.load %arg5[%c0_13, %c0_14] : memref<1x128xf32, #tpu.memory_space<vmem>>, vector<1x128xf32>
    %c0_15 = arith.constant 0 : index
    %c0_16 = arith.constant 0 : index
    %24 = vector.load %arg6[%c0_15, %c0_16] : memref<1x128xf32, #tpu.memory_space<vmem>>, vector<1x128xf32>
    %cst_17 = arith.constant dense<0.000000e+00> : vector<32x8xf32>
    %25 = tpu.matmul %22, %0, %cst_17 {dimension_numbers = #tpu.dot_dimension_numbers<[1], [0], [0], [1], [0, 0, 1, 1], [], []>} : vector<32x128xf32>, vector<128x8xf32>, vector<32x8xf32> -> vector<32x8xf32>
    %26 = arith.mulf %22, %22 : vector<32x128xf32>
    %cst_18 = arith.constant dense<0.000000e+00> : vector<32x8xf32>
    %27 = tpu.matmul %26, %0, %cst_18 {dimension_numbers = #tpu.dot_dimension_numbers<[1], [0], [0], [1], [0, 0, 1, 1], [], []>} : vector<32x128xf32>, vector<128x8xf32>, vector<32x8xf32> -> vector<32x8xf32>
    %cst_19 = arith.constant dense<0.000000e+00> : vector<2x8xf32>
    %28 = tpu.matmul %15, %25, %cst_19 {dimension_numbers = #tpu.dot_dimension_numbers<[1], [0], [0], [1], [0, 0, 1, 1], [], []>} : vector<2x32xf32>, vector<32x8xf32>, vector<2x8xf32> -> vector<2x8xf32>
    %cst_20 = arith.constant 1.562500e-02 : f32
    %29 = vector.broadcast %cst_20 : f32 to vector<2x8xf32>
    %30 = arith.mulf %28, %29 : vector<2x8xf32>
    %cst_21 = arith.constant dense<0.000000e+00> : vector<2x8xf32>
    %31 = tpu.matmul %15, %27, %cst_21 {dimension_numbers = #tpu.dot_dimension_numbers<[1], [0], [0], [1], [0, 0, 1, 1], [], []>} : vector<2x32xf32>, vector<32x8xf32>, vector<2x8xf32> -> vector<2x8xf32>
    %cst_22 = arith.constant 1.562500e-02 : f32
    %32 = vector.broadcast %cst_22 : f32 to vector<2x8xf32>
    %33 = arith.mulf %31, %32 : vector<2x8xf32>
    %34 = arith.mulf %30, %30 : vector<2x8xf32>
    %35 = arith.subf %33, %34 : vector<2x8xf32>
    %cst_23 = arith.constant 9.99999974E-6 : f32
    %36 = vector.broadcast %cst_23 : f32 to vector<2x8xf32>
    %37 = arith.addf %35, %36 : vector<2x8xf32>
    %38 = math.rsqrt %37 : vector<2x8xf32>
    %cst_24 = arith.constant dense<0.000000e+00> : vector<2x128xf32>
    %39 = tpu.matmul %38, %1, %cst_24 {dimension_numbers = #tpu.dot_dimension_numbers<[1], [0], [0], [1], [0, 0, 1, 1], [], []>} : vector<2x8xf32>, vector<8x128xf32>, vector<2x128xf32> -> vector<2x128xf32>
    %40 = vector.broadcast %23 : vector<1x128xf32> to vector<2x128xf32>
    %41 = arith.mulf %39, %40 : vector<2x128xf32>
    %42 = arith.mulf %30, %38 : vector<2x8xf32>
    %cst_25 = arith.constant dense<0.000000e+00> : vector<2x128xf32>
    %43 = tpu.matmul %42, %1, %cst_25 {dimension_numbers = #tpu.dot_dimension_numbers<[1], [0], [0], [1], [0, 0, 1, 1], [], []>} : vector<2x8xf32>, vector<8x128xf32>, vector<2x128xf32> -> vector<2x128xf32>
    %44 = vector.broadcast %23 : vector<1x128xf32> to vector<2x128xf32>
    %45 = arith.mulf %43, %44 : vector<2x128xf32>
    %46 = vector.broadcast %24 : vector<1x128xf32> to vector<2x128xf32>
    %47 = arith.subf %46, %45 : vector<2x128xf32>
    %48 = vector.shape_cast %22 : vector<32x128xf32> to vector<2x16x128xf32>
    %49 = vector.shape_cast %41 : vector<2x128xf32> to vector<2x1x128xf32>
    %50 = vector.broadcast %49 : vector<2x1x128xf32> to vector<2x16x128xf32>
    %51 = arith.mulf %48, %50 : vector<2x16x128xf32>
    %52 = vector.shape_cast %47 : vector<2x128xf32> to vector<2x1x128xf32>
    %53 = vector.broadcast %52 : vector<2x1x128xf32> to vector<2x16x128xf32>
    %54 = arith.addf %51, %53 : vector<2x16x128xf32>
    %55 = vector.shape_cast %54 : vector<2x16x128xf32> to vector<32x128xf32>
    %56 = math.absf %55 : vector<32x128xf32>
    %cst_26 = arith.constant 0.000000e+00 : f32
    %57 = vector.broadcast %cst_26 : f32 to vector<32x128xf32>
    %58 = arith.subf %57, %56 : vector<32x128xf32>
    %59 = math.exp %58 : vector<32x128xf32>
    %60 = arith.mulf %59, %59 : vector<32x128xf32>
    %cst_27 = arith.constant 0.000000e+00 : f32
    %61 = vector.broadcast %cst_27 : f32 to vector<32x128xf32>
    %62 = arith.cmpf oge, %55, %61 : vector<32x128xf32>
    %cst_28 = arith.constant 2.000000e+00 : f32
    %63 = vector.broadcast %cst_28 : f32 to vector<32x128xf32>
    %64 = arith.mulf %63, %59 : vector<32x128xf32>
    %cst_29 = arith.constant 1.000000e+00 : f32
    %65 = vector.broadcast %cst_29 : f32 to vector<32x128xf32>
    %66 = arith.addf %65, %64 : vector<32x128xf32>
    %cst_30 = arith.constant 2.000000e+00 : f32
    %67 = vector.broadcast %cst_30 : f32 to vector<32x128xf32>
    %68 = arith.mulf %67, %59 : vector<32x128xf32>
    %69 = arith.addf %60, %68 : vector<32x128xf32>
    %70 = arith.select %62, %66, %69 : vector<32x128xi1>, vector<32x128xf32>
    %cst_31 = arith.constant 2.000000e+00 : f32
    %71 = vector.broadcast %cst_31 : f32 to vector<32x128xf32>
    %72 = arith.mulf %71, %59 : vector<32x128xf32>
    %cst_32 = arith.constant 1.000000e+00 : f32
    %73 = vector.broadcast %cst_32 : f32 to vector<32x128xf32>
    %74 = arith.addf %73, %72 : vector<32x128xf32>
    %cst_33 = arith.constant 2.000000e+00 : f32
    %75 = vector.broadcast %cst_33 : f32 to vector<32x128xf32>
    %76 = arith.mulf %75, %60 : vector<32x128xf32>
    %77 = arith.addf %74, %76 : vector<32x128xf32>
    %cst_34 = arith.constant 2.000000e+00 : f32
    %78 = vector.broadcast %cst_34 : f32 to vector<32x128xf32>
    %79 = arith.mulf %78, %59 : vector<32x128xf32>
    %80 = arith.addf %60, %79 : vector<32x128xf32>
    %cst_35 = arith.constant 2.000000e+00 : f32
    %81 = vector.broadcast %cst_35 : f32 to vector<32x128xf32>
    %82 = arith.addf %80, %81 : vector<32x128xf32>
    %83 = arith.select %62, %77, %82 : vector<32x128xi1>, vector<32x128xf32>
    %84 = arith.mulf %55, %70 : vector<32x128xf32>
    %85 = arith.divf %84, %83 : vector<32x128xf32>
    %c0_36 = arith.constant 0 : index
    %c0_37 = arith.constant 0 : index
    %c0_38 = arith.constant 0 : index
    %86 = vector.load %arg2[%c0_36, %c0_37, %c0_38] : memref<1x2x8xf32, #tpu.memory_space<vmem>>, vector<1x2x8xf32>
    %87 = vector.shape_cast %86 : vector<1x2x8xf32> to vector<2x8xf32>
    %88 = math.absf %87 : vector<2x8xf32>
    %cst_39 = arith.constant 0.000000e+00 : f32
    %89 = vector.broadcast %cst_39 : f32 to vector<2x8xf32>
    %90 = arith.subf %89, %88 : vector<2x8xf32>
    %91 = math.exp %90 : vector<2x8xf32>
    %92 = arith.mulf %91, %91 : vector<2x8xf32>
    %cst_40 = arith.constant 0.000000e+00 : f32
    %93 = vector.broadcast %cst_40 : f32 to vector<2x8xf32>
    %94 = arith.cmpf oge, %87, %93 : vector<2x8xf32>
    %cst_41 = arith.constant 2.000000e+00 : f32
    %95 = vector.broadcast %cst_41 : f32 to vector<2x8xf32>
    %96 = arith.mulf %95, %91 : vector<2x8xf32>
    %cst_42 = arith.constant 1.000000e+00 : f32
    %97 = vector.broadcast %cst_42 : f32 to vector<2x8xf32>
    %98 = arith.addf %97, %96 : vector<2x8xf32>
    %cst_43 = arith.constant 2.000000e+00 : f32
    %99 = vector.broadcast %cst_43 : f32 to vector<2x8xf32>
    %100 = arith.mulf %99, %91 : vector<2x8xf32>
    %101 = arith.addf %92, %100 : vector<2x8xf32>
    %102 = arith.select %94, %98, %101 : vector<2x8xi1>, vector<2x8xf32>
    %cst_44 = arith.constant 2.000000e+00 : f32
    %103 = vector.broadcast %cst_44 : f32 to vector<2x8xf32>
    %104 = arith.mulf %103, %91 : vector<2x8xf32>
    %cst_45 = arith.constant 1.000000e+00 : f32
    %105 = vector.broadcast %cst_45 : f32 to vector<2x8xf32>
    %106 = arith.addf %105, %104 : vector<2x8xf32>
    %cst_46 = arith.constant 2.000000e+00 : f32
    %107 = vector.broadcast %cst_46 : f32 to vector<2x8xf32>
    %108 = arith.mulf %107, %92 : vector<2x8xf32>
    %109 = arith.addf %106, %108 : vector<2x8xf32>
    %cst_47 = arith.constant 2.000000e+00 : f32
    %110 = vector.broadcast %cst_47 : f32 to vector<2x8xf32>
    %111 = arith.mulf %110, %91 : vector<2x8xf32>
    %112 = arith.addf %92, %111 : vector<2x8xf32>
    %cst_48 = arith.constant 2.000000e+00 : f32
    %113 = vector.broadcast %cst_48 : f32 to vector<2x8xf32>
    %114 = arith.addf %112, %113 : vector<2x8xf32>
    %115 = arith.select %94, %109, %114 : vector<2x8xi1>, vector<2x8xf32>
    %116 = arith.mulf %87, %102 : vector<2x8xf32>
    %117 = arith.divf %116, %115 : vector<2x8xf32>
    %c0_49 = arith.constant 0 : index
    %c0_50 = arith.constant 0 : index
    %118 = vector.load %arg9[%c0_49, %c0_50] : memref<8x128xf32, #tpu.memory_space<vmem>>, vector<8x128xf32>
    %cst_51 = arith.constant dense<0.000000e+00> : vector<2x128xf32>
    %119 = tpu.matmul %117, %118, %cst_51 {dimension_numbers = #tpu.dot_dimension_numbers<[1], [0], [0], [1], [0, 0, 1, 1], [], []>} : vector<2x8xf32>, vector<8x128xf32>, vector<2x128xf32> -> vector<2x128xf32>
    %c0_52 = arith.constant 0 : index
    %c0_53 = arith.constant 0 : index
    %120 = vector.load %arg10[%c0_52, %c0_53] : memref<1x128xf32, #tpu.memory_space<vmem>>, vector<1x128xf32>
    %121 = vector.broadcast %120 : vector<1x128xf32> to vector<2x128xf32>
    %122 = arith.addf %119, %121 : vector<2x128xf32>
    %c0_54 = arith.constant 0 : index
    %c0_55 = arith.constant 0 : index
    %123 = vector.load %arg11[%c0_54, %c0_55] : memref<8x128xf32, #tpu.memory_space<vmem>>, vector<8x128xf32>
    %cst_56 = arith.constant dense<0.000000e+00> : vector<2x128xf32>
    %124 = tpu.matmul %117, %123, %cst_56 {dimension_numbers = #tpu.dot_dimension_numbers<[1], [0], [0], [1], [0, 0, 1, 1], [], []>} : vector<2x8xf32>, vector<8x128xf32>, vector<2x128xf32> -> vector<2x128xf32>
    %c0_57 = arith.constant 0 : index
    %c0_58 = arith.constant 0 : index
    %125 = vector.load %arg12[%c0_57, %c0_58] : memref<1x128xf32, #tpu.memory_space<vmem>>, vector<1x128xf32>
    %126 = vector.broadcast %125 : vector<1x128xf32> to vector<2x128xf32>
    %127 = arith.addf %124, %126 : vector<2x128xf32>
    %128 = vector.shape_cast %85 : vector<32x128xf32> to vector<2x16x128xf32>
    %129 = vector.shape_cast %122 : vector<2x128xf32> to vector<2x1x128xf32>
    %130 = vector.broadcast %129 : vector<2x1x128xf32> to vector<2x16x128xf32>
    %131 = arith.mulf %128, %130 : vector<2x16x128xf32>
    %132 = vector.shape_cast %127 : vector<2x128xf32> to vector<2x1x128xf32>
    %133 = vector.broadcast %132 : vector<2x1x128xf32> to vector<2x16x128xf32>
    %134 = arith.addf %131, %133 : vector<2x16x128xf32>
    %135 = vector.shape_cast %134 : vector<2x16x128xf32> to vector<32x128xf32>
    %cst_59 = arith.constant 0.000000e+00 : f32
    %136 = vector.broadcast %cst_59 : f32 to vector<2x1x128xf32>
    %137 = vector.extract_strided_slice %134 {offsets = [0, 0, 0], sizes = [2, 15, 128], strides = [1, 1, 1]} : vector<2x16x128xf32> to vector<2x15x128xf32>
    %138 = tpu.concatenate %136, %137 in 1 : vector<2x1x128xf32>, vector<2x15x128xf32> -> vector<2x16x128xf32>
    %139 = vector.shape_cast %138 : vector<2x16x128xf32> to vector<32x128xf32>
    %140 = vector.extract_strided_slice %134 {offsets = [0, 1, 0], sizes = [2, 15, 128], strides = [1, 1, 1]} : vector<2x16x128xf32> to vector<2x15x128xf32>
    %141 = tpu.concatenate %140, %136 in 1 : vector<2x15x128xf32>, vector<2x1x128xf32> -> vector<2x16x128xf32>
    %142 = vector.shape_cast %141 : vector<2x16x128xf32> to vector<32x128xf32>
    %c0_60 = arith.constant 0 : index
    %c0_61 = arith.constant 0 : index
    %c0_62 = arith.constant 0 : index
    %143 = vector.load %arg13[%c0_60, %c0_61, %c0_62] : memref<3x128x128xf32, #tpu.memory_space<vmem>>, vector<1x128x128xf32>
    %144 = vector.shape_cast %143 : vector<1x128x128xf32> to vector<128x128xf32>
    %cst_63 = arith.constant dense<0.000000e+00> : vector<32x128xf32>
    %145 = tpu.matmul %139, %144, %cst_63 {dimension_numbers = #tpu.dot_dimension_numbers<[1], [0], [0], [1], [0, 0, 1, 1], [], []>} : vector<32x128xf32>, vector<128x128xf32>, vector<32x128xf32> -> vector<32x128xf32>
    %c1 = arith.constant 1 : index
    %c0_64 = arith.constant 0 : index
    %c0_65 = arith.constant 0 : index
    %146 = vector.load %arg13[%c1, %c0_64, %c0_65] : memref<3x128x128xf32, #tpu.memory_space<vmem>>, vector<1x128x128xf32>
    %147 = vector.shape_cast %146 : vector<1x128x128xf32> to vector<128x128xf32>
    %cst_66 = arith.constant dense<0.000000e+00> : vector<32x128xf32>
    %148 = tpu.matmul %135, %147, %cst_66 {dimension_numbers = #tpu.dot_dimension_numbers<[1], [0], [0], [1], [0, 0, 1, 1], [], []>} : vector<32x128xf32>, vector<128x128xf32>, vector<32x128xf32> -> vector<32x128xf32>
    %149 = arith.addf %145, %148 : vector<32x128xf32>
    %c2 = arith.constant 2 : index
    %c0_67 = arith.constant 0 : index
    %c0_68 = arith.constant 0 : index
    %150 = vector.load %arg13[%c2, %c0_67, %c0_68] : memref<3x128x128xf32, #tpu.memory_space<vmem>>, vector<1x128x128xf32>
    %151 = vector.shape_cast %150 : vector<1x128x128xf32> to vector<128x128xf32>
    %cst_69 = arith.constant dense<0.000000e+00> : vector<32x128xf32>
    %152 = tpu.matmul %142, %151, %cst_69 {dimension_numbers = #tpu.dot_dimension_numbers<[1], [0], [0], [1], [0, 0, 1, 1], [], []>} : vector<32x128xf32>, vector<128x128xf32>, vector<32x128xf32> -> vector<32x128xf32>
    %153 = arith.addf %149, %152 : vector<32x128xf32>
    %c0_70 = arith.constant 0 : index
    %c0_71 = arith.constant 0 : index
    %154 = vector.load %arg14[%c0_70, %c0_71] : memref<1x128xf32, #tpu.memory_space<vmem>>, vector<1x128xf32>
    %155 = vector.broadcast %154 : vector<1x128xf32> to vector<32x128xf32>
    %156 = arith.addf %153, %155 : vector<32x128xf32>
    %c0_72 = arith.constant 0 : index
    %c0_73 = arith.constant 0 : index
    %157 = vector.load %arg15[%c0_72, %c0_73] : memref<1x128xf32, #tpu.memory_space<vmem>>, vector<1x128xf32>
    %c0_74 = arith.constant 0 : index
    %c0_75 = arith.constant 0 : index
    %158 = vector.load %arg16[%c0_74, %c0_75] : memref<1x128xf32, #tpu.memory_space<vmem>>, vector<1x128xf32>
    %cst_76 = arith.constant dense<0.000000e+00> : vector<32x8xf32>
    %159 = tpu.matmul %156, %0, %cst_76 {dimension_numbers = #tpu.dot_dimension_numbers<[1], [0], [0], [1], [0, 0, 1, 1], [], []>} : vector<32x128xf32>, vector<128x8xf32>, vector<32x8xf32> -> vector<32x8xf32>
    %160 = arith.mulf %156, %156 : vector<32x128xf32>
    %cst_77 = arith.constant dense<0.000000e+00> : vector<32x8xf32>
    %161 = tpu.matmul %160, %0, %cst_77 {dimension_numbers = #tpu.dot_dimension_numbers<[1], [0], [0], [1], [0, 0, 1, 1], [], []>} : vector<32x128xf32>, vector<128x8xf32>, vector<32x8xf32> -> vector<32x8xf32>
    %cst_78 = arith.constant dense<0.000000e+00> : vector<2x8xf32>
    %162 = tpu.matmul %15, %159, %cst_78 {dimension_numbers = #tpu.dot_dimension_numbers<[1], [0], [0], [1], [0, 0, 1, 1], [], []>} : vector<2x32xf32>, vector<32x8xf32>, vector<2x8xf32> -> vector<2x8xf32>
    %cst_79 = arith.constant 1.562500e-02 : f32
    %163 = vector.broadcast %cst_79 : f32 to vector<2x8xf32>
    %164 = arith.mulf %162, %163 : vector<2x8xf32>
    %cst_80 = arith.constant dense<0.000000e+00> : vector<2x8xf32>
    %165 = tpu.matmul %15, %161, %cst_80 {dimension_numbers = #tpu.dot_dimension_numbers<[1], [0], [0], [1], [0, 0, 1, 1], [], []>} : vector<2x32xf32>, vector<32x8xf32>, vector<2x8xf32> -> vector<2x8xf32>
    %cst_81 = arith.constant 1.562500e-02 : f32
    %166 = vector.broadcast %cst_81 : f32 to vector<2x8xf32>
    %167 = arith.mulf %165, %166 : vector<2x8xf32>
    %168 = arith.mulf %164, %164 : vector<2x8xf32>
    %169 = arith.subf %167, %168 : vector<2x8xf32>
    %cst_82 = arith.constant 9.99999974E-6 : f32
    %170 = vector.broadcast %cst_82 : f32 to vector<2x8xf32>
    %171 = arith.addf %169, %170 : vector<2x8xf32>
    %172 = math.rsqrt %171 : vector<2x8xf32>
    %cst_83 = arith.constant dense<0.000000e+00> : vector<2x128xf32>
    %173 = tpu.matmul %172, %1, %cst_83 {dimension_numbers = #tpu.dot_dimension_numbers<[1], [0], [0], [1], [0, 0, 1, 1], [], []>} : vector<2x8xf32>, vector<8x128xf32>, vector<2x128xf32> -> vector<2x128xf32>
    %174 = vector.broadcast %157 : vector<1x128xf32> to vector<2x128xf32>
    %175 = arith.mulf %173, %174 : vector<2x128xf32>
    %176 = arith.mulf %164, %172 : vector<2x8xf32>
    %cst_84 = arith.constant dense<0.000000e+00> : vector<2x128xf32>
    %177 = tpu.matmul %176, %1, %cst_84 {dimension_numbers = #tpu.dot_dimension_numbers<[1], [0], [0], [1], [0, 0, 1, 1], [], []>} : vector<2x8xf32>, vector<8x128xf32>, vector<2x128xf32> -> vector<2x128xf32>
    %178 = vector.broadcast %157 : vector<1x128xf32> to vector<2x128xf32>
    %179 = arith.mulf %177, %178 : vector<2x128xf32>
    %180 = vector.broadcast %158 : vector<1x128xf32> to vector<2x128xf32>
    %181 = arith.subf %180, %179 : vector<2x128xf32>
    %182 = vector.shape_cast %156 : vector<32x128xf32> to vector<2x16x128xf32>
    %183 = vector.shape_cast %175 : vector<2x128xf32> to vector<2x1x128xf32>
    %184 = vector.broadcast %183 : vector<2x1x128xf32> to vector<2x16x128xf32>
    %185 = arith.mulf %182, %184 : vector<2x16x128xf32>
    %186 = vector.shape_cast %181 : vector<2x128xf32> to vector<2x1x128xf32>
    %187 = vector.broadcast %186 : vector<2x1x128xf32> to vector<2x16x128xf32>
    %188 = arith.addf %185, %187 : vector<2x16x128xf32>
    %189 = vector.shape_cast %188 : vector<2x16x128xf32> to vector<32x128xf32>
    %190 = math.absf %189 : vector<32x128xf32>
    %cst_85 = arith.constant 0.000000e+00 : f32
    %191 = vector.broadcast %cst_85 : f32 to vector<32x128xf32>
    %192 = arith.subf %191, %190 : vector<32x128xf32>
    %193 = math.exp %192 : vector<32x128xf32>
    %194 = arith.mulf %193, %193 : vector<32x128xf32>
    %cst_86 = arith.constant 0.000000e+00 : f32
    %195 = vector.broadcast %cst_86 : f32 to vector<32x128xf32>
    %196 = arith.cmpf oge, %189, %195 : vector<32x128xf32>
    %cst_87 = arith.constant 2.000000e+00 : f32
    %197 = vector.broadcast %cst_87 : f32 to vector<32x128xf32>
    %198 = arith.mulf %197, %193 : vector<32x128xf32>
    %cst_88 = arith.constant 1.000000e+00 : f32
    %199 = vector.broadcast %cst_88 : f32 to vector<32x128xf32>
    %200 = arith.addf %199, %198 : vector<32x128xf32>
    %cst_89 = arith.constant 2.000000e+00 : f32
    %201 = vector.broadcast %cst_89 : f32 to vector<32x128xf32>
    %202 = arith.mulf %201, %193 : vector<32x128xf32>
    %203 = arith.addf %194, %202 : vector<32x128xf32>
    %204 = arith.select %196, %200, %203 : vector<32x128xi1>, vector<32x128xf32>
    %cst_90 = arith.constant 2.000000e+00 : f32
    %205 = vector.broadcast %cst_90 : f32 to vector<32x128xf32>
    %206 = arith.mulf %205, %193 : vector<32x128xf32>
    %cst_91 = arith.constant 1.000000e+00 : f32
    %207 = vector.broadcast %cst_91 : f32 to vector<32x128xf32>
    %208 = arith.addf %207, %206 : vector<32x128xf32>
    %cst_92 = arith.constant 2.000000e+00 : f32
    %209 = vector.broadcast %cst_92 : f32 to vector<32x128xf32>
    %210 = arith.mulf %209, %194 : vector<32x128xf32>
    %211 = arith.addf %208, %210 : vector<32x128xf32>
    %cst_93 = arith.constant 2.000000e+00 : f32
    %212 = vector.broadcast %cst_93 : f32 to vector<32x128xf32>
    %213 = arith.mulf %212, %193 : vector<32x128xf32>
    %214 = arith.addf %194, %213 : vector<32x128xf32>
    %cst_94 = arith.constant 2.000000e+00 : f32
    %215 = vector.broadcast %cst_94 : f32 to vector<32x128xf32>
    %216 = arith.addf %214, %215 : vector<32x128xf32>
    %217 = arith.select %196, %211, %216 : vector<32x128xi1>, vector<32x128xf32>
    %218 = arith.mulf %189, %204 : vector<32x128xf32>
    %219 = arith.divf %218, %217 : vector<32x128xf32>
    %c0_95 = arith.constant 0 : index
    %c0_96 = arith.constant 0 : index
    %220 = vector.load %arg17[%c0_95, %c0_96] : memref<12x128xf32, #tpu.memory_space<vmem>>, vector<12x128xf32>
    %cst_97 = arith.constant dense<0.000000e+00> : vector<32x128xf32>
    %221 = tpu.matmul %17, %220, %cst_97 {dimension_numbers = #tpu.dot_dimension_numbers<[1], [0], [0], [1], [0, 0, 1, 1], [], []>} : vector<32x12xf32>, vector<12x128xf32>, vector<32x128xf32> -> vector<32x128xf32>
    %c0_98 = arith.constant 0 : index
    %c0_99 = arith.constant 0 : index
    %222 = vector.load %arg18[%c0_98, %c0_99] : memref<1x128xf32, #tpu.memory_space<vmem>>, vector<1x128xf32>
    %223 = vector.broadcast %222 : vector<1x128xf32> to vector<32x128xf32>
    %224 = arith.addf %221, %223 : vector<32x128xf32>
    %225 = arith.addf %219, %224 : vector<32x128xf32>
    %226 = vector.shape_cast %225 : vector<32x128xf32> to vector<2x16x128xf32>
    %c0_100 = arith.constant 0 : index
    %c0_101 = arith.constant 0 : index
    %c0_102 = arith.constant 0 : index
    %227 = vector.load %arg19[%c0_100, %c0_101, %c0_102] : memref<2x16x128xf32, #tpu.memory_space<vmem>>, vector<2x16x128xf32>
    tpu.vector_store %arg19[%c0_100, %c0_101, %c0_102], %226 {strides = array<i32>} : memref<2x16x128xf32, #tpu.memory_space<vmem>>, vector<2x16x128xf32>,
    return
  }
  func.func @transform_0(%arg0: i32) -> (i32, i32, i32) {
    %c0_i32 = arith.constant 0 : i32
    %c0_i32_0 = arith.constant 0 : i32
    %c0_i32_1 = arith.constant 0 : i32
    return %arg0, %c0_i32, %c0_i32_0 : i32, i32, i32
  }
  func.func @transform_1(%arg0: i32) -> (i32, i32, i32) {
    %c0_i32 = arith.constant 0 : i32
    %c0_i32_0 = arith.constant 0 : i32
    %c0_i32_1 = arith.constant 0 : i32
    return %arg0, %c0_i32, %c0_i32_0 : i32, i32, i32
  }
  func.func @transform_2(%arg0: i32) -> (i32, i32) {
    %c0_i32 = arith.constant 0 : i32
    %c0_i32_0 = arith.constant 0 : i32
    %c0_i32_1 = arith.constant 0 : i32
    return %c0_i32, %c0_i32_0 : i32, i32
  }
  func.func @transform_3(%arg0: i32) -> (i32, i32) {
    %c0_i32 = arith.constant 0 : i32
    %c0_i32_0 = arith.constant 0 : i32
    %c0_i32_1 = arith.constant 0 : i32
    return %c0_i32, %c0_i32_0 : i32, i32
  }
  func.func @transform_4(%arg0: i32) -> (i32, i32) {
    %c0_i32 = arith.constant 0 : i32
    %c0_i32_0 = arith.constant 0 : i32
    %c0_i32_1 = arith.constant 0 : i32
    return %c0_i32, %c0_i32_0 : i32, i32
  }
  func.func @transform_5(%arg0: i32) -> (i32, i32) {
    %c0_i32 = arith.constant 0 : i32
    %c0_i32_0 = arith.constant 0 : i32
    %c0_i32_1 = arith.constant 0 : i32
    return %c0_i32, %c0_i32_0 : i32, i32
  }
  func.func @transform_6(%arg0: i32) -> (i32, i32) {
    %c0_i32 = arith.constant 0 : i32
    %c0_i32_0 = arith.constant 0 : i32
    %c0_i32_1 = arith.constant 0 : i32
    return %c0_i32, %c0_i32_0 : i32, i32
  }
  func.func @transform_7(%arg0: i32) -> (i32, i32) {
    %c0_i32 = arith.constant 0 : i32
    %c0_i32_0 = arith.constant 0 : i32
    %c0_i32_1 = arith.constant 0 : i32
    return %c0_i32, %c0_i32_0 : i32, i32
  }
  func.func @transform_8(%arg0: i32) -> (i32, i32) {
    %c0_i32 = arith.constant 0 : i32
    %c0_i32_0 = arith.constant 0 : i32
    %c0_i32_1 = arith.constant 0 : i32
    return %c0_i32, %c0_i32_0 : i32, i32
  }
  func.func @transform_9(%arg0: i32) -> (i32, i32) {
    %c0_i32 = arith.constant 0 : i32
    %c0_i32_0 = arith.constant 0 : i32
    %c0_i32_1 = arith.constant 0 : i32
    return %c0_i32, %c0_i32_0 : i32, i32
  }
  func.func @transform_10(%arg0: i32) -> (i32, i32) {
    %c0_i32 = arith.constant 0 : i32
    %c0_i32_0 = arith.constant 0 : i32
    %c0_i32_1 = arith.constant 0 : i32
    return %c0_i32, %c0_i32_0 : i32, i32
  }
  func.func @transform_11(%arg0: i32) -> (i32, i32) {
    %c0_i32 = arith.constant 0 : i32
    %c0_i32_0 = arith.constant 0 : i32
    %c0_i32_1 = arith.constant 0 : i32
    return %c0_i32, %c0_i32_0 : i32, i32
  }
  func.func @transform_12(%arg0: i32) -> (i32, i32, i32) {
    %c0_i32 = arith.constant 0 : i32
    %c0_i32_0 = arith.constant 0 : i32
    %c0_i32_1 = arith.constant 0 : i32
    %c0_i32_2 = arith.constant 0 : i32
    return %c0_i32, %c0_i32_0, %c0_i32_1 : i32, i32, i32
  }
  func.func @transform_13(%arg0: i32) -> (i32, i32) {
    %c0_i32 = arith.constant 0 : i32
    %c0_i32_0 = arith.constant 0 : i32
    %c0_i32_1 = arith.constant 0 : i32
    return %c0_i32, %c0_i32_0 : i32, i32
  }
  func.func @transform_14(%arg0: i32) -> (i32, i32) {
    %c0_i32 = arith.constant 0 : i32
    %c0_i32_0 = arith.constant 0 : i32
    %c0_i32_1 = arith.constant 0 : i32
    return %c0_i32, %c0_i32_0 : i32, i32
  }
  func.func @transform_15(%arg0: i32) -> (i32, i32) {
    %c0_i32 = arith.constant 0 : i32
    %c0_i32_0 = arith.constant 0 : i32
    %c0_i32_1 = arith.constant 0 : i32
    return %c0_i32, %c0_i32_0 : i32, i32
  }
  func.func @transform_16(%arg0: i32) -> (i32, i32) {
    %c0_i32 = arith.constant 0 : i32
    %c0_i32_0 = arith.constant 0 : i32
    %c0_i32_1 = arith.constant 0 : i32
    return %c0_i32, %c0_i32_0 : i32, i32
  }
  func.func @transform_17(%arg0: i32) -> (i32, i32) {
    %c0_i32 = arith.constant 0 : i32
    %c0_i32_0 = arith.constant 0 : i32
    %c0_i32_1 = arith.constant 0 : i32
    return %c0_i32, %c0_i32_0 : i32, i32
  }
  func.func @transform_18(%arg0: i32) -> (i32, i32, i32) {
    %c0_i32 = arith.constant 0 : i32
    %c0_i32_0 = arith.constant 0 : i32
    %c0_i32_1 = arith.constant 0 : i32
    return %arg0, %c0_i32, %c0_i32_0 : i32, i32, i32
  }
}

</mosaic_0001>

<llo_original>
// kernel: tpu_custom_call.1
$region0: #{tpu_custom_call.1}
  #allocation0 [shape = 'u32[]', space=smem, size = 0x4, offset = 0x4, fixed_abs, tag = 'smem constant byte address 0x4 - core index']
  #allocation1 [shape = 'u32[144,128]{1,0:T(1,128)}', space=vmem, size = 0x12000, scoped, tag = 'internal scratch']
  %s0 = inlined_call_operand.hbm [shape: f32[2,16,12], index: 0, kind: input, shape index: {}]
  %s1 = inlined_call_operand.hbm [shape: f32[1,2,8], index: 1, kind: input, shape index: {}]
  %s2 = inlined_call_operand.hbm [shape: f32[12,128], index: 2, kind: input, shape index: {}]
  %s3 = inlined_call_operand.hbm [shape: f32[1,128], index: 3, kind: input, shape index: {}]
  %s4 = inlined_call_operand.hbm [shape: f32[1,128], index: 4, kind: input, shape index: {}]
  %s5 = inlined_call_operand.hbm [shape: f32[1,128], index: 5, kind: input, shape index: {}]
  %s6 = inlined_call_operand.hbm [shape: f32[128,8], index: 6, kind: input, shape index: {}]
  %s7 = inlined_call_operand.hbm [shape: f32[8,128], index: 7, kind: input, shape index: {}]
  %s8 = inlined_call_operand.hbm [shape: f32[8,128], index: 8, kind: input, shape index: {}]
  %s9 = inlined_call_operand.hbm [shape: f32[1,128], index: 9, kind: input, shape index: {}]
  %s10 = inlined_call_operand.hbm [shape: f32[8,128], index: 10, kind: input, shape index: {}]
  %s11 = inlined_call_operand.hbm [shape: f32[1,128], index: 11, kind: input, shape index: {}]
  %s12 = inlined_call_operand.hbm [shape: f32[3,128,128], index: 12, kind: input, shape index: {}]
  %s13 = inlined_call_operand.hbm [shape: f32[1,128], index: 13, kind: input, shape index: {}]
  %s14 = inlined_call_operand.hbm [shape: f32[1,128], index: 14, kind: input, shape index: {}]
  %s15 = inlined_call_operand.hbm [shape: f32[1,128], index: 15, kind: input, shape index: {}]
  %s16 = inlined_call_operand.hbm [shape: f32[12,128], index: 16, kind: input, shape index: {}]
  %s17 = inlined_call_operand.hbm [shape: f32[1,128], index: 17, kind: input, shape index: {}]
  %s18 = inlined_call_operand.hbm [shape: f32[2,16,128], index: 18, kind: output, shape index: {}]
  %s19 = sld [smem:[#allocation0]]
  $region154: #{tpu_custom_call.1} parent=0
    _
  %s21 = ssub.s32 1, %s19
  %s22 = scalar_select 0, %s21, %s19
  $region1: #{tpu_custom_call.1} parent=0
    #allocation2 [shape = 'u8[16384]{0}', space=vmem, size = 0x4000, scoped, tag = 'input window, operand 0, single buffered']
    #allocation3 [shape = 's32[1]{0}', space=sflag, size = 0x4, scoped, tag = 'scoped memory for tpu_custom_call.1']
    #allocation4 [shape = 's32[1]{0}', space=sflag, size = 0x4, scoped, tag = 'scoped memory for tpu_custom_call.1']
    #allocation5 [shape = 'u8[1024]{0}', space=vmem, size = 0x400, scoped, tag = 'input window, operand 1, single buffered']
    #allocation6 [shape = 's32[1]{0}', space=sflag, size = 0x4, scoped, tag = 'scoped memory for tpu_custom_call.1']
    #allocation7 [shape = 'u8[8192]{0}', space=vmem, size = 0x2000, scoped, tag = 'input window, operand 2, single buffered']
    #allocation8 [shape = 'u8[512]{0}', space=vmem, size = 0x400, scoped, tag = 'input window, operand 3, single buffered']
    #allocation9 [shape = 's32[1]{0}', space=sflag, size = 0x4, scoped, tag = 'scoped memory for tpu_custom_call.1']
    #allocation10 [shape = 'u8[512]{0}', space=vmem, size = 0x400, scoped, tag = 'input window, operand 4, single buffered']
    #allocation11 [shape = 'u8[512]{0}', space=vmem, size = 0x400, scoped, tag = 'input window, operand 5, single buffered']
    #allocation12 [shape = 's32[1]{0}', space=sflag, size = 0x4, scoped, tag = 'scoped memory for tpu_custom_call.1']
    #allocation13 [shape = 'u8[65536]{0}', space=vmem, size = 0x10000, scoped, tag = 'input window, operand 6, single buffered']
    #allocation14 [shape = 'u8[4096]{0}', space=vmem, size = 0x1000, scoped, tag = 'input window, operand 7, single buffered']
    #allocation15 [shape = 's32[1]{0}', space=sflag, size = 0x4, scoped, tag = 'scoped memory for tpu_custom_call.1']
    #allocation16 [shape = 'u8[4096]{0}', space=vmem, size = 0x1000, scoped, tag = 'input window, operand 8, single buffered']
    #allocation17 [shape = 'u8[512]{0}', space=vmem, size = 0x400, scoped, tag = 'input window, operand 9, single buffered']
    #allocation18 [shape = 's32[1]{0}', space=sflag, size = 0x4, scoped, tag = 'scoped memory for tpu_custom_call.1']
    #allocation19 [shape = 'u8[4096]{0}', space=vmem, size = 0x1000, scoped, tag = 'input window, operand 10, single buffered']
    #allocation20 [shape = 'u8[512]{0}', space=vmem, size = 0x400, scoped, tag = 'input window, operand 11, single buffered']
    #allocation21 [shape = 's32[1]{0}', space=sflag, size = 0x4, scoped, tag = 'scoped memory for tpu_custom_call.1']
    #allocation22 [shape = 'u8[196608]{0}', space=vmem, size = 0x30000, scoped, tag = 'input window, operand 12, single buffered']
    #allocation23 [shape = 'u8[512]{0}', space=vmem, size = 0x400, scoped, tag = 'input window, operand 13, single buffered']
    #allocation24 [shape = 's32[1]{0}', space=sflag, size = 0x4, scoped, tag = 'scoped memory for tpu_custom_call.1']
    #allocation25 [shape = 'u8[512]{0}', space=vmem, size = 0x400, scoped, tag = 'input window, operand 14, single buffered']
    #allocation26 [shape = 'u8[512]{0}', space=vmem, size = 0x400, scoped, tag = 'input window, operand 15, single buffered']
    #allocation27 [shape = 's32[1]{0}', space=sflag, size = 0x4, scoped, tag = 'scoped memory for tpu_custom_call.1']
    #allocation28 [shape = 'u8[8192]{0}', space=vmem, size = 0x2000, scoped, tag = 'input window, operand 16, single buffered']
    #allocation29 [shape = 'u8[512]{0}', space=vmem, size = 0x400, scoped, tag = 'input window, operand 17, single buffered']
    #allocation30 [shape = 's32[1]{0}', space=sflag, size = 0x4, scoped, tag = 'scoped memory for tpu_custom_call.1']
    #allocation31 [shape = 'u8[16384]{0}', space=vmem, size = 0x4000, scoped, tag = 'output window, operand 0, single buffered']
    %23 = vsyncpa [#allocation3], 0
    %24 = vsyncpa [#allocation6], 0
    %25 = vsyncpa [#allocation9], 0
    %26 = vsyncpa [#allocation12], 0
    %27 = vsyncpa [#allocation15], 0
    %28 = vsyncpa [#allocation18], 0
    %29 = vsyncpa [#allocation21], 0
    %30 = vsyncpa [#allocation24], 0
    %31 = vsyncpa [#allocation27], 0
    %32 = vsyncpa [#allocation30], 0
    %33 = vsyncpa [#allocation4], 0
    // Predicated region
    $region2: #{tpu_custom_call.1} parent=1 // pred_check
      _
    $region3: #{tpu_custom_call.1} parent=1 // pred_check_branch
      %35 = sbr.rel (0) target = $region5
    $region4: #{tpu_custom_call.1} parent=1 // pred_region
      %s37 = ssub.s32 512, 512
      %38 = vsyncadd [#allocation3], %s37
      %s39 = sshll.u32 [#allocation2], 4
      %s40 = int_to_ptr.vmem [resolvable:$true] %s39
      %45 = dma.hbm_to_vmem [thread:$0]  %s0, 512, %s40, [#allocation3], 128, 128, 8
    $region5: #{tpu_custom_call.1} parent=1 // pred_fallthru
      _
    // Predicated region
    $region6: #{tpu_custom_call.1} parent=1 // pred_check
      _
    $region7: #{tpu_custom_call.1} parent=1 // pred_check_branch
      %47 = sbr.rel (0) target = $region9
    $region8: #{tpu_custom_call.1} parent=1 // pred_region
      %s49 = ssub.s32 32, 32
      %50 = vsyncadd [#allocation6], %s49
      %s52 = sshll.u32 [#allocation5], 4
      %s53 = int_to_ptr.vmem [resolvable:$true] %s52
      %55 = dma.hbm_to_vmem [thread:$0]  %s1, 32, %s53, [#allocation6]
    $region9: #{tpu_custom_call.1} parent=1 // pred_fallthru
      _
    // Predicated region
    $region10: #{tpu_custom_call.1} parent=1 // pred_check
      _
    $region11: #{tpu_custom_call.1} parent=1 // pred_check_branch
      %57 = sbr.rel (0) target = $region13
    $region12: #{tpu_custom_call.1} parent=1 // pred_region
      %s59 = ssub.s32 256, 256
      %60 = vsyncadd [#allocation6], %s59
      %s61 = sshll.u32 [#allocation7], 4
      %s62 = int_to_ptr.vmem [resolvable:$true] %s61
      %67 = dma.hbm_to_vmem [thread:$0]  %s2, 256, %s62, [#allocation6], 128, 128, 8
    $region13: #{tpu_custom_call.1} parent=1 // pred_fallthru
      _
    // Predicated region
    $region14: #{tpu_custom_call.1} parent=1 // pred_check
      _
    $region15: #{tpu_custom_call.1} parent=1 // pred_check_branch
      %69 = sbr.rel (0) target = $region17
    $region16: #{tpu_custom_call.1} parent=1 // pred_region
      %s71 = ssub.s32 16, 16
      %72 = vsyncadd [#allocation9], %s71
      %s74 = sshll.u32 [#allocation8], 4
      %s75 = int_to_ptr.vmem [resolvable:$true] %s74
      %77 = dma.hbm_to_vmem [thread:$0]  %s3, 16, %s75, [#allocation9]
    $region17: #{tpu_custom_call.1} parent=1 // pred_fallthru
      _
    // Predicated region
    $region18: #{tpu_custom_call.1} parent=1 // pred_check
      _
    $region19: #{tpu_custom_call.1} parent=1 // pred_check_branch
      %79 = sbr.rel (0) target = $region21
    $region20: #{tpu_custom_call.1} parent=1 // pred_region
      %s81 = ssub.s32 16, 16
      %82 = vsyncadd [#allocation9], %s81
      %s84 = sshll.u32 [#allocation10], 4
      %s85 = int_to_ptr.vmem [resolvable:$true] %s84
      %87 = dma.hbm_to_vmem [thread:$0]  %s4, 16, %s85, [#allocation9]
    $region21: #{tpu_custom_call.1} parent=1 // pred_fallthru
      _
    // Predicated region
    $region22: #{tpu_custom_call.1} parent=1 // pred_check
      _
    $region23: #{tpu_custom_call.1} parent=1 // pred_check_branch
      %89 = sbr.rel (0) target = $region25
    $region24: #{tpu_custom_call.1} parent=1 // pred_region
      %s91 = ssub.s32 16, 16
      %92 = vsyncadd [#allocation12], %s91
      %s94 = sshll.u32 [#allocation11], 4
      %s95 = int_to_ptr.vmem [resolvable:$true] %s94
      %97 = dma.hbm_to_vmem [thread:$0]  %s5, 16, %s95, [#allocation12]
    $region25: #{tpu_custom_call.1} parent=1 // pred_fallthru
      _
    // Predicated region
    $region26: #{tpu_custom_call.1} parent=1 // pred_check
      _
    $region27: #{tpu_custom_call.1} parent=1 // pred_check_branch
      %99 = sbr.rel (0) target = $region29
    $region28: #{tpu_custom_call.1} parent=1 // pred_region
      %s101 = ssub.s32 2048, 2048
      %102 = vsyncadd [#allocation12], %s101
      %s103 = sshll.u32 [#allocation13], 4
      %s104 = int_to_ptr.vmem [resolvable:$true] %s103
      %109 = dma.hbm_to_vmem [thread:$0]  %s6, 2048, %s104, [#allocation12], 128, 128, 8
    $region29: #{tpu_custom_call.1} parent=1 // pred_fallthru
      _
    // Predicated region
    $region30: #{tpu_custom_call.1} parent=1 // pred_check
      _
    $region31: #{tpu_custom_call.1} parent=1 // pred_check_branch
      %111 = sbr.rel (0) target = $region33
    $region32: #{tpu_custom_call.1} parent=1 // pred_region
      %s113 = ssub.s32 128, 128
      %114 = vsyncadd [#allocation15], %s113
      %s116 = sshll.u32 [#allocation14], 4
      %s117 = int_to_ptr.vmem [resolvable:$true] %s116
      %119 = dma.hbm_to_vmem [thread:$0]  %s7, 128, %s117, [#allocation15]
    $region33: #{tpu_custom_call.1} parent=1 // pred_fallthru
      _
    // Predicated region
    $region34: #{tpu_custom_call.1} parent=1 // pred_check
      _
    $region35: #{tpu_custom_call.1} parent=1 // pred_check_branch
      %121 = sbr.rel (0) target = $region37
    $region36: #{tpu_custom_call.1} parent=1 // pred_region
      %s123 = ssub.s32 128, 128
      %124 = vsyncadd [#allocation15], %s123
      %s126 = sshll.u32 [#allocation16], 4
      %s127 = int_to_ptr.vmem [resolvable:$true] %s126
      %129 = dma.hbm_to_vmem [thread:$0]  %s8, 128, %s127, [#allocation15]
    $region37: #{tpu_custom_call.1} parent=1 // pred_fallthru
      _
    // Predicated region
    $region38: #{tpu_custom_call.1} parent=1 // pred_check
      _
    $region39: #{tpu_custom_call.1} parent=1 // pred_check_branch
      %131 = sbr.rel (0) target = $region41
    $region40: #{tpu_custom_call.1} parent=1 // pred_region
      %s133 = ssub.s32 16, 16
      %134 = vsyncadd [#allocation18], %s133
      %s136 = sshll.u32 [#allocation17], 4
      %s137 = int_to_ptr.vmem [resolvable:$true] %s136
      %139 = dma.hbm_to_vmem [thread:$0]  %s9, 16, %s137, [#allocation18]
    $region41: #{tpu_custom_call.1} parent=1 // pred_fallthru
      _
    // Predicated region
    $region42: #{tpu_custom_call.1} parent=1 // pred_check
      _
    $region43: #{tpu_custom_call.1} parent=1 // pred_check_branch
      %141 = sbr.rel (0) target = $region45
    $region44: #{tpu_custom_call.1} parent=1 // pred_region
      %s143 = ssub.s32 128, 128
      %144 = vsyncadd [#allocation18], %s143
      %s146 = sshll.u32 [#allocation19], 4
      %s147 = int_to_ptr.vmem [resolvable:$true] %s146
      %149 = dma.hbm_to_vmem [thread:$0]  %s10, 128, %s147, [#allocation18]
    $region45: #{tpu_custom_call.1} parent=1 // pred_fallthru
      _
    // Predicated region
    $region46: #{tpu_custom_call.1} parent=1 // pred_check
      _
    $region47: #{tpu_custom_call.1} parent=1 // pred_check_branch
      %151 = sbr.rel (0) target = $region49
    $region48: #{tpu_custom_call.1} parent=1 // pred_region
      %s153 = ssub.s32 16, 16
      %154 = vsyncadd [#allocation21], %s153
      %s156 = sshll.u32 [#allocation20], 4
      %s157 = int_to_ptr.vmem [resolvable:$true] %s156
      %159 = dma.hbm_to_vmem [thread:$0]  %s11, 16, %s157, [#allocation21]
    $region49: #{tpu_custom_call.1} parent=1 // pred_fallthru
      _
    // Predicated region
    $region50: #{tpu_custom_call.1} parent=1 // pred_check
      _
    $region51: #{tpu_custom_call.1} parent=1 // pred_check_branch
      %161 = sbr.rel (0) target = $region53
    $region52: #{tpu_custom_call.1} parent=1 // pred_region
      %s163 = ssub.s32 6144, 6144
      %164 = vsyncadd [#allocation21], %s163
      %s165 = sshll.u32 [#allocation22], 4
      %s166 = int_to_ptr.vmem [resolvable:$true] %s165
      %171 = dma.hbm_to_vmem [thread:$0]  %s12, 6144, %s166, [#allocation21], 128, 128, 8
    $region53: #{tpu_custom_call.1} parent=1 // pred_fallthru
      _
    // Predicated region
    $region54: #{tpu_custom_call.1} parent=1 // pred_check
      _
    $region55: #{tpu_custom_call.1} parent=1 // pred_check_branch
      %173 = sbr.rel (0) target = $region57
    $region56: #{tpu_custom_call.1} parent=1 // pred_region
      %s175 = ssub.s32 16, 16
      %176 = vsyncadd [#allocation24], %s175
      %s178 = sshll.u32 [#allocation23], 4
      %s179 = int_to_ptr.vmem [resolvable:$true] %s178
      %181 = dma.hbm_to_vmem [thread:$0]  %s13, 16, %s179, [#allocation24]
    $region57: #{tpu_custom_call.1} parent=1 // pred_fallthru
      _
    // Predicated region
    $region58: #{tpu_custom_call.1} parent=1 // pred_check
      _
    $region59: #{tpu_custom_call.1} parent=1 // pred_check_branch
      %183 = sbr.rel (0) target = $region61
    $region60: #{tpu_custom_call.1} parent=1 // pred_region
      %s185 = ssub.s32 16, 16
      %186 = vsyncadd [#allocation24], %s185
      %s188 = sshll.u32 [#allocation25], 4
      %s189 = int_to_ptr.vmem [resolvable:$true] %s188
      %191 = dma.hbm_to_vmem [thread:$0]  %s14, 16, %s189, [#allocation24]
    $region61: #{tpu_custom_call.1} parent=1 // pred_fallthru
      _
    // Predicated region
    $region62: #{tpu_custom_call.1} parent=1 // pred_check
      _
    $region63: #{tpu_custom_call.1} parent=1 // pred_check_branch
      %193 = sbr.rel (0) target = $region65
    $region64: #{tpu_custom_call.1} parent=1 // pred_region
      %s195 = ssub.s32 16, 16
      %196 = vsyncadd [#allocation27], %s195
      %s198 = sshll.u32 [#allocation26], 4
      %s199 = int_to_ptr.vmem [resolvable:$true] %s198
      %201 = dma.hbm_to_vmem [thread:$0]  %s15, 16, %s199, [#allocation27]
    $region65: #{tpu_custom_call.1} parent=1 // pred_fallthru
      _
    // Predicated region
    $region66: #{tpu_custom_call.1} parent=1 // pred_check
      _
    $region67: #{tpu_custom_call.1} parent=1 // pred_check_branch
      %203 = sbr.rel (0) target = $region69
    $region68: #{tpu_custom_call.1} parent=1 // pred_region
      %s205 = ssub.s32 256, 256
      %206 = vsyncadd [#allocation27], %s205
      %s207 = sshll.u32 [#allocation28], 4
      %s208 = int_to_ptr.vmem [resolvable:$true] %s207
      %213 = dma.hbm_to_vmem [thread:$0]  %s16, 256, %s208, [#allocation27], 128, 128, 8
    $region69: #{tpu_custom_call.1} parent=1 // pred_fallthru
      _
    // Predicated region
    $region70: #{tpu_custom_call.1} parent=1 // pred_check
      _
    $region71: #{tpu_custom_call.1} parent=1 // pred_check_branch
      %215 = sbr.rel (0) target = $region73
    $region72: #{tpu_custom_call.1} parent=1 // pred_region
      %s217 = ssub.s32 16, 16
      %218 = vsyncadd [#allocation30], %s217
      %s220 = sshll.u32 [#allocation29], 4
      %s221 = int_to_ptr.vmem [resolvable:$true] %s220
      %223 = dma.hbm_to_vmem [thread:$0]  %s17, 16, %s221, [#allocation30]
    $region73: #{tpu_custom_call.1} parent=1 // pred_fallthru
      _
    // Predicated region
    $region74: #{tpu_custom_call.1} parent=1 // pred_check
      _
    $region75: #{tpu_custom_call.1} parent=1 // pred_check_branch
      %225 = sbr.rel (0) target = $region77
    $region76: #{tpu_custom_call.1} parent=1 // pred_region
      %226 = dma.done [#allocation3], 512
    $region77: #{tpu_custom_call.1} parent=1 // pred_fallthru
      _
    // Predicated region
    $region78: #{tpu_custom_call.1} parent=1 // pred_check
      _
    $region79: #{tpu_custom_call.1} parent=1 // pred_check_branch
      %228 = sbr.rel (0) target = $region81
    $region80: #{tpu_custom_call.1} parent=1 // pred_region
      %229 = dma.done [#allocation6], 32
    $region81: #{tpu_custom_call.1} parent=1 // pred_fallthru
      _
    // Predicated region
    $region82: #{tpu_custom_call.1} parent=1 // pred_check
      _
    $region83: #{tpu_custom_call.1} parent=1 // pred_check_branch
      %231 = sbr.rel (0) target = $region85
    $region84: #{tpu_custom_call.1} parent=1 // pred_region
      %232 = dma.done [#allocation6], 256
    $region85: #{tpu_custom_call.1} parent=1 // pred_fallthru
      _
    // Predicated region
    $region86: #{tpu_custom_call.1} parent=1 // pred_check
      _
    $region87: #{tpu_custom_call.1} parent=1 // pred_check_branch
      %234 = sbr.rel (0) target = $region89
    $region88: #{tpu_custom_call.1} parent=1 // pred_region
      %235 = dma.done [#allocation9], 16
    $region89: #{tpu_custom_call.1} parent=1 // pred_fallthru
      _
    // Predicated region
    $region90: #{tpu_custom_call.1} parent=1 // pred_check
      _
    $region91: #{tpu_custom_call.1} parent=1 // pred_check_branch
      %237 = sbr.rel (0) target = $region93
    $region92: #{tpu_custom_call.1} parent=1 // pred_region
      %238 = dma.done [#allocation9], 16
    $region93: #{tpu_custom_call.1} parent=1 // pred_fallthru
      _
    // Predicated region
    $region94: #{tpu_custom_call.1} parent=1 // pred_check
      _
    $region95: #{tpu_custom_call.1} parent=1 // pred_check_branch
      %240 = sbr.rel (0) target = $region97
    $region96: #{tpu_custom_call.1} parent=1 // pred_region
      %241 = dma.done [#allocation12], 16
    $region97: #{tpu_custom_call.1} parent=1 // pred_fallthru
      _
    // Predicated region
    $region98: #{tpu_custom_call.1} parent=1 // pred_check
      _
    $region99: #{tpu_custom_call.1} parent=1 // pred_check_branch
      %243 = sbr.rel (0) target = $region101
    $region100: #{tpu_custom_call.1} parent=1 // pred_region
      %244 = dma.done [#allocation12], 2048
    $region101: #{tpu_custom_call.1} parent=1 // pred_fallthru
      _
    // Predicated region
    $region102: #{tpu_custom_call.1} parent=1 // pred_check
      _
    $region103: #{tpu_custom_call.1} parent=1 // pred_check_branch
      %246 = sbr.rel (0) target = $region105
    $region104: #{tpu_custom_call.1} parent=1 // pred_region
      %247 = dma.done [#allocation15], 128
    $region105: #{tpu_custom_call.1} parent=1 // pred_fallthru
      _
    // Predicated region
    $region106: #{tpu_custom_call.1} parent=1 // pred_check
      _
    $region107: #{tpu_custom_call.1} parent=1 // pred_check_branch
      %249 = sbr.rel (0) target = $region109
    $region108: #{tpu_custom_call.1} parent=1 // pred_region
      %250 = dma.done [#allocation15], 128
    $region109: #{tpu_custom_call.1} parent=1 // pred_fallthru
      _
    // Predicated region
    $region110: #{tpu_custom_call.1} parent=1 // pred_check
      _
    $region111: #{tpu_custom_call.1} parent=1 // pred_check_branch
      %252 = sbr.rel (0) target = $region113
    $region112: #{tpu_custom_call.1} parent=1 // pred_region
      %253 = dma.done [#allocation18], 16
    $region113: #{tpu_custom_call.1} parent=1 // pred_fallthru
      _
    // Predicated region
    $region114: #{tpu_custom_call.1} parent=1 // pred_check
      _
    $region115: #{tpu_custom_call.1} parent=1 // pred_check_branch
      %255 = sbr.rel (0) target = $region117
    $region116: #{tpu_custom_call.1} parent=1 // pred_region
      %256 = dma.done [#allocation18], 128
    $region117: #{tpu_custom_call.1} parent=1 // pred_fallthru
      _
    // Predicated region
    $region118: #{tpu_custom_call.1} parent=1 // pred_check
      _
    $region119: #{tpu_custom_call.1} parent=1 // pred_check_branch
      %258 = sbr.rel (0) target = $region121
    $region120: #{tpu_custom_call.1} parent=1 // pred_region
      %259 = dma.done [#allocation21], 16
    $region121: #{tpu_custom_call.1} parent=1 // pred_fallthru
      _
    // Predicated region
    $region122: #{tpu_custom_call.1} parent=1 // pred_check
      _
    $region123: #{tpu_custom_call.1} parent=1 // pred_check_branch
      %261 = sbr.rel (0) target = $region125
    $region124: #{tpu_custom_call.1} parent=1 // pred_region
      %262 = dma.done [#allocation21], 6144
    $region125: #{tpu_custom_call.1} parent=1 // pred_fallthru
      _
    // Predicated region
    $region126: #{tpu_custom_call.1} parent=1 // pred_check
      _
    $region127: #{tpu_custom_call.1} parent=1 // pred_check_branch
      %264 = sbr.rel (0) target = $region129
    $region128: #{tpu_custom_call.1} parent=1 // pred_region
      %265 = dma.done [#allocation24], 16
    $region129: #{tpu_custom_call.1} parent=1 // pred_fallthru
      _
    // Predicated region
    $region130: #{tpu_custom_call.1} parent=1 // pred_check
      _
    $region131: #{tpu_custom_call.1} parent=1 // pred_check_branch
      %267 = sbr.rel (0) target = $region133
    $region132: #{tpu_custom_call.1} parent=1 // pred_region
      %268 = dma.done [#allocation24], 16
    $region133: #{tpu_custom_call.1} parent=1 // pred_fallthru
      _
    // Predicated region
    $region134: #{tpu_custom_call.1} parent=1 // pred_check
      _
    $region135: #{tpu_custom_call.1} parent=1 // pred_check_branch
      %270 = sbr.rel (0) target = $region137
    $region136: #{tpu_custom_call.1} parent=1 // pred_region
      %271 = dma.done [#allocation27], 16
    $region137: #{tpu_custom_call.1} parent=1 // pred_fallthru
      _
    // Predicated region
    $region138: #{tpu_custom_call.1} parent=1 // pred_check
      _
    $region139: #{tpu_custom_call.1} parent=1 // pred_check_branch
      %273 = sbr.rel (0) target = $region141
    $region140: #{tpu_custom_call.1} parent=1 // pred_region
      %274 = dma.done [#allocation27], 256
    $region141: #{tpu_custom_call.1} parent=1 // pred_fallthru
      _
    // Predicated region
    $region142: #{tpu_custom_call.1} parent=1 // pred_check
      _
    $region143: #{tpu_custom_call.1} parent=1 // pred_check_branch
      %276 = sbr.rel (0) target = $region145
    $region144: #{tpu_custom_call.1} parent=1 // pred_region
      %277 = dma.done [#allocation30], 16
    $region145: #{tpu_custom_call.1} parent=1 // pred_fallthru
      _
    %v278 = vld [vmem:[#allocation13] sm:$0xff]
    %v279 = vld [vmem:[#allocation13 + $0x8] sm:$0xff]
    %v280 = vld [vmem:[#allocation13 + $0x10] sm:$0xff]
    %v281 = vld [vmem:[#allocation13 + $0x18] sm:$0xff]
    %v282 = vld [vmem:[#allocation13 + $0x20] sm:$0xff]
    %v283 = vld [vmem:[#allocation13 + $0x28] sm:$0xff]
    %v284 = vld [vmem:[#allocation13 + $0x30] sm:$0xff]
    %v285 = vld [vmem:[#allocation13 + $0x38] sm:$0xff]
    %v286 = vld [vmem:[#allocation13 + $0x40] sm:$0xff]
    %v287 = vld [vmem:[#allocation13 + $0x48] sm:$0xff]
    %v288 = vld [vmem:[#allocation13 + $0x50] sm:$0xff]
    %v289 = vld [vmem:[#allocation13 + $0x58] sm:$0xff]
    %v290 = vld [vmem:[#allocation13 + $0x60] sm:$0xff]
    %v291 = vld [vmem:[#allocation13 + $0x68] sm:$0xff]
    %v292 = vld [vmem:[#allocation13 + $0x70] sm:$0xff]
    %v293 = vld [vmem:[#allocation13 + $0x78] sm:$0xff]
    %v294 = vld [vmem:[#allocation14] sm:$0xff]
    %v295 = vlaneseq
    %v296 = vand.u32 %v295, 127
    %v297 = vlaneseq
    %v298 = vshrl.u32 %v297, 7
    %v299 = vmul.u32 %v298, 16
    %vm300 = vcmp.ge.s32.totalorder %v296, %v299
    %v301 = vadd.s32 %v298, 1
    %v302 = vmul.u32 %v301, 16
    %vm303 = vcmp.lt.s32.totalorder %v296, %v302
    %vm304 = vmand %vm300, %vm303
    %v305 = vsel %vm304, 1.0, 0.0
    %v306 = vld [vmem:[#allocation2] sm:$0xff]
    %v307 = vld [vmem:[#allocation2 + $0x8] sm:$0xff]
    %v308 = vld [vmem:[#allocation2 + $0x10] sm:$0xff]
    %v309 = vld [vmem:[#allocation2 + $0x18] sm:$0xff]
    %v310 = vld [vmem:[#allocation7] sm:$0xff]
    %v311 = vld [vmem:[#allocation7 + $0x8] sm:$0xf]
    %v312 = vld [vmem:[#allocation8] sm:$0x1]
    %v314 = vlaneseq
    %v315 = vshrl.u32 %v314, 7
    %v316 = vsub.s32 0, %v315
    %v317 = vrot.slane %v312, %v316
    %vm319 = vcmask 97280
    %v321 = vsel %vm319, %v306, 0
    %v324 = vsel %vm319, %v307, 0
    %v327 = vsel %vm319, %v308, 0
    %v330 = vsel %vm319, %v309, 0
    %vm332 = vcmask 1043456
    %v334 = vsel %vm332, %v311, 0
    %336 = vmatprep.subr.mxu0 0.0
    %337 = vmatpush1.msra.mxu0 %v310
    %338 = vmatprep.subr.mxu0 0.0
    %339 = vmatpush1.msra.mxu0 %v334
    %340 = vmatprep.subr.mxu0 0.0
    %341 = vmatpush1.msra.mxu0 0.0
    %342 = vmatprep.subr.mxu0 0.0
    %343 = vmatpush1.msra.mxu0 0.0
    %344 = vmatprep.subr.mxu0 0.0
    %345 = vmatpush1.msra.mxu0 0.0
    %346 = vmatprep.subr.mxu0 0.0
    %347 = vmatpush1.msra.mxu0 0.0
    %348 = vmatprep.subr.mxu0 0.0
    %349 = vmatpush1.msra.mxu0 0.0
    %350 = vmatprep.subr.mxu0 0.0
    %351 = vmatpush1.msra.mxu0 0.0
    %352 = vmatprep.subr.mxu0 0.0
    %353 = vmatpush1.msra.mxu0 0.0
    %354 = vmatprep.subr.mxu0 0.0
    %355 = vmatpush1.msra.mxu0 0.0
    %356 = vmatprep.subr.mxu0 0.0
    %357 = vmatpush1.msra.mxu0 0.0
    %358 = vmatprep.subr.mxu0 0.0
    %359 = vmatpush1.msra.mxu0 0.0
    %360 = vmatprep.subr.mxu0 0.0
    %361 = vmatpush1.msra.mxu0 0.0
    %362 = vmatprep.subr.mxu0 0.0
    %363 = vmatpush1.msra.mxu0 0.0
    %364 = vmatprep.subr.mxu0 0.0
    %365 = vmatpush1.msra.mxu0 0.0
    %366 = vmatprep.subr.mxu0 0.0
    %367 = vmatpush1.msra.mxu0 0.0
    %368 = vmatprep.subr.mxu0 0.0
    %369 = vmatpush1.msra.mxu0 0.0
    %370 = vmatprep.subr.mxu0 0.0
    %371 = vmatpush1.msra.mxu0 0.0
    %372 = vmatprep.subr.mxu0 0.0
    %373 = vmatpush1.msra.mxu0 0.0
    %374 = vmatprep.subr.mxu0 0.0
    %375 = vmatpush1.msra.mxu0 0.0
    %376 = vmatprep.subr.mxu0 0.0
    %377 = vmatpush1.msra.mxu0 0.0
    %378 = vmatprep.subr.mxu0 0.0
    %379 = vmatpush1.msra.mxu0 0.0
    %380 = vmatprep.subr.mxu0 0.0
    %381 = vmatpush1.msra.mxu0 0.0
    %382 = vmatprep.subr.mxu0 0.0
    %383 = vmatpush1.msra.mxu0 0.0
    %384 = vmatprep.subr.mxu0 0.0
    %385 = vmatpush1.msra.mxu0 0.0
    %386 = vmatprep.subr.mxu0 0.0
    %387 = vmatpush1.msra.mxu0 0.0
    %388 = vmatprep.subr.mxu0 0.0
    %389 = vmatpush1.msra.mxu0 0.0
    %390 = vmatprep.subr.mxu0 0.0
    %391 = vmatpush1.msra.mxu0 0.0
    %392 = vmatprep.subr.mxu0 0.0
    %393 = vmatpush1.msra.mxu0 0.0
    %394 = vmatprep.subr.mxu0 0.0
    %395 = vmatpush1.msra.mxu0 0.0
    %396 = vmatprep.subr.mxu0 0.0
    %397 = vmatpush1.msra.mxu0 0.0
    %398 = vmatprep.subr.mxu0 0.0
    %399 = vmatpush1.msra.mxu0 0.0
    %400 = vmatprep.mubr.f32.mxu0 0.0
    %401 = vmatmul.mubr.f32.gmra.mrb[0].mxu0 %v321
    %v402 = vpop.f32.mrb[0].mxu0
    %v403 = vadd.f32 %v317, %v402
    %v404 = vpop.f32.mrb[0].mxu0
    %405 = vmatprep.mubr.f32.mxu0 0.0
    %406 = vmatmul.mubr.f32.gmra.mrb[0].mxu0 %v324
    %v407 = vpop.f32.mrb[0].mxu0
    %v408 = vadd.f32 %v317, %v407
    %v409 = vpop.f32.mrb[0].mxu0
    %410 = vmatprep.mubr.f32.mxu0 0.0
    %411 = vmatmul.mubr.f32.gmra.mrb[0].mxu0 %v327
    %v412 = vpop.f32.mrb[0].mxu0
    %v413 = vadd.f32 %v317, %v412
    %v414 = vpop.f32.mrb[0].mxu0
    %415 = vmatprep.mubr.f32.mxu0 0.0
    %416 = vmatmul.mubr.f32.gmra.mrb[0].mxu0 %v330
    %v417 = vpop.f32.mrb[0].mxu0
    %v418 = vadd.f32 %v317, %v417
    %v419 = vpop.f32.mrb[0].mxu0
    %420 = vdwg.mxu0
    %v421 = vld [vmem:[#allocation10] sm:$0x1]
    %v422 = vld [vmem:[#allocation11] sm:$0x1]
    %423 = vmatprep.subr.mxu0 0.0
    %424 = vmatpush1.msra.mxu0 %v278
    %425 = vmatprep.subr.mxu0 0.0
    %426 = vmatpush1.msra.mxu0 %v279
    %427 = vmatprep.subr.mxu0 0.0
    %428 = vmatpush1.msra.mxu0 %v280
    %429 = vmatprep.subr.mxu0 0.0
    %430 = vmatpush1.msra.mxu0 %v281
    %431 = vmatprep.subr.mxu0 0.0
    %432 = vmatpush1.msra.mxu0 %v282
    %433 = vmatprep.subr.mxu0 0.0
    %434 = vmatpush1.msra.mxu0 %v283
    %435 = vmatprep.subr.mxu0 0.0
    %436 = vmatpush1.msra.mxu0 %v284
    %437 = vmatprep.subr.mxu0 0.0
    %438 = vmatpush1.msra.mxu0 %v285
    %439 = vmatprep.subr.mxu0 0.0
    %440 = vmatpush1.msra.mxu0 %v286
    %441 = vmatprep.subr.mxu0 0.0
    %442 = vmatpush1.msra.mxu0 %v287
    %443 = vmatprep.subr.mxu0 0.0
    %444 = vmatpush1.msra.mxu0 %v288
    %445 = vmatprep.subr.mxu0 0.0
    %446 = vmatpush1.msra.mxu0 %v289
    %447 = vmatprep.subr.mxu0 0.0
    %448 = vmatpush1.msra.mxu0 %v290
    %449 = vmatprep.subr.mxu0 0.0
    %450 = vmatpush1.msra.mxu0 %v291
    %451 = vmatprep.subr.mxu0 0.0
    %452 = vmatpush1.msra.mxu0 %v292
    %453 = vmatprep.subr.mxu0 0.0
    %454 = vmatpush1.msra.mxu0 %v293
    %455 = vmatprep.subr.mxu0 0.0
    %456 = vmatpush1.msra.mxu0 0.0
    %457 = vmatprep.subr.mxu0 0.0
    %458 = vmatpush1.msra.mxu0 0.0
    %459 = vmatprep.subr.mxu0 0.0
    %460 = vmatpush1.msra.mxu0 0.0
    %461 = vmatprep.subr.mxu0 0.0
    %462 = vmatpush1.msra.mxu0 0.0
    %463 = vmatprep.subr.mxu0 0.0
    %464 = vmatpush1.msra.mxu0 0.0
    %465 = vmatprep.subr.mxu0 0.0
    %466 = vmatpush1.msra.mxu0 0.0
    %467 = vmatprep.subr.mxu0 0.0
    %468 = vmatpush1.msra.mxu0 0.0
    %469 = vmatprep.subr.mxu0 0.0
    %470 = vmatpush1.msra.mxu0 0.0
    %471 = vmatprep.subr.mxu0 0.0
    %472 = vmatpush1.msra.mxu0 0.0
    %473 = vmatprep.subr.mxu0 0.0
    %474 = vmatpush1.msra.mxu0 0.0
    %475 = vmatprep.subr.mxu0 0.0
    %476 = vmatpush1.msra.mxu0 0.0
    %477 = vmatprep.subr.mxu0 0.0
    %478 = vmatpush1.msra.mxu0 0.0
    %479 = vmatprep.subr.mxu0 0.0
    %480 = vmatpush1.msra.mxu0 0.0
    %481 = vmatprep.subr.mxu0 0.0
    %482 = vmatpush1.msra.mxu0 0.0
    %483 = vmatprep.subr.mxu0 0.0
    %484 = vmatpush1.msra.mxu0 0.0
    %485 = vmatprep.subr.mxu0 0.0
    %486 = vmatpush1.msra.mxu0 0.0
    %487 = vmatprep.mubr.f32.mxu0 0.0
    %488 = vmatmul.mubr.f32.gmra.mrb[0].mxu0 %v403
    %v489 = vpop.f32.mrb[0].mxu0
    %v490 = vadd.f32 0.0, %v489
    %v491 = vpop.f32.mrb[0].mxu0
    %492 = vmatprep.mubr.f32.mxu0 0.0
    %493 = vmatmul.mubr.f32.gmra.mrb[0].mxu0 %v408
    %v494 = vpop.f32.mrb[0].mxu0
    %v495 = vadd.f32 0.0, %v494
    %v496 = vpop.f32.mrb[0].mxu0
    %497 = vmatprep.mubr.f32.mxu0 0.0
    %498 = vmatmul.mubr.f32.gmra.mrb[0].mxu0 %v413
    %v499 = vpop.f32.mrb[0].mxu0
    %v500 = vadd.f32 0.0, %v499
    %v501 = vpop.f32.mrb[0].mxu0
    %502 = vmatprep.mubr.f32.mxu0 0.0
    %503 = vmatmul.mubr.f32.gmra.mrb[0].mxu0 %v418
    %v504 = vpop.f32.mrb[0].mxu0
    %v505 = vadd.f32 0.0, %v504
    %v506 = vpop.f32.mrb[0].mxu0
    %507 = vdwg.mxu0
    %v508 = vmul.f32 %v403, %v403
    %v509 = vmul.f32 %v408, %v408
    %v510 = vmul.f32 %v413, %v413
    %v511 = vmul.f32 %v418, %v418
    %512 = vmatprep.subr.mxu0 0.0
    %513 = vmatpush1.msra.mxu0 %v278
    %514 = vmatprep.subr.mxu0 0.0
    %515 = vmatpush1.msra.mxu0 %v279
    %516 = vmatprep.subr.mxu0 0.0
    %517 = vmatpush1.msra.mxu0 %v280
    %518 = vmatprep.subr.mxu0 0.0
    %519 = vmatpush1.msra.mxu0 %v281
    %520 = vmatprep.subr.mxu0 0.0
    %521 = vmatpush1.msra.mxu0 %v282
    %522 = vmatprep.subr.mxu0 0.0
    %523 = vmatpush1.msra.mxu0 %v283
    %524 = vmatprep.subr.mxu0 0.0
    %525 = vmatpush1.msra.mxu0 %v284
    %526 = vmatprep.subr.mxu0 0.0
    %527 = vmatpush1.msra.mxu0 %v285
    %528 = vmatprep.subr.mxu0 0.0
    %529 = vmatpush1.msra.mxu0 %v286
    %530 = vmatprep.subr.mxu0 0.0
    %531 = vmatpush1.msra.mxu0 %v287
    %532 = vmatprep.subr.mxu0 0.0
    %533 = vmatpush1.msra.mxu0 %v288
    %534 = vmatprep.subr.mxu0 0.0
    %535 = vmatpush1.msra.mxu0 %v289
    %536 = vmatprep.subr.mxu0 0.0
    %537 = vmatpush1.msra.mxu0 %v290
    %538 = vmatprep.subr.mxu0 0.0
    %539 = vmatpush1.msra.mxu0 %v291
    %540 = vmatprep.subr.mxu0 0.0
    %541 = vmatpush1.msra.mxu0 %v292
    %542 = vmatprep.subr.mxu0 0.0
    %543 = vmatpush1.msra.mxu0 %v293
    %544 = vmatprep.subr.mxu0 0.0
    %545 = vmatpush1.msra.mxu0 0.0
    %546 = vmatprep.subr.mxu0 0.0
    %547 = vmatpush1.msra.mxu0 0.0
    %548 = vmatprep.subr.mxu0 0.0
    %549 = vmatpush1.msra.mxu0 0.0
    %550 = vmatprep.subr.mxu0 0.0
    %551 = vmatpush1.msra.mxu0 0.0
    %552 = vmatprep.subr.mxu0 0.0
    %553 = vmatpush1.msra.mxu0 0.0
    %554 = vmatprep.subr.mxu0 0.0
    %555 = vmatpush1.msra.mxu0 0.0
    %556 = vmatprep.subr.mxu0 0.0
    %557 = vmatpush1.msra.mxu0 0.0
    %558 = vmatprep.subr.mxu0 0.0
    %559 = vmatpush1.msra.mxu0 0.0
    %560 = vmatprep.subr.mxu0 0.0
    %561 = vmatpush1.msra.mxu0 0.0
    %562 = vmatprep.subr.mxu0 0.0
    %563 = vmatpush1.msra.mxu0 0.0
    %564 = vmatprep.subr.mxu0 0.0
    %565 = vmatpush1.msra.mxu0 0.0
    %566 = vmatprep.subr.mxu0 0.0
    %567 = vmatpush1.msra.mxu0 0.0
    %568 = vmatprep.subr.mxu0 0.0
    %569 = vmatpush1.msra.mxu0 0.0
    %570 = vmatprep.subr.mxu0 0.0
    %571 = vmatpush1.msra.mxu0 0.0
    %572 = vmatprep.subr.mxu0 0.0
    %573 = vmatpush1.msra.mxu0 0.0
    %574 = vmatprep.subr.mxu0 0.0
    %575 = vmatpush1.msra.mxu0 0.0
    %576 = vmatprep.mubr.f32.mxu0 0.0
    %577 = vmatmul.mubr.f32.gmra.mrb[0].mxu0 %v508
    %v578 = vpop.f32.mrb[0].mxu0
    %v579 = vadd.f32 0.0, %v578
    %v580 = vpop.f32.mrb[0].mxu0
    %581 = vmatprep.mubr.f32.mxu0 0.0
    %582 = vmatmul.mubr.f32.gmra.mrb[0].mxu0 %v509
    %v583 = vpop.f32.mrb[0].mxu0
    %v584 = vadd.f32 0.0, %v583
    %v585 = vpop.f32.mrb[0].mxu0
    %586 = vmatprep.mubr.f32.mxu0 0.0
    %587 = vmatmul.mubr.f32.gmra.mrb[0].mxu0 %v510
    %v588 = vpop.f32.mrb[0].mxu0
    %v589 = vadd.f32 0.0, %v588
    %v590 = vpop.f32.mrb[0].mxu0
    %591 = vmatprep.mubr.f32.mxu0 0.0
    %592 = vmatmul.mubr.f32.gmra.mrb[0].mxu0 %v511
    %v593 = vpop.f32.mrb[0].mxu0
    %v594 = vadd.f32 0.0, %v593
    %v595 = vpop.f32.mrb[0].mxu0
    %596 = vdwg.mxu0
    %vm597 = vcmask 261120
    %v599 = vsel %vm597, %v305, 0
    %601 = vmatprep.subr.mxu0 0.0
    %602 = vmatpush1.msra.mxu0 %v490
    %603 = vmatprep.subr.mxu0 0.0
    %604 = vmatpush1.msra.mxu0 %v495
    %605 = vmatprep.subr.mxu0 0.0
    %606 = vmatpush1.msra.mxu0 %v500
    %607 = vmatprep.subr.mxu0 0.0
    %608 = vmatpush1.msra.mxu0 %v505
    %609 = vmatprep.subr.mxu0 0.0
    %610 = vmatpush1.msra.mxu0 0.0
    %611 = vmatprep.subr.mxu0 0.0
    %612 = vmatpush1.msra.mxu0 0.0
    %613 = vmatprep.subr.mxu0 0.0
    %614 = vmatpush1.msra.mxu0 0.0
    %615 = vmatprep.subr.mxu0 0.0
    %616 = vmatpush1.msra.mxu0 0.0
    %617 = vmatprep.subr.mxu0 0.0
    %618 = vmatpush1.msra.mxu0 0.0
    %619 = vmatprep.subr.mxu0 0.0
    %620 = vmatpush1.msra.mxu0 0.0
    %621 = vmatprep.subr.mxu0 0.0
    %622 = vmatpush1.msra.mxu0 0.0
    %623 = vmatprep.subr.mxu0 0.0
    %624 = vmatpush1.msra.mxu0 0.0
    %625 = vmatprep.subr.mxu0 0.0
    %626 = vmatpush1.msra.mxu0 0.0
    %627 = vmatprep.subr.mxu0 0.0
    %628 = vmatpush1.msra.mxu0 0.0
    %629 = vmatprep.subr.mxu0 0.0
    %630 = vmatpush1.msra.mxu0 0.0
    %631 = vmatprep.subr.mxu0 0.0
    %632 = vmatpush1.msra.mxu0 0.0
    %633 = vmatprep.subr.mxu0 0.0
    %634 = vmatpush1.msra.mxu0 0.0
    %635 = vmatprep.subr.mxu0 0.0
    %636 = vmatpush1.msra.mxu0 0.0
    %637 = vmatprep.subr.mxu0 0.0
    %638 = vmatpush1.msra.mxu0 0.0
    %639 = vmatprep.subr.mxu0 0.0
    %640 = vmatpush1.msra.mxu0 0.0
    %641 = vmatprep.subr.mxu0 0.0
    %642 = vmatpush1.msra.mxu0 0.0
    %643 = vmatprep.subr.mxu0 0.0
    %644 = vmatpush1.msra.mxu0 0.0
    %645 = vmatprep.subr.mxu0 0.0
    %646 = vmatpush1.msra.mxu0 0.0
    %647 = vmatprep.subr.mxu0 0.0
    %648 = vmatpush1.msra.mxu0 0.0
    %649 = vmatprep.subr.mxu0 0.0
    %650 = vmatpush1.msra.mxu0 0.0
    %651 = vmatprep.subr.mxu0 0.0
    %652 = vmatpush1.msra.mxu0 0.0
    %653 = vmatprep.subr.mxu0 0.0
    %654 = vmatpush1.msra.mxu0 0.0
    %655 = vmatprep.subr.mxu0 0.0
    %656 = vmatpush1.msra.mxu0 0.0
    %657 = vmatprep.subr.mxu0 0.0
    %658 = vmatpush1.msra.mxu0 0.0
    %659 = vmatprep.subr.mxu0 0.0
    %660 = vmatpush1.msra.mxu0 0.0
    %661 = vmatprep.subr.mxu0 0.0
    %662 = vmatpush1.msra.mxu0 0.0
    %663 = vmatprep.subr.mxu0 0.0
    %664 = vmatpush1.msra.mxu0 0.0
    %665 = vmatprep.mubr.f32.mxu0 0.0
    %666 = vmatmul.mubr.f32.gmra.mrb[0].mxu0 %v599
    %v667 = vpop.f32.mrb[0].mxu0
    %v668 = vadd.f32 0.0, %v667
    %v669 = vpop.f32.mrb[0].mxu0
    %670 = vdwg.mxu0
    %v671 = vmul.f32 %v668, 0.015625
    %672 = vmatprep.subr.mxu0 0.0
    %673 = vmatpush1.msra.mxu0 %v579
    %674 = vmatprep.subr.mxu0 0.0
    %675 = vmatpush1.msra.mxu0 %v584
    %676 = vmatprep.subr.mxu0 0.0
    %677 = vmatpush1.msra.mxu0 %v589
    %678 = vmatprep.subr.mxu0 0.0
    %679 = vmatpush1.msra.mxu0 %v594
    %680 = vmatprep.subr.mxu0 0.0
    %681 = vmatpush1.msra.mxu0 0.0
    %682 = vmatprep.subr.mxu0 0.0
    %683 = vmatpush1.msra.mxu0 0.0
    %684 = vmatprep.subr.mxu0 0.0
    %685 = vmatpush1.msra.mxu0 0.0
    %686 = vmatprep.subr.mxu0 0.0
    %687 = vmatpush1.msra.mxu0 0.0
    %688 = vmatprep.subr.mxu0 0.0
    %689 = vmatpush1.msra.mxu0 0.0
    %690 = vmatprep.subr.mxu0 0.0
    %691 = vmatpush1.msra.mxu0 0.0
    %692 = vmatprep.subr.mxu0 0.0
    %693 = vmatpush1.msra.mxu0 0.0
    %694 = vmatprep.subr.mxu0 0.0
    %695 = vmatpush1.msra.mxu0 0.0
    %696 = vmatprep.subr.mxu0 0.0
    %697 = vmatpush1.msra.mxu0 0.0
    %698 = vmatprep.subr.mxu0 0.0
    %699 = vmatpush1.msra.mxu0 0.0
    %700 = vmatprep.subr.mxu0 0.0
    %701 = vmatpush1.msra.mxu0 0.0
    %702 = vmatprep.subr.mxu0 0.0
    %703 = vmatpush1.msra.mxu0 0.0
    %704 = vmatprep.subr.mxu0 0.0
    %705 = vmatpush1.msra.mxu0 0.0
    %706 = vmatprep.subr.mxu0 0.0
    %707 = vmatpush1.msra.mxu0 0.0
    %708 = vmatprep.subr.mxu0 0.0
    %709 = vmatpush1.msra.mxu0 0.0
    %710 = vmatprep.subr.mxu0 0.0
    %711 = vmatpush1.msra.mxu0 0.0
    %712 = vmatprep.subr.mxu0 0.0
    %713 = vmatpush1.msra.mxu0 0.0
    %714 = vmatprep.subr.mxu0 0.0
    %715 = vmatpush1.msra.mxu0 0.0
    %716 = vmatprep.subr.mxu0 0.0
    %717 = vmatpush1.msra.mxu0 0.0
    %718 = vmatprep.subr.mxu0 0.0
    %719 = vmatpush1.msra.mxu0 0.0
    %720 = vmatprep.subr.mxu0 0.0
    %721 = vmatpush1.msra.mxu0 0.0
    %722 = vmatprep.subr.mxu0 0.0
    %723 = vmatpush1.msra.mxu0 0.0
    %724 = vmatprep.subr.mxu0 0.0
    %725 = vmatpush1.msra.mxu0 0.0
    %726 = vmatprep.subr.mxu0 0.0
    %727 = vmatpush1.msra.mxu0 0.0
    %728 = vmatprep.subr.mxu0 0.0
    %729 = vmatpush1.msra.mxu0 0.0
    %730 = vmatprep.subr.mxu0 0.0
    %731 = vmatpush1.msra.mxu0 0.0
    %732 = vmatprep.subr.mxu0 0.0
    %733 = vmatpush1.msra.mxu0 0.0
    %734 = vmatprep.subr.mxu0 0.0
    %735 = vmatpush1.msra.mxu0 0.0
    %736 = vmatprep.mubr.f32.mxu0 0.0
    %737 = vmatmul.mubr.f32.gmra.mrb[0].mxu0 %v599
    %v738 = vpop.f32.mrb[0].mxu0
    %v739 = vadd.f32 0.0, %v738
    %v740 = vpop.f32.mrb[0].mxu0
    %741 = vdwg.mxu0
    %v742 = vmul.f32 %v739, 0.015625
    %v743 = vmul.f32 %v671, %v671
    %v744 = vsub.f32 %v742, %v743
    %v745 = vadd.f32 %v744, 1e-05
    %v746 = vrsqrt.pop %v745
    %vm747 = vcmask 64512
    %v749 = vsel %vm747, %v746, 0
    %751 = vmatprep.subr.mxu0 0.0
    %752 = vmatpush1.msra.mxu0 %v294
    %753 = vmatprep.subr.mxu0 0.0
    %754 = vmatpush1.msra.mxu0 0.0
    %755 = vmatprep.subr.mxu0 0.0
    %756 = vmatpush1.msra.mxu0 0.0
    %757 = vmatprep.subr.mxu0 0.0
    %758 = vmatpush1.msra.mxu0 0.0
    %759 = vmatprep.subr.mxu0 0.0
    %760 = vmatpush1.msra.mxu0 0.0
    %761 = vmatprep.subr.mxu0 0.0
    %762 = vmatpush1.msra.mxu0 0.0
    %763 = vmatprep.subr.mxu0 0.0
    %764 = vmatpush1.msra.mxu0 0.0
    %765 = vmatprep.subr.mxu0 0.0
    %766 = vmatpush1.msra.mxu0 0.0
    %767 = vmatprep.subr.mxu0 0.0
    %768 = vmatpush1.msra.mxu0 0.0
    %769 = vmatprep.subr.mxu0 0.0
    %770 = vmatpush1.msra.mxu0 0.0
    %771 = vmatprep.subr.mxu0 0.0
    %772 = vmatpush1.msra.mxu0 0.0
    %773 = vmatprep.subr.mxu0 0.0
    %774 = vmatpush1.msra.mxu0 0.0
    %775 = vmatprep.subr.mxu0 0.0
    %776 = vmatpush1.msra.mxu0 0.0
    %777 = vmatprep.subr.mxu0 0.0
    %778 = vmatpush1.msra.mxu0 0.0
    %779 = vmatprep.subr.mxu0 0.0
    %780 = vmatpush1.msra.mxu0 0.0
    %781 = vmatprep.subr.mxu0 0.0
    %782 = vmatpush1.msra.mxu0 0.0
    %783 = vmatprep.subr.mxu0 0.0
    %784 = vmatpush1.msra.mxu0 0.0
    %785 = vmatprep.subr.mxu0 0.0
    %786 = vmatpush1.msra.mxu0 0.0
    %787 = vmatprep.subr.mxu0 0.0
    %788 = vmatpush1.msra.mxu0 0.0
    %789 = vmatprep.subr.mxu0 0.0
    %790 = vmatpush1.msra.mxu0 0.0
    %791 = vmatprep.subr.mxu0 0.0
    %792 = vmatpush1.msra.mxu0 0.0
    %793 = vmatprep.subr.mxu0 0.0
    %794 = vmatpush1.msra.mxu0 0.0
    %795 = vmatprep.subr.mxu0 0.0
    %796 = vmatpush1.msra.mxu0 0.0
    %797 = vmatprep.subr.mxu0 0.0
    %798 = vmatpush1.msra.mxu0 0.0
    %799 = vmatprep.subr.mxu0 0.0
    %800 = vmatpush1.msra.mxu0 0.0
    %801 = vmatprep.subr.mxu0 0.0
    %802 = vmatpush1.msra.mxu0 0.0
    %803 = vmatprep.subr.mxu0 0.0
    %804 = vmatpush1.msra.mxu0 0.0
    %805 = vmatprep.subr.mxu0 0.0
    %806 = vmatpush1.msra.mxu0 0.0
    %807 = vmatprep.subr.mxu0 0.0
    %808 = vmatpush1.msra.mxu0 0.0
    %809 = vmatprep.subr.mxu0 0.0
    %810 = vmatpush1.msra.mxu0 0.0
    %811 = vmatprep.subr.mxu0 0.0
    %812 = vmatpush1.msra.mxu0 0.0
    %813 = vmatprep.subr.mxu0 0.0
    %814 = vmatpush1.msra.mxu0 0.0
    %815 = vmatprep.mubr.f32.mxu0 0.0
    %816 = vmatmul.mubr.f32.gmra.mrb[0].mxu0 %v749
    %v817 = vpop.f32.mrb[0].mxu0
    %v818 = vadd.f32 0.0, %v817
    %v819 = vpop.f32.mrb[0].mxu0
    %820 = vdwg.mxu0
    %v822 = vlaneseq
    %v823 = vshrl.u32 %v822, 7
    %v824 = vsub.s32 0, %v823
    %v825 = vrot.slane %v421, %v824
    %v827 = vmul.f32 %v818, %v825
    %v828 = vmul.f32 %v671, %v746
    %v830 = vsel %vm747, %v828, 0
    %832 = vmatprep.subr.mxu0 0.0
    %833 = vmatpush1.msra.mxu0 %v294
    %834 = vmatprep.subr.mxu0 0.0
    %835 = vmatpush1.msra.mxu0 0.0
    %836 = vmatprep.subr.mxu0 0.0
    %837 = vmatpush1.msra.mxu0 0.0
    %838 = vmatprep.subr.mxu0 0.0
    %839 = vmatpush1.msra.mxu0 0.0
    %840 = vmatprep.subr.mxu0 0.0
    %841 = vmatpush1.msra.mxu0 0.0
    %842 = vmatprep.subr.mxu0 0.0
    %843 = vmatpush1.msra.mxu0 0.0
    %844 = vmatprep.subr.mxu0 0.0
    %845 = vmatpush1.msra.mxu0 0.0
    %846 = vmatprep.subr.mxu0 0.0
    %847 = vmatpush1.msra.mxu0 0.0
    %848 = vmatprep.subr.mxu0 0.0
    %849 = vmatpush1.msra.mxu0 0.0
    %850 = vmatprep.subr.mxu0 0.0
    %851 = vmatpush1.msra.mxu0 0.0
    %852 = vmatprep.subr.mxu0 0.0
    %853 = vmatpush1.msra.mxu0 0.0
    %854 = vmatprep.subr.mxu0 0.0
    %855 = vmatpush1.msra.mxu0 0.0
    %856 = vmatprep.subr.mxu0 0.0
    %857 = vmatpush1.msra.mxu0 0.0
    %858 = vmatprep.subr.mxu0 0.0
    %859 = vmatpush1.msra.mxu0 0.0
    %860 = vmatprep.subr.mxu0 0.0
    %861 = vmatpush1.msra.mxu0 0.0
    %862 = vmatprep.subr.mxu0 0.0
    %863 = vmatpush1.msra.mxu0 0.0
    %864 = vmatprep.subr.mxu0 0.0
    %865 = vmatpush1.msra.mxu0 0.0
    %866 = vmatprep.subr.mxu0 0.0
    %867 = vmatpush1.msra.mxu0 0.0
    %868 = vmatprep.subr.mxu0 0.0
    %869 = vmatpush1.msra.mxu0 0.0
    %870 = vmatprep.subr.mxu0 0.0
    %871 = vmatpush1.msra.mxu0 0.0
    %872 = vmatprep.subr.mxu0 0.0
    %873 = vmatpush1.msra.mxu0 0.0
    %874 = vmatprep.subr.mxu0 0.0
    %875 = vmatpush1.msra.mxu0 0.0
    %876 = vmatprep.subr.mxu0 0.0
    %877 = vmatpush1.msra.mxu0 0.0
    %878 = vmatprep.subr.mxu0 0.0
    %879 = vmatpush1.msra.mxu0 0.0
    %880 = vmatprep.subr.mxu0 0.0
    %881 = vmatpush1.msra.mxu0 0.0
    %882 = vmatprep.subr.mxu0 0.0
    %883 = vmatpush1.msra.mxu0 0.0
    %884 = vmatprep.subr.mxu0 0.0
    %885 = vmatpush1.msra.mxu0 0.0
    %886 = vmatprep.subr.mxu0 0.0
    %887 = vmatpush1.msra.mxu0 0.0
    %888 = vmatprep.subr.mxu0 0.0
    %889 = vmatpush1.msra.mxu0 0.0
    %890 = vmatprep.subr.mxu0 0.0
    %891 = vmatpush1.msra.mxu0 0.0
    %892 = vmatprep.subr.mxu0 0.0
    %893 = vmatpush1.msra.mxu0 0.0
    %894 = vmatprep.subr.mxu0 0.0
    %895 = vmatpush1.msra.mxu0 0.0
    %896 = vmatprep.mubr.f32.mxu0 0.0
    %897 = vmatmul.mubr.f32.gmra.mrb[0].mxu0 %v830
    %v898 = vpop.f32.mrb[0].mxu0
    %v899 = vadd.f32 0.0, %v898
    %v900 = vpop.f32.mrb[0].mxu0
    %901 = vdwg.mxu0
    %v902 = vmul.f32 %v899, %v825
    %v904 = vlaneseq
    %v905 = vshrl.u32 %v904, 7
    %v906 = vsub.s32 0, %v905
    %v907 = vrot.slane %v422, %v906
    %v909 = vsub.f32 %v907, %v902
    %v912 = vunpack.c.l.s4 1966171168
    %v913 = vunpack.c.0.s8 %v912
    %v914 = vlaneseq
    %v915 = vshrl.u32 %v914, 7
    %v916 = vsub.s32 %v913, %v915
    %v917 = vrot.slane %v827, %v916
    %v918 = vcombine.high %v917, %v917
    %v920 = vunpack.c.l.s4 1966171168
    %v921 = vunpack.c.0.s8 %v920
    %v922 = vlaneseq
    %v923 = vshrl.u32 %v922, 7
    %v924 = vsub.s32 %v921, %v923
    %v925 = vrot.slane %v917, %v924
    %v927 = vunpack.c.l.s4 1966171168
    %v928 = vunpack.c.0.s8 %v927
    %v929 = vlaneseq
    %v930 = vshrl.u32 %v929, 7
    %v931 = vsub.s32 %v928, %v930
    %v932 = vrot.slane %v918, %v931
    %v933 = vlaneseq
    %v934 = vshrl.u32 %v933, 7
    %v935 = vsub.s32 0, %v934
    %v936 = vrot.slane %v925, %v935
    %v937 = vlaneseq
    %v938 = vshrl.u32 %v937, 7
    %v939 = vsub.s32 0, %v938
    %v940 = vrot.slane %v932, %v939
    %v943 = vmul.f32 %v403, %v936
    %v944 = vmul.f32 %v408, %v936
    %v945 = vmul.f32 %v413, %v940
    %v946 = vmul.f32 %v418, %v940
    %v949 = vunpack.c.l.s4 1966171168
    %v950 = vunpack.c.0.s8 %v949
    %v951 = vlaneseq
    %v952 = vshrl.u32 %v951, 7
    %v953 = vsub.s32 %v950, %v952
    %v954 = vrot.slane %v909, %v953
    %v955 = vcombine.high %v954, %v954
    %v957 = vunpack.c.l.s4 1966171168
    %v958 = vunpack.c.0.s8 %v957
    %v959 = vlaneseq
    %v960 = vshrl.u32 %v959, 7
    %v961 = vsub.s32 %v958, %v960
    %v962 = vrot.slane %v954, %v961
    %v964 = vunpack.c.l.s4 1966171168
    %v965 = vunpack.c.0.s8 %v964
    %v966 = vlaneseq
    %v967 = vshrl.u32 %v966, 7
    %v968 = vsub.s32 %v965, %v967
    %v969 = vrot.slane %v955, %v968
    %v970 = vlaneseq
    %v971 = vshrl.u32 %v970, 7
    %v972 = vsub.s32 0, %v971
    %v973 = vrot.slane %v962, %v972
    %v974 = vlaneseq
    %v975 = vshrl.u32 %v974, 7
    %v976 = vsub.s32 0, %v975
    %v977 = vrot.slane %v969, %v976
    %v980 = vadd.f32 %v943, %v973
    %v981 = vadd.f32 %v944, %v973
    %v982 = vadd.f32 %v945, %v977
    %v983 = vadd.f32 %v946, %v977
    %v984 = vand.u32 2147483647, %v980
    %v985 = vand.u32 2147483647, %v981
    %v986 = vand.u32 2147483647, %v982
    %v987 = vand.u32 2147483647, %v983
    %v988 = vsub.f32 0.0, %v984
    %v989 = vsub.f32 0.0, %v985
    %v990 = vsub.f32 0.0, %v986
    %v991 = vsub.f32 0.0, %v987
    %v992 = vmul.f32 %v988, 1.442695
    %v993 = vpow.pop %v992
    %v994 = vmul.f32 %v989, 1.442695
    %v995 = vpow.pop %v994
    %v996 = vmul.f32 %v990, 1.442695
    %v997 = vpow.pop %v996
    %v998 = vmul.f32 %v991, 1.442695
    %v999 = vpow.pop %v998
    %v1000 = vmul.f32 %v993, %v993
    %v1001 = vmul.f32 %v995, %v995
    %v1002 = vmul.f32 %v997, %v997
    %v1003 = vmul.f32 %v999, %v999
    %vm1004 = vcmp.ge.f32.partialorder %v980, 0.0
    %vm1005 = vcmp.ge.f32.partialorder %v981, 0.0
    %vm1006 = vcmp.ge.f32.partialorder %v982, 0.0
    %vm1007 = vcmp.ge.f32.partialorder %v983, 0.0
    %v1008 = vmul.f32 %v993, 2.0
    %v1009 = vmul.f32 %v995, 2.0
    %v1010 = vmul.f32 %v997, 2.0
    %v1011 = vmul.f32 %v999, 2.0
    %v1012 = vadd.f32 %v1008, 1.0
    %v1013 = vadd.f32 %v1009, 1.0
    %v1014 = vadd.f32 %v1010, 1.0
    %v1015 = vadd.f32 %v1011, 1.0
    %v1016 = vadd.f32 %v1000, %v1008
    %v1017 = vadd.f32 %v1001, %v1009
    %v1018 = vadd.f32 %v1002, %v1010
    %v1019 = vadd.f32 %v1003, %v1011
    %v1020 = vsel %vm1004, %v1012, %v1016
    %v1021 = vsel %vm1005, %v1013, %v1017
    %v1022 = vsel %vm1006, %v1014, %v1018
    %v1023 = vsel %vm1007, %v1015, %v1019
    %v1024 = vmul.f32 %v1000, 2.0
    %v1025 = vmul.f32 %v1001, 2.0
    %v1026 = vmul.f32 %v1002, 2.0
    %v1027 = vmul.f32 %v1003, 2.0
    %v1028 = vadd.f32 %v1012, %v1024
    %v1029 = vadd.f32 %v1013, %v1025
    %v1030 = vadd.f32 %v1014, %v1026
    %v1031 = vadd.f32 %v1015, %v1027
    %v1032 = vadd.f32 %v1016, 2.0
    %v1033 = vadd.f32 %v1017, 2.0
    %v1034 = vadd.f32 %v1018, 2.0
    %v1035 = vadd.f32 %v1019, 2.0
    %v1036 = vsel %vm1004, %v1028, %v1032
    %v1037 = vsel %vm1005, %v1029, %v1033
    %v1038 = vsel %vm1006, %v1030, %v1034
    %v1039 = vsel %vm1007, %v1031, %v1035
    %v1040 = vmul.f32 %v980, %v1020
    %v1041 = vmul.f32 %v981, %v1021
    %v1042 = vmul.f32 %v982, %v1022
    %v1043 = vmul.f32 %v983, %v1023
    %v1044 = vrcp.pop %v1036
    %v1045 = vmul.f32 %v1040, %v1044
    %v1046 = vrcp.pop %v1037
    %v1047 = vmul.f32 %v1041, %v1046
    %v1048 = vrcp.pop %v1038
    %v1049 = vmul.f32 %v1042, %v1048
    %v1050 = vrcp.pop %v1039
    %v1051 = vmul.f32 %v1043, %v1050
    %v1052 = vld [vmem:[#allocation5] sm:$0x3]
    %v1053 = vand.u32 2147483647, %v1052
    %v1054 = vsub.f32 0.0, %v1053
    %v1055 = vmul.f32 %v1054, 1.442695
    %v1056 = vpow.pop %v1055
    %v1057 = vmul.f32 %v1056, %v1056
    %vm1058 = vcmp.ge.f32.partialorder %v1052, 0.0
    %v1059 = vmul.f32 %v1056, 2.0
    %v1060 = vadd.f32 %v1059, 1.0
    %v1061 = vadd.f32 %v1057, %v1059
    %v1062 = vsel %vm1058, %v1060, %v1061
    %v1063 = vmul.f32 %v1057, 2.0
    %v1064 = vadd.f32 %v1060, %v1063
    %v1065 = vadd.f32 %v1061, 2.0
    %v1066 = vsel %vm1058, %v1064, %v1065
    %v1067 = vmul.f32 %v1052, %v1062
    %v1068 = vrcp.pop %v1066
    %v1069 = vmul.f32 %v1067, %v1068
    %v1070 = vld [vmem:[#allocation16] sm:$0xff]
    %v1071 = vld [vmem:[#allocation17] sm:$0x1]
    %v1073 = vlaneseq
    %v1074 = vshrl.u32 %v1073, 7
    %v1075 = vsub.s32 0, %v1074
    %v1076 = vrot.slane %v1071, %v1075
    %v1079 = vsel %vm747, %v1069, 0
    %1081 = vmatprep.subr.mxu0 0.0
    %1082 = vmatpush1.msra.mxu0 %v1070
    %1083 = vmatprep.subr.mxu0 0.0
    %1084 = vmatpush1.msra.mxu0 0.0
    %1085 = vmatprep.subr.mxu0 0.0
    %1086 = vmatpush1.msra.mxu0 0.0
    %1087 = vmatprep.subr.mxu0 0.0
    %1088 = vmatpush1.msra.mxu0 0.0
    %1089 = vmatprep.subr.mxu0 0.0
    %1090 = vmatpush1.msra.mxu0 0.0
    %1091 = vmatprep.subr.mxu0 0.0
    %1092 = vmatpush1.msra.mxu0 0.0
    %1093 = vmatprep.subr.mxu0 0.0
    %1094 = vmatpush1.msra.mxu0 0.0
    %1095 = vmatprep.subr.mxu0 0.0
    %1096 = vmatpush1.msra.mxu0 0.0
    %1097 = vmatprep.subr.mxu0 0.0
    %1098 = vmatpush1.msra.mxu0 0.0
    %1099 = vmatprep.subr.mxu0 0.0
    %1100 = vmatpush1.msra.mxu0 0.0
    %1101 = vmatprep.subr.mxu0 0.0
    %1102 = vmatpush1.msra.mxu0 0.0
    %1103 = vmatprep.subr.mxu0 0.0
    %1104 = vmatpush1.msra.mxu0 0.0
    %1105 = vmatprep.subr.mxu0 0.0
    %1106 = vmatpush1.msra.mxu0 0.0
    %1107 = vmatprep.subr.mxu0 0.0
    %1108 = vmatpush1.msra.mxu0 0.0
    %1109 = vmatprep.subr.mxu0 0.0
    %1110 = vmatpush1.msra.mxu0 0.0
    %1111 = vmatprep.subr.mxu0 0.0
    %1112 = vmatpush1.msra.mxu0 0.0
    %1113 = vmatprep.subr.mxu0 0.0
    %1114 = vmatpush1.msra.mxu0 0.0
    %1115 = vmatprep.subr.mxu0 0.0
    %1116 = vmatpush1.msra.mxu0 0.0
    %1117 = vmatprep.subr.mxu0 0.0
    %1118 = vmatpush1.msra.mxu0 0.0
    %1119 = vmatprep.subr.mxu0 0.0
    %1120 = vmatpush1.msra.mxu0 0.0
    %1121 = vmatprep.subr.mxu0 0.0
    %1122 = vmatpush1.msra.mxu0 0.0
    %1123 = vmatprep.subr.mxu0 0.0
    %1124 = vmatpush1.msra.mxu0 0.0
    %1125 = vmatprep.subr.mxu0 0.0
    %1126 = vmatpush1.msra.mxu0 0.0
    %1127 = vmatprep.subr.mxu0 0.0
    %1128 = vmatpush1.msra.mxu0 0.0
    %1129 = vmatprep.subr.mxu0 0.0
    %1130 = vmatpush1.msra.mxu0 0.0
    %1131 = vmatprep.subr.mxu0 0.0
    %1132 = vmatpush1.msra.mxu0 0.0
    %1133 = vmatprep.subr.mxu0 0.0
    %1134 = vmatpush1.msra.mxu0 0.0
    %1135 = vmatprep.subr.mxu0 0.0
    %1136 = vmatpush1.msra.mxu0 0.0
    %1137 = vmatprep.subr.mxu0 0.0
    %1138 = vmatpush1.msra.mxu0 0.0
    %1139 = vmatprep.subr.mxu0 0.0
    %1140 = vmatpush1.msra.mxu0 0.0
    %1141 = vmatprep.subr.mxu0 0.0
    %1142 = vmatpush1.msra.mxu0 0.0
    %1143 = vmatprep.subr.mxu0 0.0
    %1144 = vmatpush1.msra.mxu0 0.0
    %1145 = vmatprep.mubr.f32.mxu0 0.0
    %1146 = vmatmul.mubr.f32.gmra.mrb[0].mxu0 %v1079
    %v1147 = vpop.f32.mrb[0].mxu0
    %v1148 = vadd.f32 %v1076, %v1147
    %v1149 = vpop.f32.mrb[0].mxu0
    %1150 = vdwg.mxu0
    %v1151 = vld [vmem:[#allocation19] sm:$0xff]
    %v1152 = vld [vmem:[#allocation20] sm:$0x1]
    %v1154 = vlaneseq
    %v1155 = vshrl.u32 %v1154, 7
    %v1156 = vsub.s32 0, %v1155
    %v1157 = vrot.slane %v1152, %v1156
    %1159 = vmatprep.subr.mxu0 0.0
    %1160 = vmatpush1.msra.mxu0 %v1151
    %1161 = vmatprep.subr.mxu0 0.0
    %1162 = vmatpush1.msra.mxu0 0.0
    %1163 = vmatprep.subr.mxu0 0.0
    %1164 = vmatpush1.msra.mxu0 0.0
    %1165 = vmatprep.subr.mxu0 0.0
    %1166 = vmatpush1.msra.mxu0 0.0
    %1167 = vmatprep.subr.mxu0 0.0
    %1168 = vmatpush1.msra.mxu0 0.0
    %1169 = vmatprep.subr.mxu0 0.0
    %1170 = vmatpush1.msra.mxu0 0.0
    %1171 = vmatprep.subr.mxu0 0.0
    %1172 = vmatpush1.msra.mxu0 0.0
    %1173 = vmatprep.subr.mxu0 0.0
    %1174 = vmatpush1.msra.mxu0 0.0
    %1175 = vmatprep.subr.mxu0 0.0
    %1176 = vmatpush1.msra.mxu0 0.0
    %1177 = vmatprep.subr.mxu0 0.0
    %1178 = vmatpush1.msra.mxu0 0.0
    %1179 = vmatprep.subr.mxu0 0.0
    %1180 = vmatpush1.msra.mxu0 0.0
    %1181 = vmatprep.subr.mxu0 0.0
    %1182 = vmatpush1.msra.mxu0 0.0
    %1183 = vmatprep.subr.mxu0 0.0
    %1184 = vmatpush1.msra.mxu0 0.0
    %1185 = vmatprep.subr.mxu0 0.0
    %1186 = vmatpush1.msra.mxu0 0.0
    %1187 = vmatprep.subr.mxu0 0.0
    %1188 = vmatpush1.msra.mxu0 0.0
    %1189 = vmatprep.subr.mxu0 0.0
    %1190 = vmatpush1.msra.mxu0 0.0
    %1191 = vmatprep.subr.mxu0 0.0
    %1192 = vmatpush1.msra.mxu0 0.0
    %1193 = vmatprep.subr.mxu0 0.0
    %1194 = vmatpush1.msra.mxu0 0.0
    %1195 = vmatprep.subr.mxu0 0.0
    %1196 = vmatpush1.msra.mxu0 0.0
    %1197 = vmatprep.subr.mxu0 0.0
    %1198 = vmatpush1.msra.mxu0 0.0
    %1199 = vmatprep.subr.mxu0 0.0
    %1200 = vmatpush1.msra.mxu0 0.0
    %1201 = vmatprep.subr.mxu0 0.0
    %1202 = vmatpush1.msra.mxu0 0.0
    %1203 = vmatprep.subr.mxu0 0.0
    %1204 = vmatpush1.msra.mxu0 0.0
    %1205 = vmatprep.subr.mxu0 0.0
    %1206 = vmatpush1.msra.mxu0 0.0
    %1207 = vmatprep.subr.mxu0 0.0
    %1208 = vmatpush1.msra.mxu0 0.0
    %1209 = vmatprep.subr.mxu0 0.0
    %1210 = vmatpush1.msra.mxu0 0.0
    %1211 = vmatprep.subr.mxu0 0.0
    %1212 = vmatpush1.msra.mxu0 0.0
    %1213 = vmatprep.subr.mxu0 0.0
    %1214 = vmatpush1.msra.mxu0 0.0
    %1215 = vmatprep.subr.mxu0 0.0
    %1216 = vmatpush1.msra.mxu0 0.0
    %1217 = vmatprep.subr.mxu0 0.0
    %1218 = vmatpush1.msra.mxu0 0.0
    %1219 = vmatprep.subr.mxu0 0.0
    %1220 = vmatpush1.msra.mxu0 0.0
    %1221 = vmatprep.subr.mxu0 0.0
    %1222 = vmatpush1.msra.mxu0 0.0
    %1223 = vmatprep.mubr.f32.mxu0 0.0
    %1224 = vmatmul.mubr.f32.gmra.mrb[0].mxu0 %v1079
    %v1225 = vpop.f32.mrb[0].mxu0
    %v1226 = vadd.f32 %v1157, %v1225
    %v1227 = vpop.f32.mrb[0].mxu0
    %1228 = vdwg.mxu0
    %v1231 = vunpack.c.l.s4 1966171168
    %v1232 = vunpack.c.0.s8 %v1231
    %v1233 = vlaneseq
    %v1234 = vshrl.u32 %v1233, 7
    %v1235 = vsub.s32 %v1232, %v1234
    %v1236 = vrot.slane %v1148, %v1235
    %v1237 = vcombine.high %v1236, %v1236
    %v1239 = vunpack.c.l.s4 1966171168
    %v1240 = vunpack.c.0.s8 %v1239
    %v1241 = vlaneseq
    %v1242 = vshrl.u32 %v1241, 7
    %v1243 = vsub.s32 %v1240, %v1242
    %v1244 = vrot.slane %v1236, %v1243
    %v1246 = vunpack.c.l.s4 1966171168
    %v1247 = vunpack.c.0.s8 %v1246
    %v1248 = vlaneseq
    %v1249 = vshrl.u32 %v1248, 7
    %v1250 = vsub.s32 %v1247, %v1249
    %v1251 = vrot.slane %v1237, %v1250
    %v1252 = vlaneseq
    %v1253 = vshrl.u32 %v1252, 7
    %v1254 = vsub.s32 0, %v1253
    %v1255 = vrot.slane %v1244, %v1254
    %v1256 = vlaneseq
    %v1257 = vshrl.u32 %v1256, 7
    %v1258 = vsub.s32 0, %v1257
    %v1259 = vrot.slane %v1251, %v1258
    %v1262 = vmul.f32 %v1045, %v1255
    %v1263 = vmul.f32 %v1047, %v1255
    %v1264 = vmul.f32 %v1049, %v1259
    %v1265 = vmul.f32 %v1051, %v1259
    %v1268 = vunpack.c.l.s4 1966171168
    %v1269 = vunpack.c.0.s8 %v1268
    %v1270 = vlaneseq
    %v1271 = vshrl.u32 %v1270, 7
    %v1272 = vsub.s32 %v1269, %v1271
    %v1273 = vrot.slane %v1226, %v1272
    %v1274 = vcombine.high %v1273, %v1273
    %v1276 = vunpack.c.l.s4 1966171168
    %v1277 = vunpack.c.0.s8 %v1276
    %v1278 = vlaneseq
    %v1279 = vshrl.u32 %v1278, 7
    %v1280 = vsub.s32 %v1277, %v1279
    %v1281 = vrot.slane %v1273, %v1280
    %v1283 = vunpack.c.l.s4 1966171168
    %v1284 = vunpack.c.0.s8 %v1283
    %v1285 = vlaneseq
    %v1286 = vshrl.u32 %v1285, 7
    %v1287 = vsub.s32 %v1284, %v1286
    %v1288 = vrot.slane %v1274, %v1287
    %v1289 = vlaneseq
    %v1290 = vshrl.u32 %v1289, 7
    %v1291 = vsub.s32 0, %v1290
    %v1292 = vrot.slane %v1281, %v1291
    %v1293 = vlaneseq
    %v1294 = vshrl.u32 %v1293, 7
    %v1295 = vsub.s32 0, %v1294
    %v1296 = vrot.slane %v1288, %v1295
    %v1299 = vadd.f32 %v1262, %v1292
    %v1300 = vadd.f32 %v1263, %v1292
    %v1301 = vadd.f32 %v1264, %v1296
    %v1302 = vadd.f32 %v1265, %v1296
    %vm1307 = vcmask 1040384
    %v1308 = vrot.slane %v1299, 7
    %v1309 = vrot.slane %v1300, 7
    %v1310 = vsel %vm1307, %v1308, %v1309
    %v1311 = vrot.slane %v1301, 7
    %v1312 = vrot.slane %v1302, 7
    %v1313 = vsel %vm1307, %v1311, %v1312
    %v1318 = vsel %vm1307, 0.0, %v1308
    %v1319 = vsel %vm1307, 0.0, %v1311
    %vm1320 = vcmask 1046528
    %v1321 = vrot.slane %v1299, 1
    %v1322 = vrot.slane %v1300, 1
    %v1323 = vsel %vm1320, %v1321, %v1322
    %v1324 = vrot.slane %v1301, 1
    %v1325 = vrot.slane %v1302, 1
    %v1326 = vsel %vm1320, %v1324, %v1325
    %v1331 = vsel %vm1320, %v1322, 0.0
    %v1332 = vsel %vm1320, %v1325, 0.0
    %v1333 = vld [vmem:[#allocation22] sm:$0xff]
    %v1334 = vld [vmem:[#allocation22 + $0x8] sm:$0xff]
    %v1335 = vld [vmem:[#allocation22 + $0x10] sm:$0xff]
    %v1336 = vld [vmem:[#allocation22 + $0x18] sm:$0xff]
    %v1337 = vld [vmem:[#allocation22 + $0x20] sm:$0xff]
    %v1338 = vld [vmem:[#allocation22 + $0x28] sm:$0xff]
    %v1339 = vld [vmem:[#allocation22 + $0x30] sm:$0xff]
    %v1340 = vld [vmem:[#allocation22 + $0x38] sm:$0xff]
    %v1341 = vld [vmem:[#allocation22 + $0x40] sm:$0xff]
    %v1342 = vld [vmem:[#allocation22 + $0x48] sm:$0xff]
    %v1343 = vld [vmem:[#allocation22 + $0x50] sm:$0xff]
    %v1344 = vld [vmem:[#allocation22 + $0x58] sm:$0xff]
    %v1345 = vld [vmem:[#allocation22 + $0x60] sm:$0xff]
    %v1346 = vld [vmem:[#allocation22 + $0x68] sm:$0xff]
    %v1347 = vld [vmem:[#allocation22 + $0x70] sm:$0xff]
    %v1348 = vld [vmem:[#allocation22 + $0x78] sm:$0xff]
    %s1349 = scalar_lea.vmem [#allocation22], 128
    %v1350 = vld [vmem:[%s1349] sm:$0xff]
    %v1351 = vld [vmem:[%s1349 + $0x8] sm:$0xff]
    %v1352 = vld [vmem:[%s1349 + $0x10] sm:$0xff]
    %v1353 = vld [vmem:[%s1349 + $0x18] sm:$0xff]
    %v1354 = vld [vmem:[%s1349 + $0x20] sm:$0xff]
    %v1355 = vld [vmem:[%s1349 + $0x28] sm:$0xff]
    %v1356 = vld [vmem:[%s1349 + $0x30] sm:$0xff]
    %v1357 = vld [vmem:[%s1349 + $0x38] sm:$0xff]
    %v1358 = vld [vmem:[%s1349 + $0x40] sm:$0xff]
    %v1359 = vld [vmem:[%s1349 + $0x48] sm:$0xff]
    %v1360 = vld [vmem:[%s1349 + $0x50] sm:$0xff]
    %v1361 = vld [vmem:[%s1349 + $0x58] sm:$0xff]
    %v1362 = vld [vmem:[%s1349 + $0x60] sm:$0xff]
    %v1363 = vld [vmem:[%s1349 + $0x68] sm:$0xff]
    %v1364 = vld [vmem:[%s1349 + $0x70] sm:$0xff]
    %v1365 = vld [vmem:[%s1349 + $0x78] sm:$0xff]
    %1366 = vmatprep.subr.mxu0 0.0
    %1367 = vmatpush1.msra.mxu0 %v1350
    %1368 = vmatprep.subr.mxu0 0.0
    %1369 = vmatpush1.msra.mxu0 %v1351
    %1370 = vmatprep.subr.mxu0 0.0
    %1371 = vmatpush1.msra.mxu0 %v1352
    %1372 = vmatprep.subr.mxu0 0.0
    %1373 = vmatpush1.msra.mxu0 %v1353
    %1374 = vmatprep.subr.mxu0 0.0
    %1375 = vmatpush1.msra.mxu0 %v1354
    %1376 = vmatprep.subr.mxu0 0.0
    %1377 = vmatpush1.msra.mxu0 %v1355
    %1378 = vmatprep.subr.mxu0 0.0
    %1379 = vmatpush1.msra.mxu0 %v1356
    %1380 = vmatprep.subr.mxu0 0.0
    %1381 = vmatpush1.msra.mxu0 %v1357
    %1382 = vmatprep.subr.mxu0 0.0
    %1383 = vmatpush1.msra.mxu0 %v1358
    %1384 = vmatprep.subr.mxu0 0.0
    %1385 = vmatpush1.msra.mxu0 %v1359
    %1386 = vmatprep.subr.mxu0 0.0
    %1387 = vmatpush1.msra.mxu0 %v1360
    %1388 = vmatprep.subr.mxu0 0.0
    %1389 = vmatpush1.msra.mxu0 %v1361
    %1390 = vmatprep.subr.mxu0 0.0
    %1391 = vmatpush1.msra.mxu0 %v1362
    %1392 = vmatprep.subr.mxu0 0.0
    %1393 = vmatpush1.msra.mxu0 %v1363
    %1394 = vmatprep.subr.mxu0 0.0
    %1395 = vmatpush1.msra.mxu0 %v1364
    %1396 = vmatprep.subr.mxu0 0.0
    %1397 = vmatpush1.msra.mxu0 %v1365
    %1398 = vmatprep.subr.mxu0 0.0
    %1399 = vmatpush1.msra.mxu0 0.0
    %1400 = vmatprep.subr.mxu0 0.0
    %1401 = vmatpush1.msra.mxu0 0.0
    %1402 = vmatprep.subr.mxu0 0.0
    %1403 = vmatpush1.msra.mxu0 0.0
    %1404 = vmatprep.subr.mxu0 0.0
    %1405 = vmatpush1.msra.mxu0 0.0
    %1406 = vmatprep.subr.mxu0 0.0
    %1407 = vmatpush1.msra.mxu0 0.0
    %1408 = vmatprep.subr.mxu0 0.0
    %1409 = vmatpush1.msra.mxu0 0.0
    %1410 = vmatprep.subr.mxu0 0.0
    %1411 = vmatpush1.msra.mxu0 0.0
    %1412 = vmatprep.subr.mxu0 0.0
    %1413 = vmatpush1.msra.mxu0 0.0
    %1414 = vmatprep.subr.mxu0 0.0
    %1415 = vmatpush1.msra.mxu0 0.0
    %1416 = vmatprep.subr.mxu0 0.0
    %1417 = vmatpush1.msra.mxu0 0.0
    %1418 = vmatprep.subr.mxu0 0.0
    %1419 = vmatpush1.msra.mxu0 0.0
    %1420 = vmatprep.subr.mxu0 0.0
    %1421 = vmatpush1.msra.mxu0 0.0
    %1422 = vmatprep.subr.mxu0 0.0
    %1423 = vmatpush1.msra.mxu0 0.0
    %1424 = vmatprep.subr.mxu0 0.0
    %1425 = vmatpush1.msra.mxu0 0.0
    %1426 = vmatprep.subr.mxu0 0.0
    %1427 = vmatpush1.msra.mxu0 0.0
    %1428 = vmatprep.subr.mxu0 0.0
    %1429 = vmatpush1.msra.mxu0 0.0
    %1430 = vmatprep.mubr.f32.mxu0 0.0
    %1431 = vmatmul.mubr.f32.gmra.mrb[0].mxu0 %v1299
    %v1432 = vpop.f32.mrb[0].mxu0
    %v1433 = vadd.f32 0.0, %v1432
    %v1434 = vpop.f32.mrb[0].mxu0
    %1435 = vmatprep.mubr.f32.mxu0 0.0
    %1436 = vmatmul.mubr.f32.gmra.mrb[0].mxu0 %v1300
    %v1437 = vpop.f32.mrb[0].mxu0
    %v1438 = vadd.f32 0.0, %v1437
    %v1439 = vpop.f32.mrb[0].mxu0
    %1440 = vmatprep.mubr.f32.mxu0 0.0
    %1441 = vmatmul.mubr.f32.gmra.mrb[0].mxu0 %v1301
    %v1442 = vpop.f32.mrb[0].mxu0
    %v1443 = vadd.f32 0.0, %v1442
    %v1444 = vpop.f32.mrb[0].mxu0
    %1445 = vmatprep.mubr.f32.mxu0 0.0
    %1446 = vmatmul.mubr.f32.gmra.mrb[0].mxu0 %v1302
    %v1447 = vpop.f32.mrb[0].mxu0
    %v1448 = vadd.f32 0.0, %v1447
    %v1449 = vpop.f32.mrb[0].mxu0
    %1450 = vdwg.mxu0
    %1451 = vmatprep.subr.mxu0 0.0
    %1452 = vmatpush1.msra.mxu0 %v1333
    %1453 = vmatprep.subr.mxu0 0.0
    %1454 = vmatpush1.msra.mxu0 %v1334
    %1455 = vmatprep.subr.mxu0 0.0
    %1456 = vmatpush1.msra.mxu0 %v1335
    %1457 = vmatprep.subr.mxu0 0.0
    %1458 = vmatpush1.msra.mxu0 %v1336
    %1459 = vmatprep.subr.mxu0 0.0
    %1460 = vmatpush1.msra.mxu0 %v1337
    %1461 = vmatprep.subr.mxu0 0.0
    %1462 = vmatpush1.msra.mxu0 %v1338
    %1463 = vmatprep.subr.mxu0 0.0
    %1464 = vmatpush1.msra.mxu0 %v1339
    %1465 = vmatprep.subr.mxu0 0.0
    %1466 = vmatpush1.msra.mxu0 %v1340
    %1467 = vmatprep.subr.mxu0 0.0
    %1468 = vmatpush1.msra.mxu0 %v1341
    %1469 = vmatprep.subr.mxu0 0.0
    %1470 = vmatpush1.msra.mxu0 %v1342
    %1471 = vmatprep.subr.mxu0 0.0
    %1472 = vmatpush1.msra.mxu0 %v1343
    %1473 = vmatprep.subr.mxu0 0.0
    %1474 = vmatpush1.msra.mxu0 %v1344
    %1475 = vmatprep.subr.mxu0 0.0
    %1476 = vmatpush1.msra.mxu0 %v1345
    %1477 = vmatprep.subr.mxu0 0.0
    %1478 = vmatpush1.msra.mxu0 %v1346
    %1479 = vmatprep.subr.mxu0 0.0
    %1480 = vmatpush1.msra.mxu0 %v1347
    %1481 = vmatprep.subr.mxu0 0.0
    %1482 = vmatpush1.msra.mxu0 %v1348
    %1483 = vmatprep.subr.mxu0 0.0
    %1484 = vmatpush1.msra.mxu0 0.0
    %1485 = vmatprep.subr.mxu0 0.0
    %1486 = vmatpush1.msra.mxu0 0.0
    %1487 = vmatprep.subr.mxu0 0.0
    %1488 = vmatpush1.msra.mxu0 0.0
    %1489 = vmatprep.subr.mxu0 0.0
    %1490 = vmatpush1.msra.mxu0 0.0
    %1491 = vmatprep.subr.mxu0 0.0
    %1492 = vmatpush1.msra.mxu0 0.0
    %1493 = vmatprep.subr.mxu0 0.0
    %1494 = vmatpush1.msra.mxu0 0.0
    %1495 = vmatprep.subr.mxu0 0.0
    %1496 = vmatpush1.msra.mxu0 0.0
    %1497 = vmatprep.subr.mxu0 0.0
    %1498 = vmatpush1.msra.mxu0 0.0
    %1499 = vmatprep.subr.mxu0 0.0
    %1500 = vmatpush1.msra.mxu0 0.0
    %1501 = vmatprep.subr.mxu0 0.0
    %1502 = vmatpush1.msra.mxu0 0.0
    %1503 = vmatprep.subr.mxu0 0.0
    %1504 = vmatpush1.msra.mxu0 0.0
    %1505 = vmatprep.subr.mxu0 0.0
    %1506 = vmatpush1.msra.mxu0 0.0
    %1507 = vmatprep.subr.mxu0 0.0
    %1508 = vmatpush1.msra.mxu0 0.0
    %1509 = vmatprep.subr.mxu0 0.0
    %1510 = vmatpush1.msra.mxu0 0.0
    %1511 = vmatprep.subr.mxu0 0.0
    %1512 = vmatpush1.msra.mxu0 0.0
    %1513 = vmatprep.subr.mxu0 0.0
    %1514 = vmatpush1.msra.mxu0 0.0
    %1515 = vmatprep.mubr.f32.mxu0 0.0
    %1516 = vmatmul.mubr.f32.gmra.mrb[0].mxu0 %v1318
    %v1517 = vpop.f32.mrb[0].mxu0
    %v1518 = vadd.f32 %v1433, %v1517
    %v1519 = vpop.f32.mrb[0].mxu0
    %1520 = vmatprep.mubr.f32.mxu0 0.0
    %1521 = vmatmul.mubr.f32.gmra.mrb[0].mxu0 %v1310
    %v1522 = vpop.f32.mrb[0].mxu0
    %v1523 = vadd.f32 %v1438, %v1522
    %v1524 = vpop.f32.mrb[0].mxu0
    %1525 = vmatprep.mubr.f32.mxu0 0.0
    %1526 = vmatmul.mubr.f32.gmra.mrb[0].mxu0 %v1319
    %v1527 = vpop.f32.mrb[0].mxu0
    %v1528 = vadd.f32 %v1443, %v1527
    %v1529 = vpop.f32.mrb[0].mxu0
    %1530 = vmatprep.mubr.f32.mxu0 0.0
    %1531 = vmatmul.mubr.f32.gmra.mrb[0].mxu0 %v1313
    %v1532 = vpop.f32.mrb[0].mxu0
    %v1533 = vadd.f32 %v1448, %v1532
    %v1534 = vpop.f32.mrb[0].mxu0
    %1535 = vdwg.mxu0
    %s1536 = scalar_lea.vmem [#allocation22], 256
    %v1537 = vld [vmem:[%s1536] sm:$0xff]
    %v1538 = vld [vmem:[%s1536 + $0x8] sm:$0xff]
    %v1539 = vld [vmem:[%s1536 + $0x10] sm:$0xff]
    %v1540 = vld [vmem:[%s1536 + $0x18] sm:$0xff]
    %v1541 = vld [vmem:[%s1536 + $0x20] sm:$0xff]
    %v1542 = vld [vmem:[%s1536 + $0x28] sm:$0xff]
    %v1543 = vld [vmem:[%s1536 + $0x30] sm:$0xff]
    %v1544 = vld [vmem:[%s1536 + $0x38] sm:$0xff]
    %v1545 = vld [vmem:[%s1536 + $0x40] sm:$0xff]
    %v1546 = vld [vmem:[%s1536 + $0x48] sm:$0xff]
    %v1547 = vld [vmem:[%s1536 + $0x50] sm:$0xff]
    %v1548 = vld [vmem:[%s1536 + $0x58] sm:$0xff]
    %v1549 = vld [vmem:[%s1536 + $0x60] sm:$0xff]
    %v1550 = vld [vmem:[%s1536 + $0x68] sm:$0xff]
    %v1551 = vld [vmem:[%s1536 + $0x70] sm:$0xff]
    %v1552 = vld [vmem:[%s1536 + $0x78] sm:$0xff]
    %1553 = vmatprep.subr.mxu0 0.0
    %1554 = vmatpush1.msra.mxu0 %v1537
    %1555 = vmatprep.subr.mxu0 0.0
    %1556 = vmatpush1.msra.mxu0 %v1538
    %1557 = vmatprep.subr.mxu0 0.0
    %1558 = vmatpush1.msra.mxu0 %v1539
    %1559 = vmatprep.subr.mxu0 0.0
    %1560 = vmatpush1.msra.mxu0 %v1540
    %1561 = vmatprep.subr.mxu0 0.0
    %1562 = vmatpush1.msra.mxu0 %v1541
    %1563 = vmatprep.subr.mxu0 0.0
    %1564 = vmatpush1.msra.mxu0 %v1542
    %1565 = vmatprep.subr.mxu0 0.0
    %1566 = vmatpush1.msra.mxu0 %v1543
    %1567 = vmatprep.subr.mxu0 0.0
    %1568 = vmatpush1.msra.mxu0 %v1544
    %1569 = vmatprep.subr.mxu0 0.0
    %1570 = vmatpush1.msra.mxu0 %v1545
    %1571 = vmatprep.subr.mxu0 0.0
    %1572 = vmatpush1.msra.mxu0 %v1546
    %1573 = vmatprep.subr.mxu0 0.0
    %1574 = vmatpush1.msra.mxu0 %v1547
    %1575 = vmatprep.subr.mxu0 0.0
    %1576 = vmatpush1.msra.mxu0 %v1548
    %1577 = vmatprep.subr.mxu0 0.0
    %1578 = vmatpush1.msra.mxu0 %v1549
    %1579 = vmatprep.subr.mxu0 0.0
    %1580 = vmatpush1.msra.mxu0 %v1550
    %1581 = vmatprep.subr.mxu0 0.0
    %1582 = vmatpush1.msra.mxu0 %v1551
    %1583 = vmatprep.subr.mxu0 0.0
    %1584 = vmatpush1.msra.mxu0 %v1552
    %1585 = vmatprep.subr.mxu0 0.0
    %1586 = vmatpush1.msra.mxu0 0.0
    %1587 = vmatprep.subr.mxu0 0.0
    %1588 = vmatpush1.msra.mxu0 0.0
    %1589 = vmatprep.subr.mxu0 0.0
    %1590 = vmatpush1.msra.mxu0 0.0
    %1591 = vmatprep.subr.mxu0 0.0
    %1592 = vmatpush1.msra.mxu0 0.0
    %1593 = vmatprep.subr.mxu0 0.0
    %1594 = vmatpush1.msra.mxu0 0.0
    %1595 = vmatprep.subr.mxu0 0.0
    %1596 = vmatpush1.msra.mxu0 0.0
    %1597 = vmatprep.subr.mxu0 0.0
    %1598 = vmatpush1.msra.mxu0 0.0
    %1599 = vmatprep.subr.mxu0 0.0
    %1600 = vmatpush1.msra.mxu0 0.0
    %1601 = vmatprep.subr.mxu0 0.0
    %1602 = vmatpush1.msra.mxu0 0.0
    %1603 = vmatprep.subr.mxu0 0.0
    %1604 = vmatpush1.msra.mxu0 0.0
    %1605 = vmatprep.subr.mxu0 0.0
    %1606 = vmatpush1.msra.mxu0 0.0
    %1607 = vmatprep.subr.mxu0 0.0
    %1608 = vmatpush1.msra.mxu0 0.0
    %1609 = vmatprep.subr.mxu0 0.0
    %1610 = vmatpush1.msra.mxu0 0.0
    %1611 = vmatprep.subr.mxu0 0.0
    %1612 = vmatpush1.msra.mxu0 0.0
    %1613 = vmatprep.subr.mxu0 0.0
    %1614 = vmatpush1.msra.mxu0 0.0
    %1615 = vmatprep.subr.mxu0 0.0
    %1616 = vmatpush1.msra.mxu0 0.0
    %1617 = vmatprep.mubr.f32.mxu0 0.0
    %1618 = vmatmul.mubr.f32.gmra.mrb[0].mxu0 %v1323
    %v1619 = vpop.f32.mrb[0].mxu0
    %v1620 = vadd.f32 0.0, %v1619
    %v1621 = vpop.f32.mrb[0].mxu0
    %1622 = vmatprep.mubr.f32.mxu0 0.0
    %1623 = vmatmul.mubr.f32.gmra.mrb[0].mxu0 %v1331
    %v1624 = vpop.f32.mrb[0].mxu0
    %v1625 = vadd.f32 0.0, %v1624
    %v1626 = vpop.f32.mrb[0].mxu0
    %1627 = vmatprep.mubr.f32.mxu0 0.0
    %1628 = vmatmul.mubr.f32.gmra.mrb[0].mxu0 %v1326
    %v1629 = vpop.f32.mrb[0].mxu0
    %v1630 = vadd.f32 0.0, %v1629
    %v1631 = vpop.f32.mrb[0].mxu0
    %1632 = vmatprep.mubr.f32.mxu0 0.0
    %1633 = vmatmul.mubr.f32.gmra.mrb[0].mxu0 %v1332
    %v1634 = vpop.f32.mrb[0].mxu0
    %v1635 = vadd.f32 0.0, %v1634
    %v1636 = vpop.f32.mrb[0].mxu0
    %1637 = vdwg.mxu0
    %v1638 = vadd.f32 %v1518, %v1620
    %v1639 = vadd.f32 %v1523, %v1625
    %v1640 = vadd.f32 %v1528, %v1630
    %v1641 = vadd.f32 %v1533, %v1635
    %v1642 = vld [vmem:[#allocation23] sm:$0x1]
    %v1644 = vlaneseq
    %v1645 = vshrl.u32 %v1644, 7
    %v1646 = vsub.s32 0, %v1645
    %v1647 = vrot.slane %v1642, %v1646
    %v1649 = vadd.f32 %v1638, %v1647
    %v1650 = vadd.f32 %v1639, %v1647
    %v1651 = vadd.f32 %v1640, %v1647
    %v1652 = vadd.f32 %v1641, %v1647
    %v1653 = vld [vmem:[#allocation25] sm:$0x1]
    %v1654 = vld [vmem:[#allocation26] sm:$0x1]
    %1655 = vmatprep.subr.mxu0 0.0
    %1656 = vmatpush1.msra.mxu0 %v278
    %1657 = vmatprep.subr.mxu0 0.0
    %1658 = vmatpush1.msra.mxu0 %v279
    %1659 = vmatprep.subr.mxu0 0.0
    %1660 = vmatpush1.msra.mxu0 %v280
    %1661 = vmatprep.subr.mxu0 0.0
    %1662 = vmatpush1.msra.mxu0 %v281
    %1663 = vmatprep.subr.mxu0 0.0
    %1664 = vmatpush1.msra.mxu0 %v282
    %1665 = vmatprep.subr.mxu0 0.0
    %1666 = vmatpush1.msra.mxu0 %v283
    %1667 = vmatprep.subr.mxu0 0.0
    %1668 = vmatpush1.msra.mxu0 %v284
    %1669 = vmatprep.subr.mxu0 0.0
    %1670 = vmatpush1.msra.mxu0 %v285
    %1671 = vmatprep.subr.mxu0 0.0
    %1672 = vmatpush1.msra.mxu0 %v286
    %1673 = vmatprep.subr.mxu0 0.0
    %1674 = vmatpush1.msra.mxu0 %v287
    %1675 = vmatprep.subr.mxu0 0.0
    %1676 = vmatpush1.msra.mxu0 %v288
    %1677 = vmatprep.subr.mxu0 0.0
    %1678 = vmatpush1.msra.mxu0 %v289
    %1679 = vmatprep.subr.mxu0 0.0
    %1680 = vmatpush1.msra.mxu0 %v290
    %1681 = vmatprep.subr.mxu0 0.0
    %1682 = vmatpush1.msra.mxu0 %v291
    %1683 = vmatprep.subr.mxu0 0.0
    %1684 = vmatpush1.msra.mxu0 %v292
    %1685 = vmatprep.subr.mxu0 0.0
    %1686 = vmatpush1.msra.mxu0 %v293
    %1687 = vmatprep.subr.mxu0 0.0
    %1688 = vmatpush1.msra.mxu0 0.0
    %1689 = vmatprep.subr.mxu0 0.0
    %1690 = vmatpush1.msra.mxu0 0.0
    %1691 = vmatprep.subr.mxu0 0.0
    %1692 = vmatpush1.msra.mxu0 0.0
    %1693 = vmatprep.subr.mxu0 0.0
    %1694 = vmatpush1.msra.mxu0 0.0
    %1695 = vmatprep.subr.mxu0 0.0
    %1696 = vmatpush1.msra.mxu0 0.0
    %1697 = vmatprep.subr.mxu0 0.0
    %1698 = vmatpush1.msra.mxu0 0.0
    %1699 = vmatprep.subr.mxu0 0.0
    %1700 = vmatpush1.msra.mxu0 0.0
    %1701 = vmatprep.subr.mxu0 0.0
    %1702 = vmatpush1.msra.mxu0 0.0
    %1703 = vmatprep.subr.mxu0 0.0
    %1704 = vmatpush1.msra.mxu0 0.0
    %1705 = vmatprep.subr.mxu0 0.0
    %1706 = vmatpush1.msra.mxu0 0.0
    %1707 = vmatprep.subr.mxu0 0.0
    %1708 = vmatpush1.msra.mxu0 0.0
    %1709 = vmatprep.subr.mxu0 0.0
    %1710 = vmatpush1.msra.mxu0 0.0
    %1711 = vmatprep.subr.mxu0 0.0
    %1712 = vmatpush1.msra.mxu0 0.0
    %1713 = vmatprep.subr.mxu0 0.0
    %1714 = vmatpush1.msra.mxu0 0.0
    %1715 = vmatprep.subr.mxu0 0.0
    %1716 = vmatpush1.msra.mxu0 0.0
    %1717 = vmatprep.subr.mxu0 0.0
    %1718 = vmatpush1.msra.mxu0 0.0
    %1719 = vmatprep.mubr.f32.mxu0 0.0
    %1720 = vmatmul.mubr.f32.gmra.mrb[0].mxu0 %v1649
    %v1721 = vpop.f32.mrb[0].mxu0
    %v1722 = vadd.f32 0.0, %v1721
    %v1723 = vpop.f32.mrb[0].mxu0
    %1724 = vmatprep.mubr.f32.mxu0 0.0
    %1725 = vmatmul.mubr.f32.gmra.mrb[0].mxu0 %v1650
    %v1726 = vpop.f32.mrb[0].mxu0
    %v1727 = vadd.f32 0.0, %v1726
    %v1728 = vpop.f32.mrb[0].mxu0
    %1729 = vmatprep.mubr.f32.mxu0 0.0
    %1730 = vmatmul.mubr.f32.gmra.mrb[0].mxu0 %v1651
    %v1731 = vpop.f32.mrb[0].mxu0
    %v1732 = vadd.f32 0.0, %v1731
    %v1733 = vpop.f32.mrb[0].mxu0
    %1734 = vmatprep.mubr.f32.mxu0 0.0
    %1735 = vmatmul.mubr.f32.gmra.mrb[0].mxu0 %v1652
    %v1736 = vpop.f32.mrb[0].mxu0
    %v1737 = vadd.f32 0.0, %v1736
    %v1738 = vpop.f32.mrb[0].mxu0
    %1739 = vdwg.mxu0
    %v1740 = vmul.f32 %v1649, %v1649
    %v1741 = vmul.f32 %v1650, %v1650
    %v1742 = vmul.f32 %v1651, %v1651
    %v1743 = vmul.f32 %v1652, %v1652
    %1744 = vmatprep.subr.mxu0 0.0
    %1745 = vmatpush1.msra.mxu0 %v278
    %1746 = vmatprep.subr.mxu0 0.0
    %1747 = vmatpush1.msra.mxu0 %v279
    %1748 = vmatprep.subr.mxu0 0.0
    %1749 = vmatpush1.msra.mxu0 %v280
    %1750 = vmatprep.subr.mxu0 0.0
    %1751 = vmatpush1.msra.mxu0 %v281
    %1752 = vmatprep.subr.mxu0 0.0
    %1753 = vmatpush1.msra.mxu0 %v282
    %1754 = vmatprep.subr.mxu0 0.0
    %1755 = vmatpush1.msra.mxu0 %v283
    %1756 = vmatprep.subr.mxu0 0.0
    %1757 = vmatpush1.msra.mxu0 %v284
    %1758 = vmatprep.subr.mxu0 0.0
    %1759 = vmatpush1.msra.mxu0 %v285
    %1760 = vmatprep.subr.mxu0 0.0
    %1761 = vmatpush1.msra.mxu0 %v286
    %1762 = vmatprep.subr.mxu0 0.0
    %1763 = vmatpush1.msra.mxu0 %v287
    %1764 = vmatprep.subr.mxu0 0.0
    %1765 = vmatpush1.msra.mxu0 %v288
    %1766 = vmatprep.subr.mxu0 0.0
    %1767 = vmatpush1.msra.mxu0 %v289
    %1768 = vmatprep.subr.mxu0 0.0
    %1769 = vmatpush1.msra.mxu0 %v290
    %1770 = vmatprep.subr.mxu0 0.0
    %1771 = vmatpush1.msra.mxu0 %v291
    %1772 = vmatprep.subr.mxu0 0.0
    %1773 = vmatpush1.msra.mxu0 %v292
    %1774 = vmatprep.subr.mxu0 0.0
    %1775 = vmatpush1.msra.mxu0 %v293
    %1776 = vmatprep.subr.mxu0 0.0
    %1777 = vmatpush1.msra.mxu0 0.0
    %1778 = vmatprep.subr.mxu0 0.0
    %1779 = vmatpush1.msra.mxu0 0.0
    %1780 = vmatprep.subr.mxu0 0.0
    %1781 = vmatpush1.msra.mxu0 0.0
    %1782 = vmatprep.subr.mxu0 0.0
    %1783 = vmatpush1.msra.mxu0 0.0
    %1784 = vmatprep.subr.mxu0 0.0
    %1785 = vmatpush1.msra.mxu0 0.0
    %1786 = vmatprep.subr.mxu0 0.0
    %1787 = vmatpush1.msra.mxu0 0.0
    %1788 = vmatprep.subr.mxu0 0.0
    %1789 = vmatpush1.msra.mxu0 0.0
    %1790 = vmatprep.subr.mxu0 0.0
    %1791 = vmatpush1.msra.mxu0 0.0
    %1792 = vmatprep.subr.mxu0 0.0
    %1793 = vmatpush1.msra.mxu0 0.0
    %1794 = vmatprep.subr.mxu0 0.0
    %1795 = vmatpush1.msra.mxu0 0.0
    %1796 = vmatprep.subr.mxu0 0.0
    %1797 = vmatpush1.msra.mxu0 0.0
    %1798 = vmatprep.subr.mxu0 0.0
    %1799 = vmatpush1.msra.mxu0 0.0
    %1800 = vmatprep.subr.mxu0 0.0
    %1801 = vmatpush1.msra.mxu0 0.0
    %1802 = vmatprep.subr.mxu0 0.0
    %1803 = vmatpush1.msra.mxu0 0.0
    %1804 = vmatprep.subr.mxu0 0.0
    %1805 = vmatpush1.msra.mxu0 0.0
    %1806 = vmatprep.subr.mxu0 0.0
    %1807 = vmatpush1.msra.mxu0 0.0
    %1808 = vmatprep.mubr.f32.mxu0 0.0
    %1809 = vmatmul.mubr.f32.gmra.mrb[0].mxu0 %v1740
    %v1810 = vpop.f32.mrb[0].mxu0
    %v1811 = vadd.f32 0.0, %v1810
    %v1812 = vpop.f32.mrb[0].mxu0
    %1813 = vmatprep.mubr.f32.mxu0 0.0
    %1814 = vmatmul.mubr.f32.gmra.mrb[0].mxu0 %v1741
    %v1815 = vpop.f32.mrb[0].mxu0
    %v1816 = vadd.f32 0.0, %v1815
    %v1817 = vpop.f32.mrb[0].mxu0
    %1818 = vmatprep.mubr.f32.mxu0 0.0
    %1819 = vmatmul.mubr.f32.gmra.mrb[0].mxu0 %v1742
    %v1820 = vpop.f32.mrb[0].mxu0
    %v1821 = vadd.f32 0.0, %v1820
    %v1822 = vpop.f32.mrb[0].mxu0
    %1823 = vmatprep.mubr.f32.mxu0 0.0
    %1824 = vmatmul.mubr.f32.gmra.mrb[0].mxu0 %v1743
    %v1825 = vpop.f32.mrb[0].mxu0
    %v1826 = vadd.f32 0.0, %v1825
    %v1827 = vpop.f32.mrb[0].mxu0
    %1828 = vdwg.mxu0
    %1829 = vmatprep.subr.mxu0 0.0
    %1830 = vmatpush1.msra.mxu0 %v1722
    %1831 = vmatprep.subr.mxu0 0.0
    %1832 = vmatpush1.msra.mxu0 %v1727
    %1833 = vmatprep.subr.mxu0 0.0
    %1834 = vmatpush1.msra.mxu0 %v1732
    %1835 = vmatprep.subr.mxu0 0.0
    %1836 = vmatpush1.msra.mxu0 %v1737
    %1837 = vmatprep.subr.mxu0 0.0
    %1838 = vmatpush1.msra.mxu0 0.0
    %1839 = vmatprep.subr.mxu0 0.0
    %1840 = vmatpush1.msra.mxu0 0.0
    %1841 = vmatprep.subr.mxu0 0.0
    %1842 = vmatpush1.msra.mxu0 0.0
    %1843 = vmatprep.subr.mxu0 0.0
    %1844 = vmatpush1.msra.mxu0 0.0
    %1845 = vmatprep.subr.mxu0 0.0
    %1846 = vmatpush1.msra.mxu0 0.0
    %1847 = vmatprep.subr.mxu0 0.0
    %1848 = vmatpush1.msra.mxu0 0.0
    %1849 = vmatprep.subr.mxu0 0.0
    %1850 = vmatpush1.msra.mxu0 0.0
    %1851 = vmatprep.subr.mxu0 0.0
    %1852 = vmatpush1.msra.mxu0 0.0
    %1853 = vmatprep.subr.mxu0 0.0
    %1854 = vmatpush1.msra.mxu0 0.0
    %1855 = vmatprep.subr.mxu0 0.0
    %1856 = vmatpush1.msra.mxu0 0.0
    %1857 = vmatprep.subr.mxu0 0.0
    %1858 = vmatpush1.msra.mxu0 0.0
    %1859 = vmatprep.subr.mxu0 0.0
    %1860 = vmatpush1.msra.mxu0 0.0
    %1861 = vmatprep.subr.mxu0 0.0
    %1862 = vmatpush1.msra.mxu0 0.0
    %1863 = vmatprep.subr.mxu0 0.0
    %1864 = vmatpush1.msra.mxu0 0.0
    %1865 = vmatprep.subr.mxu0 0.0
    %1866 = vmatpush1.msra.mxu0 0.0
    %1867 = vmatprep.subr.mxu0 0.0
    %1868 = vmatpush1.msra.mxu0 0.0
    %1869 = vmatprep.subr.mxu0 0.0
    %1870 = vmatpush1.msra.mxu0 0.0
    %1871 = vmatprep.subr.mxu0 0.0
    %1872 = vmatpush1.msra.mxu0 0.0
    %1873 = vmatprep.subr.mxu0 0.0
    %1874 = vmatpush1.msra.mxu0 0.0
    %1875 = vmatprep.subr.mxu0 0.0
    %1876 = vmatpush1.msra.mxu0 0.0
    %1877 = vmatprep.subr.mxu0 0.0
    %1878 = vmatpush1.msra.mxu0 0.0
    %1879 = vmatprep.subr.mxu0 0.0
    %1880 = vmatpush1.msra.mxu0 0.0
    %1881 = vmatprep.subr.mxu0 0.0
    %1882 = vmatpush1.msra.mxu0 0.0
    %1883 = vmatprep.subr.mxu0 0.0
    %1884 = vmatpush1.msra.mxu0 0.0
    %1885 = vmatprep.subr.mxu0 0.0
    %1886 = vmatpush1.msra.mxu0 0.0
    %1887 = vmatprep.subr.mxu0 0.0
    %1888 = vmatpush1.msra.mxu0 0.0
    %1889 = vmatprep.subr.mxu0 0.0
    %1890 = vmatpush1.msra.mxu0 0.0
    %1891 = vmatprep.subr.mxu0 0.0
    %1892 = vmatpush1.msra.mxu0 0.0
    %1893 = vmatprep.mubr.f32.mxu0 0.0
    %1894 = vmatmul.mubr.f32.gmra.mrb[0].mxu0 %v599
    %v1895 = vpop.f32.mrb[0].mxu0
    %v1896 = vadd.f32 0.0, %v1895
    %v1897 = vpop.f32.mrb[0].mxu0
    %1898 = vdwg.mxu0
    %v1899 = vmul.f32 %v1896, 0.015625
    %1900 = vmatprep.subr.mxu0 0.0
    %1901 = vmatpush1.msra.mxu0 %v1811
    %1902 = vmatprep.subr.mxu0 0.0
    %1903 = vmatpush1.msra.mxu0 %v1816
    %1904 = vmatprep.subr.mxu0 0.0
    %1905 = vmatpush1.msra.mxu0 %v1821
    %1906 = vmatprep.subr.mxu0 0.0
    %1907 = vmatpush1.msra.mxu0 %v1826
    %1908 = vmatprep.subr.mxu0 0.0
    %1909 = vmatpush1.msra.mxu0 0.0
    %1910 = vmatprep.subr.mxu0 0.0
    %1911 = vmatpush1.msra.mxu0 0.0
    %1912 = vmatprep.subr.mxu0 0.0
    %1913 = vmatpush1.msra.mxu0 0.0
    %1914 = vmatprep.subr.mxu0 0.0
    %1915 = vmatpush1.msra.mxu0 0.0
    %1916 = vmatprep.subr.mxu0 0.0
    %1917 = vmatpush1.msra.mxu0 0.0
    %1918 = vmatprep.subr.mxu0 0.0
    %1919 = vmatpush1.msra.mxu0 0.0
    %1920 = vmatprep.subr.mxu0 0.0
    %1921 = vmatpush1.msra.mxu0 0.0
    %1922 = vmatprep.subr.mxu0 0.0
    %1923 = vmatpush1.msra.mxu0 0.0
    %1924 = vmatprep.subr.mxu0 0.0
    %1925 = vmatpush1.msra.mxu0 0.0
    %1926 = vmatprep.subr.mxu0 0.0
    %1927 = vmatpush1.msra.mxu0 0.0
    %1928 = vmatprep.subr.mxu0 0.0
    %1929 = vmatpush1.msra.mxu0 0.0
    %1930 = vmatprep.subr.mxu0 0.0
    %1931 = vmatpush1.msra.mxu0 0.0
    %1932 = vmatprep.subr.mxu0 0.0
    %1933 = vmatpush1.msra.mxu0 0.0
    %1934 = vmatprep.subr.mxu0 0.0
    %1935 = vmatpush1.msra.mxu0 0.0
    %1936 = vmatprep.subr.mxu0 0.0
    %1937 = vmatpush1.msra.mxu0 0.0
    %1938 = vmatprep.subr.mxu0 0.0
    %1939 = vmatpush1.msra.mxu0 0.0
    %1940 = vmatprep.subr.mxu0 0.0
    %1941 = vmatpush1.msra.mxu0 0.0
    %1942 = vmatprep.subr.mxu0 0.0
    %1943 = vmatpush1.msra.mxu0 0.0
    %1944 = vmatprep.subr.mxu0 0.0
    %1945 = vmatpush1.msra.mxu0 0.0
    %1946 = vmatprep.subr.mxu0 0.0
    %1947 = vmatpush1.msra.mxu0 0.0
    %1948 = vmatprep.subr.mxu0 0.0
    %1949 = vmatpush1.msra.mxu0 0.0
    %1950 = vmatprep.subr.mxu0 0.0
    %1951 = vmatpush1.msra.mxu0 0.0
    %1952 = vmatprep.subr.mxu0 0.0
    %1953 = vmatpush1.msra.mxu0 0.0
    %1954 = vmatprep.subr.mxu0 0.0
    %1955 = vmatpush1.msra.mxu0 0.0
    %1956 = vmatprep.subr.mxu0 0.0
    %1957 = vmatpush1.msra.mxu0 0.0
    %1958 = vmatprep.subr.mxu0 0.0
    %1959 = vmatpush1.msra.mxu0 0.0
    %1960 = vmatprep.subr.mxu0 0.0
    %1961 = vmatpush1.msra.mxu0 0.0
    %1962 = vmatprep.subr.mxu0 0.0
    %1963 = vmatpush1.msra.mxu0 0.0
    %1964 = vmatprep.mubr.f32.mxu0 0.0
    %1965 = vmatmul.mubr.f32.gmra.mrb[0].mxu0 %v599
    %v1966 = vpop.f32.mrb[0].mxu0
    %v1967 = vadd.f32 0.0, %v1966
    %v1968 = vpop.f32.mrb[0].mxu0
    %1969 = vdwg.mxu0
    %v1970 = vmul.f32 %v1967, 0.015625
    %v1971 = vmul.f32 %v1899, %v1899
    %v1972 = vsub.f32 %v1970, %v1971
    %v1973 = vadd.f32 %v1972, 1e-05
    %v1974 = vrsqrt.pop %v1973
    %v1976 = vsel %vm747, %v1974, 0
    %1978 = vmatprep.subr.mxu0 0.0
    %1979 = vmatpush1.msra.mxu0 %v294
    %1980 = vmatprep.subr.mxu0 0.0
    %1981 = vmatpush1.msra.mxu0 0.0
    %1982 = vmatprep.subr.mxu0 0.0
    %1983 = vmatpush1.msra.mxu0 0.0
    %1984 = vmatprep.subr.mxu0 0.0
    %1985 = vmatpush1.msra.mxu0 0.0
    %1986 = vmatprep.subr.mxu0 0.0
    %1987 = vmatpush1.msra.mxu0 0.0
    %1988 = vmatprep.subr.mxu0 0.0
    %1989 = vmatpush1.msra.mxu0 0.0
    %1990 = vmatprep.subr.mxu0 0.0
    %1991 = vmatpush1.msra.mxu0 0.0
    %1992 = vmatprep.subr.mxu0 0.0
    %1993 = vmatpush1.msra.mxu0 0.0
    %1994 = vmatprep.subr.mxu0 0.0
    %1995 = vmatpush1.msra.mxu0 0.0
    %1996 = vmatprep.subr.mxu0 0.0
    %1997 = vmatpush1.msra.mxu0 0.0
    %1998 = vmatprep.subr.mxu0 0.0
    %1999 = vmatpush1.msra.mxu0 0.0
    %2000 = vmatprep.subr.mxu0 0.0
    %2001 = vmatpush1.msra.mxu0 0.0
    %2002 = vmatprep.subr.mxu0 0.0
    %2003 = vmatpush1.msra.mxu0 0.0
    %2004 = vmatprep.subr.mxu0 0.0
    %2005 = vmatpush1.msra.mxu0 0.0
    %2006 = vmatprep.subr.mxu0 0.0
    %2007 = vmatpush1.msra.mxu0 0.0
    %2008 = vmatprep.subr.mxu0 0.0
    %2009 = vmatpush1.msra.mxu0 0.0
    %2010 = vmatprep.subr.mxu0 0.0
    %2011 = vmatpush1.msra.mxu0 0.0
    %2012 = vmatprep.subr.mxu0 0.0
    %2013 = vmatpush1.msra.mxu0 0.0
    %2014 = vmatprep.subr.mxu0 0.0
    %2015 = vmatpush1.msra.mxu0 0.0
    %2016 = vmatprep.subr.mxu0 0.0
    %2017 = vmatpush1.msra.mxu0 0.0
    %2018 = vmatprep.subr.mxu0 0.0
    %2019 = vmatpush1.msra.mxu0 0.0
    %2020 = vmatprep.subr.mxu0 0.0
    %2021 = vmatpush1.msra.mxu0 0.0
    %2022 = vmatprep.subr.mxu0 0.0
    %2023 = vmatpush1.msra.mxu0 0.0
    %2024 = vmatprep.subr.mxu0 0.0
    %2025 = vmatpush1.msra.mxu0 0.0
    %2026 = vmatprep.subr.mxu0 0.0
    %2027 = vmatpush1.msra.mxu0 0.0
    %2028 = vmatprep.subr.mxu0 0.0
    %2029 = vmatpush1.msra.mxu0 0.0
    %2030 = vmatprep.subr.mxu0 0.0
    %2031 = vmatpush1.msra.mxu0 0.0
    %2032 = vmatprep.subr.mxu0 0.0
    %2033 = vmatpush1.msra.mxu0 0.0
    %2034 = vmatprep.subr.mxu0 0.0
    %2035 = vmatpush1.msra.mxu0 0.0
    %2036 = vmatprep.subr.mxu0 0.0
    %2037 = vmatpush1.msra.mxu0 0.0
    %2038 = vmatprep.subr.mxu0 0.0
    %2039 = vmatpush1.msra.mxu0 0.0
    %2040 = vmatprep.subr.mxu0 0.0
    %2041 = vmatpush1.msra.mxu0 0.0
    %2042 = vmatprep.mubr.f32.mxu0 0.0
    %2043 = vmatmul.mubr.f32.gmra.mrb[0].mxu0 %v1976
    %v2044 = vpop.f32.mrb[0].mxu0
    %v2045 = vadd.f32 0.0, %v2044
    %v2046 = vpop.f32.mrb[0].mxu0
    %2047 = vdwg.mxu0
    %v2049 = vlaneseq
    %v2050 = vshrl.u32 %v2049, 7
    %v2051 = vsub.s32 0, %v2050
    %v2052 = vrot.slane %v1653, %v2051
    %v2054 = vmul.f32 %v2045, %v2052
    %v2055 = vmul.f32 %v1899, %v1974
    %v2057 = vsel %vm747, %v2055, 0
    %2059 = vmatprep.subr.mxu0 0.0
    %2060 = vmatpush1.msra.mxu0 %v294
    %2061 = vmatprep.subr.mxu0 0.0
    %2062 = vmatpush1.msra.mxu0 0.0
    %2063 = vmatprep.subr.mxu0 0.0
    %2064 = vmatpush1.msra.mxu0 0.0
    %2065 = vmatprep.subr.mxu0 0.0
    %2066 = vmatpush1.msra.mxu0 0.0
    %2067 = vmatprep.subr.mxu0 0.0
    %2068 = vmatpush1.msra.mxu0 0.0
    %2069 = vmatprep.subr.mxu0 0.0
    %2070 = vmatpush1.msra.mxu0 0.0
    %2071 = vmatprep.subr.mxu0 0.0
    %2072 = vmatpush1.msra.mxu0 0.0
    %2073 = vmatprep.subr.mxu0 0.0
    %2074 = vmatpush1.msra.mxu0 0.0
    %2075 = vmatprep.subr.mxu0 0.0
    %2076 = vmatpush1.msra.mxu0 0.0
    %2077 = vmatprep.subr.mxu0 0.0
    %2078 = vmatpush1.msra.mxu0 0.0
    %2079 = vmatprep.subr.mxu0 0.0
    %2080 = vmatpush1.msra.mxu0 0.0
    %2081 = vmatprep.subr.mxu0 0.0
    %2082 = vmatpush1.msra.mxu0 0.0
    %2083 = vmatprep.subr.mxu0 0.0
    %2084 = vmatpush1.msra.mxu0 0.0
    %2085 = vmatprep.subr.mxu0 0.0
    %2086 = vmatpush1.msra.mxu0 0.0
    %2087 = vmatprep.subr.mxu0 0.0
    %2088 = vmatpush1.msra.mxu0 0.0
    %2089 = vmatprep.subr.mxu0 0.0
    %2090 = vmatpush1.msra.mxu0 0.0
    %2091 = vmatprep.subr.mxu0 0.0
    %2092 = vmatpush1.msra.mxu0 0.0
    %2093 = vmatprep.subr.mxu0 0.0
    %2094 = vmatpush1.msra.mxu0 0.0
    %2095 = vmatprep.subr.mxu0 0.0
    %2096 = vmatpush1.msra.mxu0 0.0
    %2097 = vmatprep.subr.mxu0 0.0
    %2098 = vmatpush1.msra.mxu0 0.0
    %2099 = vmatprep.subr.mxu0 0.0
    %2100 = vmatpush1.msra.mxu0 0.0
    %2101 = vmatprep.subr.mxu0 0.0
    %2102 = vmatpush1.msra.mxu0 0.0
    %2103 = vmatprep.subr.mxu0 0.0
    %2104 = vmatpush1.msra.mxu0 0.0
    %2105 = vmatprep.subr.mxu0 0.0
    %2106 = vmatpush1.msra.mxu0 0.0
    %2107 = vmatprep.subr.mxu0 0.0
    %2108 = vmatpush1.msra.mxu0 0.0
    %2109 = vmatprep.subr.mxu0 0.0
    %2110 = vmatpush1.msra.mxu0 0.0
    %2111 = vmatprep.subr.mxu0 0.0
    %2112 = vmatpush1.msra.mxu0 0.0
    %2113 = vmatprep.subr.mxu0 0.0
    %2114 = vmatpush1.msra.mxu0 0.0
    %2115 = vmatprep.subr.mxu0 0.0
    %2116 = vmatpush1.msra.mxu0 0.0
    %2117 = vmatprep.subr.mxu0 0.0
    %2118 = vmatpush1.msra.mxu0 0.0
    %2119 = vmatprep.subr.mxu0 0.0
    %2120 = vmatpush1.msra.mxu0 0.0
    %2121 = vmatprep.subr.mxu0 0.0
    %2122 = vmatpush1.msra.mxu0 0.0
    %2123 = vmatprep.mubr.f32.mxu0 0.0
    %2124 = vmatmul.mubr.f32.gmra.mrb[0].mxu0 %v2057
    %v2125 = vpop.f32.mrb[0].mxu0
    %v2126 = vadd.f32 0.0, %v2125
    %v2127 = vpop.f32.mrb[0].mxu0
    %2128 = vdwg.mxu0
    %v2129 = vmul.f32 %v2126, %v2052
    %v2131 = vlaneseq
    %v2132 = vshrl.u32 %v2131, 7
    %v2133 = vsub.s32 0, %v2132
    %v2134 = vrot.slane %v1654, %v2133
    %v2136 = vsub.f32 %v2134, %v2129
    %v2139 = vunpack.c.l.s4 1966171168
    %v2140 = vunpack.c.0.s8 %v2139
    %v2141 = vlaneseq
    %v2142 = vshrl.u32 %v2141, 7
    %v2143 = vsub.s32 %v2140, %v2142
    %v2144 = vrot.slane %v2054, %v2143
    %v2145 = vcombine.high %v2144, %v2144
    %v2147 = vunpack.c.l.s4 1966171168
    %v2148 = vunpack.c.0.s8 %v2147
    %v2149 = vlaneseq
    %v2150 = vshrl.u32 %v2149, 7
    %v2151 = vsub.s32 %v2148, %v2150
    %v2152 = vrot.slane %v2144, %v2151
    %v2154 = vunpack.c.l.s4 1966171168
    %v2155 = vunpack.c.0.s8 %v2154
    %v2156 = vlaneseq
    %v2157 = vshrl.u32 %v2156, 7
    %v2158 = vsub.s32 %v2155, %v2157
    %v2159 = vrot.slane %v2145, %v2158
    %v2160 = vlaneseq
    %v2161 = vshrl.u32 %v2160, 7
    %v2162 = vsub.s32 0, %v2161
    %v2163 = vrot.slane %v2152, %v2162
    %v2164 = vlaneseq
    %v2165 = vshrl.u32 %v2164, 7
    %v2166 = vsub.s32 0, %v2165
    %v2167 = vrot.slane %v2159, %v2166
    %v2170 = vmul.f32 %v1649, %v2163
    %v2171 = vmul.f32 %v1650, %v2163
    %v2172 = vmul.f32 %v1651, %v2167
    %v2173 = vmul.f32 %v1652, %v2167
    %v2176 = vunpack.c.l.s4 1966171168
    %v2177 = vunpack.c.0.s8 %v2176
    %v2178 = vlaneseq
    %v2179 = vshrl.u32 %v2178, 7
    %v2180 = vsub.s32 %v2177, %v2179
    %v2181 = vrot.slane %v2136, %v2180
    %v2182 = vcombine.high %v2181, %v2181
    %v2184 = vunpack.c.l.s4 1966171168
    %v2185 = vunpack.c.0.s8 %v2184
    %v2186 = vlaneseq
    %v2187 = vshrl.u32 %v2186, 7
    %v2188 = vsub.s32 %v2185, %v2187
    %v2189 = vrot.slane %v2181, %v2188
    %v2191 = vunpack.c.l.s4 1966171168
    %v2192 = vunpack.c.0.s8 %v2191
    %v2193 = vlaneseq
    %v2194 = vshrl.u32 %v2193, 7
    %v2195 = vsub.s32 %v2192, %v2194
    %v2196 = vrot.slane %v2182, %v2195
    %v2197 = vlaneseq
    %v2198 = vshrl.u32 %v2197, 7
    %v2199 = vsub.s32 0, %v2198
    %v2200 = vrot.slane %v2189, %v2199
    %v2201 = vlaneseq
    %v2202 = vshrl.u32 %v2201, 7
    %v2203 = vsub.s32 0, %v2202
    %v2204 = vrot.slane %v2196, %v2203
    %v2207 = vadd.f32 %v2170, %v2200
    %v2208 = vadd.f32 %v2171, %v2200
    %v2209 = vadd.f32 %v2172, %v2204
    %v2210 = vadd.f32 %v2173, %v2204
    %v2211 = vand.u32 2147483647, %v2207
    %v2212 = vand.u32 2147483647, %v2208
    %v2213 = vand.u32 2147483647, %v2209
    %v2214 = vand.u32 2147483647, %v2210
    %v2215 = vsub.f32 0.0, %v2211
    %v2216 = vsub.f32 0.0, %v2212
    %v2217 = vsub.f32 0.0, %v2213
    %v2218 = vsub.f32 0.0, %v2214
    %v2219 = vmul.f32 %v2215, 1.442695
    %v2220 = vpow.pop %v2219
    %v2221 = vmul.f32 %v2216, 1.442695
    %v2222 = vpow.pop %v2221
    %v2223 = vmul.f32 %v2217, 1.442695
    %v2224 = vpow.pop %v2223
    %v2225 = vmul.f32 %v2218, 1.442695
    %v2226 = vpow.pop %v2225
    %v2227 = vmul.f32 %v2220, %v2220
    %v2228 = vmul.f32 %v2222, %v2222
    %v2229 = vmul.f32 %v2224, %v2224
    %v2230 = vmul.f32 %v2226, %v2226
    %vm2231 = vcmp.ge.f32.partialorder %v2207, 0.0
    %vm2232 = vcmp.ge.f32.partialorder %v2208, 0.0
    %vm2233 = vcmp.ge.f32.partialorder %v2209, 0.0
    %vm2234 = vcmp.ge.f32.partialorder %v2210, 0.0
    %v2235 = vmul.f32 %v2220, 2.0
    %v2236 = vmul.f32 %v2222, 2.0
    %v2237 = vmul.f32 %v2224, 2.0
    %v2238 = vmul.f32 %v2226, 2.0
    %v2239 = vadd.f32 %v2235, 1.0
    %v2240 = vadd.f32 %v2236, 1.0
    %v2241 = vadd.f32 %v2237, 1.0
    %v2242 = vadd.f32 %v2238, 1.0
    %v2243 = vadd.f32 %v2227, %v2235
    %v2244 = vadd.f32 %v2228, %v2236
    %v2245 = vadd.f32 %v2229, %v2237
    %v2246 = vadd.f32 %v2230, %v2238
    %v2247 = vsel %vm2231, %v2239, %v2243
    %v2248 = vsel %vm2232, %v2240, %v2244
    %v2249 = vsel %vm2233, %v2241, %v2245
    %v2250 = vsel %vm2234, %v2242, %v2246
    %v2251 = vmul.f32 %v2227, 2.0
    %v2252 = vmul.f32 %v2228, 2.0
    %v2253 = vmul.f32 %v2229, 2.0
    %v2254 = vmul.f32 %v2230, 2.0
    %v2255 = vadd.f32 %v2239, %v2251
    %v2256 = vadd.f32 %v2240, %v2252
    %v2257 = vadd.f32 %v2241, %v2253
    %v2258 = vadd.f32 %v2242, %v2254
    %v2259 = vadd.f32 %v2243, 2.0
    %v2260 = vadd.f32 %v2244, 2.0
    %v2261 = vadd.f32 %v2245, 2.0
    %v2262 = vadd.f32 %v2246, 2.0
    %v2263 = vsel %vm2231, %v2255, %v2259
    %v2264 = vsel %vm2232, %v2256, %v2260
    %v2265 = vsel %vm2233, %v2257, %v2261
    %v2266 = vsel %vm2234, %v2258, %v2262
    %v2267 = vmul.f32 %v2207, %v2247
    %v2268 = vmul.f32 %v2208, %v2248
    %v2269 = vmul.f32 %v2209, %v2249
    %v2270 = vmul.f32 %v2210, %v2250
    %v2271 = vrcp.pop %v2263
    %v2272 = vmul.f32 %v2267, %v2271
    %v2273 = vrcp.pop %v2264
    %v2274 = vmul.f32 %v2268, %v2273
    %v2275 = vrcp.pop %v2265
    %v2276 = vmul.f32 %v2269, %v2275
    %v2277 = vrcp.pop %v2266
    %v2278 = vmul.f32 %v2270, %v2277
    %v2279 = vld [vmem:[#allocation28] sm:$0xff]
    %v2280 = vld [vmem:[#allocation28 + $0x8] sm:$0xf]
    %v2281 = vld [vmem:[#allocation29] sm:$0x1]
    %v2283 = vlaneseq
    %v2284 = vshrl.u32 %v2283, 7
    %v2285 = vsub.s32 0, %v2284
    %v2286 = vrot.slane %v2281, %v2285
    %v2289 = vsel %vm332, %v2280, 0
    %2291 = vmatprep.subr.mxu0 0.0
    %2292 = vmatpush1.msra.mxu0 %v2279
    %2293 = vmatprep.subr.mxu0 0.0
    %2294 = vmatpush1.msra.mxu0 %v2289
    %2295 = vmatprep.subr.mxu0 0.0
    %2296 = vmatpush1.msra.mxu0 0.0
    %2297 = vmatprep.subr.mxu0 0.0
    %2298 = vmatpush1.msra.mxu0 0.0
    %2299 = vmatprep.subr.mxu0 0.0
    %2300 = vmatpush1.msra.mxu0 0.0
    %2301 = vmatprep.subr.mxu0 0.0
    %2302 = vmatpush1.msra.mxu0 0.0
    %2303 = vmatprep.subr.mxu0 0.0
    %2304 = vmatpush1.msra.mxu0 0.0
    %2305 = vmatprep.subr.mxu0 0.0
    %2306 = vmatpush1.msra.mxu0 0.0
    %2307 = vmatprep.subr.mxu0 0.0
    %2308 = vmatpush1.msra.mxu0 0.0
    %2309 = vmatprep.subr.mxu0 0.0
    %2310 = vmatpush1.msra.mxu0 0.0
    %2311 = vmatprep.subr.mxu0 0.0
    %2312 = vmatpush1.msra.mxu0 0.0
    %2313 = vmatprep.subr.mxu0 0.0
    %2314 = vmatpush1.msra.mxu0 0.0
    %2315 = vmatprep.subr.mxu0 0.0
    %2316 = vmatpush1.msra.mxu0 0.0
    %2317 = vmatprep.subr.mxu0 0.0
    %2318 = vmatpush1.msra.mxu0 0.0
    %2319 = vmatprep.subr.mxu0 0.0
    %2320 = vmatpush1.msra.mxu0 0.0
    %2321 = vmatprep.subr.mxu0 0.0
    %2322 = vmatpush1.msra.mxu0 0.0
    %2323 = vmatprep.subr.mxu0 0.0
    %2324 = vmatpush1.msra.mxu0 0.0
    %2325 = vmatprep.subr.mxu0 0.0
    %2326 = vmatpush1.msra.mxu0 0.0
    %2327 = vmatprep.subr.mxu0 0.0
    %2328 = vmatpush1.msra.mxu0 0.0
    %2329 = vmatprep.subr.mxu0 0.0
    %2330 = vmatpush1.msra.mxu0 0.0
    %2331 = vmatprep.subr.mxu0 0.0
    %2332 = vmatpush1.msra.mxu0 0.0
    %2333 = vmatprep.subr.mxu0 0.0
    %2334 = vmatpush1.msra.mxu0 0.0
    %2335 = vmatprep.subr.mxu0 0.0
    %2336 = vmatpush1.msra.mxu0 0.0
    %2337 = vmatprep.subr.mxu0 0.0
    %2338 = vmatpush1.msra.mxu0 0.0
    %2339 = vmatprep.subr.mxu0 0.0
    %2340 = vmatpush1.msra.mxu0 0.0
    %2341 = vmatprep.subr.mxu0 0.0
    %2342 = vmatpush1.msra.mxu0 0.0
    %2343 = vmatprep.subr.mxu0 0.0
    %2344 = vmatpush1.msra.mxu0 0.0
    %2345 = vmatprep.subr.mxu0 0.0
    %2346 = vmatpush1.msra.mxu0 0.0
    %2347 = vmatprep.subr.mxu0 0.0
    %2348 = vmatpush1.msra.mxu0 0.0
    %2349 = vmatprep.subr.mxu0 0.0
    %2350 = vmatpush1.msra.mxu0 0.0
    %2351 = vmatprep.subr.mxu0 0.0
    %2352 = vmatpush1.msra.mxu0 0.0
    %2353 = vmatprep.subr.mxu0 0.0
    %2354 = vmatpush1.msra.mxu0 0.0
    %2355 = vmatprep.mubr.f32.mxu0 0.0
    %2356 = vmatmul.mubr.f32.gmra.mrb[0].mxu0 %v321
    %v2357 = vpop.f32.mrb[0].mxu0
    %v2358 = vadd.f32 %v2286, %v2357
    %v2359 = vpop.f32.mrb[0].mxu0
    %2360 = vmatprep.mubr.f32.mxu0 0.0
    %2361 = vmatmul.mubr.f32.gmra.mrb[0].mxu0 %v324
    %v2362 = vpop.f32.mrb[0].mxu0
    %v2363 = vadd.f32 %v2286, %v2362
    %v2364 = vpop.f32.mrb[0].mxu0
    %2365 = vmatprep.mubr.f32.mxu0 0.0
    %2366 = vmatmul.mubr.f32.gmra.mrb[0].mxu0 %v327
    %v2367 = vpop.f32.mrb[0].mxu0
    %v2368 = vadd.f32 %v2286, %v2367
    %v2369 = vpop.f32.mrb[0].mxu0
    %2370 = vmatprep.mubr.f32.mxu0 0.0
    %2371 = vmatmul.mubr.f32.gmra.mrb[0].mxu0 %v330
    %v2372 = vpop.f32.mrb[0].mxu0
    %v2373 = vadd.f32 %v2286, %v2372
    %v2374 = vpop.f32.mrb[0].mxu0
    %2375 = vdwg.mxu0
    %v2376 = vadd.f32 %v2272, %v2358
    %v2377 = vadd.f32 %v2274, %v2363
    %v2378 = vadd.f32 %v2276, %v2368
    %v2379 = vadd.f32 %v2278, %v2373
    %2380 = vst [vmem:[#allocation31] sm:$0xff] %v2376
    %2381 = vst [vmem:[#allocation31 + $0x8] sm:$0xff] %v2377
    %2382 = vst [vmem:[#allocation31 + $0x10] sm:$0xff] %v2378
    %2383 = vst [vmem:[#allocation31 + $0x18] sm:$0xff] %v2379
    // Predicated region
    $region146: #{tpu_custom_call.1} parent=1 // pred_check
      _
    $region147: #{tpu_custom_call.1} parent=1 // pred_check_branch
      %2385 = sbr.rel (0) target = $region149
    $region148: #{tpu_custom_call.1} parent=1 // pred_region
      %s2387 = ssub.s32 512, 512
      %2388 = vsyncadd [#allocation4], %s2387
      %s2389 = sshll.u32 [#allocation31], 4
      %s2390 = int_to_ptr.vmem [resolvable:$true] %s2389
      %2395 = dma.vmem_to_hbm [thread:$0]  %s2390, 512, %s18, [#allocation4], 128, 128, 8
    $region149: #{tpu_custom_call.1} parent=1 // pred_fallthru
      _
    // Predicated region
    $region150: #{tpu_custom_call.1} parent=1 // pred_check
      _
    $region151: #{tpu_custom_call.1} parent=1 // pred_check_branch
      %2397 = sbr.rel (0) target = $region153
    $region152: #{tpu_custom_call.1} parent=1 // pred_region
      %2398 = dma.done [#allocation4], 512
    $region153: #{tpu_custom_call.1} parent=1 // pred_fallthru
      _
    %2399 = vsyncpa [#allocation3], 1
    %2400 = vsyncpa [#allocation6], 1
    %2401 = vsyncpa [#allocation9], 1
    %2402 = vsyncpa [#allocation12], 1
    %2403 = vsyncpa [#allocation15], 1
    %2404 = vsyncpa [#allocation18], 1
    %2405 = vsyncpa [#allocation21], 1
    %2406 = vsyncpa [#allocation24], 1
    %2407 = vsyncpa [#allocation27], 1
    %2408 = vsyncpa [#allocation30], 1
    %2409 = vsyncpa [#allocation4], 1

</llo_original>
